<compile_context>
chip_gen: v7x
topology: tpu7x:2x2x1
jax: 0.10.0
libtpu: 0.0.40
codegen_flags: <defaults>
</compile_context>

<pallas_src>
import collections
import functools

import numpy as np
import jax
import jax.numpy as jnp
from jax.experimental import pallas as pl
from jax.experimental.pallas import tpu as pltpu

KSIZE = 5
STRIDE = 2
BN_EPS = 1e-5
LANE = 128


def conv_out_size(size):
    return (size - (KSIZE - 1) - 1) // STRIDE + 1


def _round_up(x, m):
    return (x + m - 1) // m * m


Dims = collections.namedtuple(
    "Dims",
    ["n", "h", "w", "c_in", "outputs",
     "oh1", "ow1", "oh2", "ow2", "oh3", "ow3",
     "c1", "c2", "c3", "k1p", "l1p", "l2p", "l3p"])


# ------------------------------ fused kernel --------------------------------


def _make_kernel(d):
    h1e = (d.oh1 + 1) // 2        # number of even-h rows per image (a1 layout)
    m2 = d.n * d.oh2
    m3 = d.n * d.oh3
    inv1 = 1.0 / float(d.n * d.oh1 * d.ow1)
    inv2 = 1.0 / float(d.n * d.oh2 * d.ow2)
    inv3 = 1.0 / float(d.n * d.oh3 * d.ow3)

    def bn_relu(y, g_ref, b_ref, gs_ref, ge_ref, inv_count):
        # nn.BatchNorm2d training-mode forward: biased batch stats, eps=1e-5,
        # affine, then ReLU.  Two-pass variance (subtract mean first) for
        # numerical robustness.  Lanes are (w, c) interleaved, so per-channel
        # pooling / expansion is done with the tiny constant matmuls G / E.
        row_sum = jnp.sum(y, axis=0, keepdims=True)                      # (1,L)
        mean_c = jnp.dot(row_sum, gs_ref[...],
                         preferred_element_type=jnp.float32) * inv_count
        mean_t = jnp.dot(mean_c, ge_ref[...],
                         preferred_element_type=jnp.float32)             # (1,L)
        cent = y - mean_t
        sq_sum = jnp.sum(cent * cent, axis=0, keepdims=True)
        var_c = jnp.dot(sq_sum, gs_ref[...],
                        preferred_element_type=jnp.float32) * inv_count
        var_t = jnp.dot(var_c, ge_ref[...],
                        preferred_element_type=jnp.float32)
        out = cent * jax.lax.rsqrt(var_t + BN_EPS) * g_ref[...] + b_ref[...]
        return jnp.maximum(out, 0.0)     # padded lanes stay exactly 0

    def kernel(p1_ref, w1_ref, g1_ref, b1_ref, gs1_ref, ge1_ref,
               w2_ref, g2_ref, b2_ref, gs2_ref, ge2_ref,
               w3_ref, g3_ref, b3_ref, gs3_ref, ge3_ref,
               wfc_ref, bfc_ref, o_ref, gath2_ref, gath3_ref):
        # ---- conv1 + BN1 + ReLU: one dense row-band matmul ----------------
        y1 = jnp.dot(p1_ref[...], w1_ref[...],
                     preferred_element_type=jnp.float32)       # (N*OH1, L1p)
        a1 = bn_relu(y1, g1_ref, b1_ref, gs1_ref, ge1_ref, inv1)

        # ---- conv2 + BN2 + ReLU: 5 banded matmuls -------------------------
        # a1 rows per image are even-h-first, so the rows needed for conv
        # kernel-row kh (h1 = 2*i2 + kh) are one contiguous run per image.
        y2 = jnp.zeros((m2, d.l2p), jnp.float32)
        for kh in range(KSIZE):                       # small static loop (5)
            off = (kh % 2) * h1e + kh // 2
            for n in range(d.n):
                src = n * d.oh1 + off
                gath2_ref[n * d.oh2:(n + 1) * d.oh2, :] = a1[src:src + d.oh2, :]
            y2 = y2 + jnp.dot(gath2_ref[...].astype(jnp.bfloat16), w2_ref[kh],
                              preferred_element_type=jnp.float32)
        a2 = bn_relu(y2, g2_ref, b2_ref, gs2_ref, ge2_ref, inv2)

        # ---- conv3 + BN3 + ReLU: 5 banded matmuls, single-row copies ------
        # Output rows are laid out (i3, n) so the fc slices are contiguous.
        y3 = jnp.zeros((m3, d.l3p), jnp.float32)
        for kh in range(KSIZE):
            for i3 in range(d.oh3):
                for n in range(d.n):
                    src = n * d.oh2 + STRIDE * i3 + kh
                    dst = i3 * d.n + n
                    gath3_ref[dst:dst + 1, :] = a2[src:src + 1, :]
            y3 = y3 + jnp.dot(gath3_ref[...].astype(jnp.bfloat16), w3_ref[kh],
                              preferred_element_type=jnp.float32)
        a3 = bn_relu(y3, g3_ref, b3_ref, gs3_ref, ge3_ref, inv3)

        # ---- fc: NCHW flatten already folded into wfc at prepare() time ---
        a3_bf = a3.astype(jnp.bfloat16)
        out = jnp.zeros((d.n, LANE), jnp.float32)
        for i3 in range(d.oh3):
            out = out + jnp.dot(a3_bf[i3 * d.n:(i3 + 1) * d.n, :], wfc_ref[i3],
                                preferred_element_type=jnp.float32)
        o_ref[...] = out + bfc_ref[...]

    return kernel


# ------------------------- one-time parameter prep --------------------------


def _banded_conv_weight(wt, ci, co, ow_out, l_in, l_out):
    """(5, l_in, l_out): per conv kernel-row kh, maps a full input row
    (lanes = (w_in, ci)) to a full output row (lanes = (w_out, co)); the kw
    taps and the stride-2 W subsampling are folded into the band."""
    out = np.zeros((KSIZE, l_in, l_out), np.float32)
    for kh in range(KSIZE):
        for kw in range(KSIZE):
            blk = wt[:, :, kh, kw].T                    # (ci, co)
            for wo in range(ow_out):
                wi = STRIDE * wo + kw
                out[kh, wi * ci:(wi + 1) * ci, wo * co:(wo + 1) * co] = blk
    return out


def _bn_lane_consts(gamma, beta, c, ow, l):
    """BN constants for the (w, c)-interleaved lane layout: G pools lanes to
    channels, E expands channels back to lanes, gamma/beta pre-tiled.  Padded
    lanes are zero everywhere so they stay exactly 0 through BN+ReLU."""
    gsum = np.zeros((l, LANE), np.float32)
    gexp = np.zeros((LANE, l), np.float32)
    gt = np.zeros((1, l), np.float32)
    bt = np.zeros((1, l), np.float32)
    eye = np.eye(c, dtype=np.float32)
    g = np.asarray(gamma, np.float32)
    b = np.asarray(beta, np.float32)
    for wo in range(ow):
        gsum[wo * c:(wo + 1) * c, :c] = eye
        gexp[:c, wo * c:(wo + 1) * c] = eye
        gt[0, wo * c:(wo + 1) * c] = g
        bt[0, wo * c:(wo + 1) * c] = b
    return gsum, gexp, gt, bt


def prepare(params, n, h, w, c_in, outputs):
    """One-time prep (hoisted out of the per-call path): banded, lane-dense
    bf16 MXU weights; BN lane constants; NCHW flatten folded into the fc."""
    oh1, ow1 = conv_out_size(h), conv_out_size(w)
    oh2, ow2 = conv_out_size(oh1), conv_out_size(ow1)
    oh3, ow3 = conv_out_size(oh2), conv_out_size(ow2)
    c1 = params["conv1_w"].shape[0]
    c2 = params["conv2_w"].shape[0]
    c3 = params["conv3_w"].shape[0]
    k1 = KSIZE * w * c_in
    k1p = _round_up(k1, LANE)
    l1p = _round_up(ow1 * c1, LANE)
    l2p = _round_up(ow2 * c2, LANE)
    l3p = _round_up(ow3 * c3, LANE)
    assert outputs <= LANE
    dims = Dims(n, h, w, c_in, outputs, oh1, ow1, oh2, ow2, oh3, ow3,
                c1, c2, c3, k1p, l1p, l2p, l3p)

    w1 = np.asarray(params["conv1_w"], np.float32)   # (c1, c_in, 5, 5)
    w2 = np.asarray(params["conv2_w"], np.float32)
    w3 = np.asarray(params["conv3_w"], np.float32)
    fcw = np.asarray(params["fc1_w"], np.float32).reshape(outputs, c3, oh3, ow3)
    fcb = np.asarray(params["fc1_b"], np.float32)

    # conv1 banded weight maps a full input row band (lanes = (kh, w, c_in))
    # to a full output row (lanes = (w1, c1)).
    w1b = np.zeros((k1p, l1p), np.float32)
    wc = w * c_in
    for kh in range(KSIZE):
        for kw in range(KSIZE):
            blk = w1[:, :, kh, kw].T                 # (c_in, c1)
            for wo in range(ow1):
                wi = STRIDE * wo + kw
                w1b[kh * wc + wi * c_in: kh * wc + (wi + 1) * c_in,
                    wo * c1:(wo + 1) * c1] = blk

    w2b = _banded_conv_weight(w2, c1, c2, ow2, l1p, l2p)
    w3b = _banded_conv_weight(w3, c2, c3, ow3, l2p, l3p)

    # fc: fold PyTorch's NCHW flatten (c3, i3, j3) into the weight; lanes of a
    # conv3 output row are (j3, c3).
    wfcb = np.zeros((oh3, l3p, LANE), np.float32)
    for i3 in range(oh3):
        for j3 in range(ow3):
            wfcb[i3, j3 * c3:(j3 + 1) * c3, :outputs] = fcw[:, :, i3, j3].T
    bfcb = np.zeros((1, LANE), np.float32)
    bfcb[0, :outputs] = fcb

    gs1, ge1, g1, b1 = _bn_lane_consts(params["bn1_g"], params["bn1_b"], c1, ow1, l1p)
    gs2, ge2, g2, b2 = _bn_lane_consts(params["bn2_g"], params["bn2_b"], c2, ow2, l2p)
    gs3, ge3, g3, b3 = _bn_lane_consts(params["bn3_g"], params["bn3_b"], c3, ow3, l3p)

    # NOTE: conv biases are intentionally not consumed -- training-mode BN
    # mean subtraction cancels a per-channel additive bias exactly.
    prep = {
        "w1": jnp.asarray(w1b, jnp.bfloat16),
        "w2": jnp.asarray(w2b, jnp.bfloat16),
        "w3": jnp.asarray(w3b, jnp.bfloat16),
        "wfc": jnp.asarray(wfcb, jnp.bfloat16),
        "bfc": jnp.asarray(bfcb),
        "g1": jnp.asarray(g1), "b1": jnp.asarray(b1),
        "gs1": jnp.asarray(gs1), "ge1": jnp.asarray(ge1),
        "g2": jnp.asarray(g2), "b2": jnp.asarray(b2),
        "gs2": jnp.asarray(gs2), "ge2": jnp.asarray(ge2),
        "g3": jnp.asarray(g3), "b3": jnp.asarray(b3),
        "gs3": jnp.asarray(gs3), "ge3": jnp.asarray(ge3),
    }
    return dims, prep


# ------------------------------- forward pass -------------------------------


def _row_band_patches(x_nhwc, d):
    # Layer-1 "row band" patches: one row per conv1 output row (n, h1), lanes
    # = (kh, w, c_in).  h1 rows are ordered even-first so the in-kernel conv2
    # gathers are contiguous.  The raw input is tiny, so this one-time
    # expansion stays in XLA; everything downstream is fused on-chip.
    n = x_nhwc.shape[0]
    bands = jnp.stack(
        [x_nhwc[:, kh:kh + STRIDE * d.oh1:STRIDE, :, :] for kh in range(KSIZE)],
        axis=2)                                          # (n, oh1, 5, w, c_in)
    k1 = KSIZE * d.w * d.c_in
    p1 = bands.reshape(n, d.oh1, k1)
    perm = np.concatenate([np.arange(0, d.oh1, 2), np.arange(1, d.oh1, 2)])
    p1 = p1[:, perm, :].reshape(n * d.oh1, k1)
    p1 = jnp.pad(p1, ((0, 0), (0, d.k1p - k1)))
    return p1.astype(jnp.bfloat16)


@functools.partial(jax.jit, static_argnums=(0,))
def nature_cnn_forward(dims, prep, x_nchw):
    x = jnp.transpose(x_nchw.astype(jnp.float32), (0, 2, 3, 1))   # NCHW->NHWC
    p1 = _row_band_patches(x, dims)

    operands = [
        p1, prep["w1"], prep["g1"], prep["b1"], prep["gs1"], prep["ge1"],
        prep["w2"], prep["g2"], prep["b2"], prep["gs2"], prep["ge2"],
        prep["w3"], prep["g3"], prep["b3"], prep["gs3"], prep["ge3"],
        prep["wfc"], prep["bfc"],
    ]
    vmem = pl.BlockSpec(memory_space=pltpu.MemorySpace.VMEM)
    out_padded = pl.pallas_call(
        _make_kernel(dims),
        out_shape=jax.ShapeDtypeStruct((dims.n, LANE), jnp.float32),
        in_specs=[vmem] * len(operands),
        out_specs=vmem,
        scratch_shapes=[
            pltpu.VMEM((dims.n * dims.oh2, dims.l1p), jnp.float32),
            pltpu.VMEM((dims.n * dims.oh3, dims.l2p), jnp.float32),
        ],
    )(*operands)
    return out_padded[:, :dims.outputs]


# --------------------------------- params -----------------------------------


def init_params(key, h, w, outputs):
    convw = conv_out_size(conv_out_size(conv_out_size(w)))
    convh = conv_out_size(conv_out_size(conv_out_size(h)))
    linear_in = convw * convh * 32

    ks = jax.random.split(key, 8)
    return {
        "conv1_w": jax.random.normal(ks[0], (16, 3, KSIZE, KSIZE), jnp.float32) * 0.1,
        "conv1_b": jax.random.normal(ks[1], (16,), jnp.float32) * 0.01,  # unused (BN cancels it)
        "bn1_g": jnp.ones((16,), jnp.float32),
        "bn1_b": jnp.zeros((16,), jnp.float32),
        "conv2_w": jax.random.normal(ks[2], (32, 16, KSIZE, KSIZE), jnp.float32) * 0.1,
        "conv2_b": jax.random.normal(ks[3], (32,), jnp.float32) * 0.01,  # unused
        "bn2_g": jnp.ones((32,), jnp.float32),
        "bn2_b": jnp.zeros((32,), jnp.float32),
        "conv3_w": jax.random.normal(ks[4], (32, 32, KSIZE, KSIZE), jnp.float32) * 0.1,
        "conv3_b": jax.random.normal(ks[5], (32,), jnp.float32) * 0.01,  # unused
        "bn3_g": jnp.ones((32,), jnp.float32),
        "bn3_b": jnp.zeros((32,), jnp.float32),
        "fc1_w": jax.random.normal(ks[6], (outputs, linear_in), jnp.float32) * 0.1,
        "fc1_b": jax.random.normal(ks[7], (outputs,), jnp.float32) * 0.01,
    }


if __name__ == "__main__":
    N, C, H, W = 2, 3, 36, 36   # spatial 36 -> 16 -> 6 -> 1, linear_in = 32
    OUTPUTS = 8

    key = jax.random.PRNGKey(0)
    k_params, k_x = jax.random.split(key)
    params = init_params(k_params, H, W, OUTPUTS)
    x = jax.random.normal(k_x, (N, C, H, W), jnp.float32)

    dims, prep = prepare(params, N, H, W, C, OUTPUTS)
    out = nature_cnn_forward(dims, prep, x)
    out = jax.block_until_ready(out)

    assert out.shape == (N, OUTPUTS)
    assert bool(jnp.all(jnp.isfinite(out)))
    print("KERNEL_OK")
</pallas_src>

<mosaic_0001>
module attributes {stable_mosaic.version = 11 : i64} {
  func.func @kernel(%arg0: memref<32x640xbf16, #tpu.memory_space<vmem>>, %arg1: memref<640x256xbf16, #tpu.memory_space<vmem>>, %arg2: memref<1x256xf32, #tpu.memory_space<vmem>>, %arg3: memref<1x256xf32, #tpu.memory_space<vmem>>, %arg4: memref<256x128xf32, #tpu.memory_space<vmem>>, %arg5: memref<128x256xf32, #tpu.memory_space<vmem>>, %arg6: memref<5x256x256xbf16, #tpu.memory_space<vmem>>, %arg7: memref<1x256xf32, #tpu.memory_space<vmem>>, %arg8: memref<1x256xf32, #tpu.memory_space<vmem>>, %arg9: memref<256x128xf32, #tpu.memory_space<vmem>>, %arg10: memref<128x256xf32, #tpu.memory_space<vmem>>, %arg11: memref<5x256x128xbf16, #tpu.memory_space<vmem>>, %arg12: memref<1x128xf32, #tpu.memory_space<vmem>>, %arg13: memref<1x128xf32, #tpu.memory_space<vmem>>, %arg14: memref<128x128xf32, #tpu.memory_space<vmem>>, %arg15: memref<128x128xf32, #tpu.memory_space<vmem>>, %arg16: memref<1x128x128xbf16, #tpu.memory_space<vmem>>, %arg17: memref<1x128xf32, #tpu.memory_space<vmem>>, %arg18: memref<2x128xf32, #tpu.memory_space<vmem>>, %arg19: memref<12x256xf32, #tpu.memory_space<vmem>>, %arg20: memref<2x256xf32, #tpu.memory_space<vmem>>) attributes {dimension_semantics = [], scalar_prefetch = 0 : i64, scratch_operands = 2 : i64, tpu.core_type = #tpu.core_type<tc>} {
    %c0 = arith.constant 0 : index
    %c0_0 = arith.constant 0 : index
    %0 = vector.load %arg0[%c0, %c0_0] : memref<32x640xbf16, #tpu.memory_space<vmem>>, vector<32x640xbf16>
    %c0_1 = arith.constant 0 : index
    %c0_2 = arith.constant 0 : index
    %1 = vector.load %arg1[%c0_1, %c0_2] : memref<640x256xbf16, #tpu.memory_space<vmem>>, vector<640x256xbf16>
    %cst = arith.constant dense<0.000000e+00> : vector<32x256xf32>
    %2 = tpu.matmul %0, %1, %cst {dimension_numbers = #tpu.dot_dimension_numbers<[1], [0], [0], [1], [0, 0, 1, 1], [], []>} : vector<32x640xbf16>, vector<640x256xbf16>, vector<32x256xf32> -> vector<32x256xf32>
    %cst_3 = arith.constant dense<0.000000e+00> : vector<256xf32>
    %3 = vector.multi_reduction <add>, %2, %cst_3 [0] : vector<32x256xf32> to vector<256xf32>
    %4 = vector.shape_cast %3 : vector<256xf32> to vector<1x256xf32>
    %c0_4 = arith.constant 0 : index
    %c0_5 = arith.constant 0 : index
    %5 = vector.load %arg4[%c0_4, %c0_5] : memref<256x128xf32, #tpu.memory_space<vmem>>, vector<256x128xf32>
    %cst_6 = arith.constant dense<0.000000e+00> : vector<1x128xf32>
    %6 = tpu.matmul %4, %5, %cst_6 {dimension_numbers = #tpu.dot_dimension_numbers<[1], [0], [0], [1], [0, 0, 1, 1], [], []>} : vector<1x256xf32>, vector<256x128xf32>, vector<1x128xf32> -> vector<1x128xf32>
    %cst_7 = arith.constant 0.001953125 : f32
    %7 = vector.broadcast %cst_7 : f32 to vector<1x128xf32>
    %8 = arith.mulf %6, %7 : vector<1x128xf32>
    %c0_8 = arith.constant 0 : index
    %c0_9 = arith.constant 0 : index
    %9 = vector.load %arg5[%c0_8, %c0_9] : memref<128x256xf32, #tpu.memory_space<vmem>>, vector<128x256xf32>
    %cst_10 = arith.constant dense<0.000000e+00> : vector<1x256xf32>
    %10 = tpu.matmul %8, %9, %cst_10 {dimension_numbers = #tpu.dot_dimension_numbers<[1], [0], [0], [1], [0, 0, 1, 1], [], []>} : vector<1x128xf32>, vector<128x256xf32>, vector<1x256xf32> -> vector<1x256xf32>
    %11 = vector.broadcast %10 : vector<1x256xf32> to vector<32x256xf32>
    %12 = arith.subf %2, %11 : vector<32x256xf32>
    %13 = arith.mulf %12, %12 : vector<32x256xf32>
    %cst_11 = arith.constant dense<0.000000e+00> : vector<256xf32>
    %14 = vector.multi_reduction <add>, %13, %cst_11 [0] : vector<32x256xf32> to vector<256xf32>
    %15 = vector.shape_cast %14 : vector<256xf32> to vector<1x256xf32>
    %c0_12 = arith.constant 0 : index
    %c0_13 = arith.constant 0 : index
    %16 = vector.load %arg4[%c0_12, %c0_13] : memref<256x128xf32, #tpu.memory_space<vmem>>, vector<256x128xf32>
    %cst_14 = arith.constant dense<0.000000e+00> : vector<1x128xf32>
    %17 = tpu.matmul %15, %16, %cst_14 {dimension_numbers = #tpu.dot_dimension_numbers<[1], [0], [0], [1], [0, 0, 1, 1], [], []>} : vector<1x256xf32>, vector<256x128xf32>, vector<1x128xf32> -> vector<1x128xf32>
    %cst_15 = arith.constant 0.001953125 : f32
    %18 = vector.broadcast %cst_15 : f32 to vector<1x128xf32>
    %19 = arith.mulf %17, %18 : vector<1x128xf32>
    %c0_16 = arith.constant 0 : index
    %c0_17 = arith.constant 0 : index
    %20 = vector.load %arg5[%c0_16, %c0_17] : memref<128x256xf32, #tpu.memory_space<vmem>>, vector<128x256xf32>
    %cst_18 = arith.constant dense<0.000000e+00> : vector<1x256xf32>
    %21 = tpu.matmul %19, %20, %cst_18 {dimension_numbers = #tpu.dot_dimension_numbers<[1], [0], [0], [1], [0, 0, 1, 1], [], []>} : vector<1x128xf32>, vector<128x256xf32>, vector<1x256xf32> -> vector<1x256xf32>
    %cst_19 = arith.constant 9.99999974E-6 : f32
    %22 = vector.broadcast %cst_19 : f32 to vector<1x256xf32>
    %23 = arith.addf %21, %22 : vector<1x256xf32>
    %24 = math.rsqrt %23 : vector<1x256xf32>
    %25 = vector.broadcast %24 : vector<1x256xf32> to vector<32x256xf32>
    %26 = arith.mulf %12, %25 : vector<32x256xf32>
    %c0_20 = arith.constant 0 : index
    %c0_21 = arith.constant 0 : index
    %27 = vector.load %arg2[%c0_20, %c0_21] : memref<1x256xf32, #tpu.memory_space<vmem>>, vector<1x256xf32>
    %28 = vector.broadcast %27 : vector<1x256xf32> to vector<32x256xf32>
    %29 = arith.mulf %26, %28 : vector<32x256xf32>
    %c0_22 = arith.constant 0 : index
    %c0_23 = arith.constant 0 : index
    %30 = vector.load %arg3[%c0_22, %c0_23] : memref<1x256xf32, #tpu.memory_space<vmem>>, vector<1x256xf32>
    %31 = vector.broadcast %30 : vector<1x256xf32> to vector<32x256xf32>
    %32 = arith.addf %29, %31 : vector<32x256xf32>
    %cst_24 = arith.constant 0.000000e+00 : f32
    %33 = vector.broadcast %cst_24 : f32 to vector<32x256xf32>
    %34 = arith.maximumf %32, %33 : vector<32x256xf32>
    %cst_25 = arith.constant 0.000000e+00 : f32
    %35 = vector.broadcast %cst_25 : f32 to vector<12x256xf32>
    %36 = vector.extract_strided_slice %34 {offsets = [0, 0], sizes = [6, 256], strides = [1, 1]} : vector<32x256xf32> to vector<6x256xf32>
    %c0_26 = arith.constant 0 : index
    %c0_27 = arith.constant 0 : index
    %37 = vector.load %arg19[%c0_26, %c0_27] : memref<12x256xf32, #tpu.memory_space<vmem>>, vector<6x256xf32>
    tpu.vector_store %arg19[%c0_26, %c0_27], %36 {strides = array<i32>} : memref<12x256xf32, #tpu.memory_space<vmem>>, vector<6x256xf32>,
    %38 = vector.extract_strided_slice %34 {offsets = [16, 0], sizes = [6, 256], strides = [1, 1]} : vector<32x256xf32> to vector<6x256xf32>
    %c6 = arith.constant 6 : index
    %c0_28 = arith.constant 0 : index
    %39 = vector.load %arg19[%c6, %c0_28] : memref<12x256xf32, #tpu.memory_space<vmem>>, vector<6x256xf32>
    tpu.vector_store %arg19[%c6, %c0_28], %38 {strides = array<i32>} : memref<12x256xf32, #tpu.memory_space<vmem>>, vector<6x256xf32>,
    %c0_29 = arith.constant 0 : index
    %c0_30 = arith.constant 0 : index
    %40 = vector.load %arg19[%c0_29, %c0_30] : memref<12x256xf32, #tpu.memory_space<vmem>>, vector<12x256xf32>
    %41 = arith.truncf %40 : vector<12x256xf32> to vector<12x256xbf16>
    %c0_31 = arith.constant 0 : index
    %c0_32 = arith.constant 0 : index
    %c0_33 = arith.constant 0 : index
    %42 = vector.load %arg6[%c0_31, %c0_32, %c0_33] : memref<5x256x256xbf16, #tpu.memory_space<vmem>>, vector<1x256x256xbf16>
    %43 = vector.shape_cast %42 : vector<1x256x256xbf16> to vector<256x256xbf16>
    %cst_34 = arith.constant dense<0.000000e+00> : vector<12x256xf32>
    %44 = tpu.matmul %41, %43, %cst_34 {dimension_numbers = #tpu.dot_dimension_numbers<[1], [0], [0], [1], [0, 0, 1, 1], [], []>} : vector<12x256xbf16>, vector<256x256xbf16>, vector<12x256xf32> -> vector<12x256xf32>
    %45 = arith.addf %35, %44 : vector<12x256xf32>
    %46 = vector.extract_strided_slice %34 {offsets = [8, 0], sizes = [6, 256], strides = [1, 1]} : vector<32x256xf32> to vector<6x256xf32>
    %c0_35 = arith.constant 0 : index
    %c0_36 = arith.constant 0 : index
    %47 = vector.load %arg19[%c0_35, %c0_36] : memref<12x256xf32, #tpu.memory_space<vmem>>, vector<6x256xf32>
    tpu.vector_store %arg19[%c0_35, %c0_36], %46 {strides = array<i32>} : memref<12x256xf32, #tpu.memory_space<vmem>>, vector<6x256xf32>,
    %48 = vector.extract_strided_slice %34 {offsets = [24, 0], sizes = [6, 256], strides = [1, 1]} : vector<32x256xf32> to vector<6x256xf32>
    %c6_37 = arith.constant 6 : index
    %c0_38 = arith.constant 0 : index
    %49 = vector.load %arg19[%c6_37, %c0_38] : memref<12x256xf32, #tpu.memory_space<vmem>>, vector<6x256xf32>
    tpu.vector_store %arg19[%c6_37, %c0_38], %48 {strides = array<i32>} : memref<12x256xf32, #tpu.memory_space<vmem>>, vector<6x256xf32>,
    %c0_39 = arith.constant 0 : index
    %c0_40 = arith.constant 0 : index
    %50 = vector.load %arg19[%c0_39, %c0_40] : memref<12x256xf32, #tpu.memory_space<vmem>>, vector<12x256xf32>
    %51 = arith.truncf %50 : vector<12x256xf32> to vector<12x256xbf16>
    %c1 = arith.constant 1 : index
    %c0_41 = arith.constant 0 : index
    %c0_42 = arith.constant 0 : index
    %52 = vector.load %arg6[%c1, %c0_41, %c0_42] : memref<5x256x256xbf16, #tpu.memory_space<vmem>>, vector<1x256x256xbf16>
    %53 = vector.shape_cast %52 : vector<1x256x256xbf16> to vector<256x256xbf16>
    %cst_43 = arith.constant dense<0.000000e+00> : vector<12x256xf32>
    %54 = tpu.matmul %51, %53, %cst_43 {dimension_numbers = #tpu.dot_dimension_numbers<[1], [0], [0], [1], [0, 0, 1, 1], [], []>} : vector<12x256xbf16>, vector<256x256xbf16>, vector<12x256xf32> -> vector<12x256xf32>
    %55 = arith.addf %45, %54 : vector<12x256xf32>
    %56 = vector.extract_strided_slice %34 {offsets = [1, 0], sizes = [6, 256], strides = [1, 1]} : vector<32x256xf32> to vector<6x256xf32>
    %c0_44 = arith.constant 0 : index
    %c0_45 = arith.constant 0 : index
    %57 = vector.load %arg19[%c0_44, %c0_45] : memref<12x256xf32, #tpu.memory_space<vmem>>, vector<6x256xf32>
    tpu.vector_store %arg19[%c0_44, %c0_45], %56 {strides = array<i32>} : memref<12x256xf32, #tpu.memory_space<vmem>>, vector<6x256xf32>,
    %58 = vector.extract_strided_slice %34 {offsets = [17, 0], sizes = [6, 256], strides = [1, 1]} : vector<32x256xf32> to vector<6x256xf32>
    %c6_46 = arith.constant 6 : index
    %c0_47 = arith.constant 0 : index
    %59 = vector.load %arg19[%c6_46, %c0_47] : memref<12x256xf32, #tpu.memory_space<vmem>>, vector<6x256xf32>
    tpu.vector_store %arg19[%c6_46, %c0_47], %58 {strides = array<i32>} : memref<12x256xf32, #tpu.memory_space<vmem>>, vector<6x256xf32>,
    %c0_48 = arith.constant 0 : index
    %c0_49 = arith.constant 0 : index
    %60 = vector.load %arg19[%c0_48, %c0_49] : memref<12x256xf32, #tpu.memory_space<vmem>>, vector<12x256xf32>
    %61 = arith.truncf %60 : vector<12x256xf32> to vector<12x256xbf16>
    %c2 = arith.constant 2 : index
    %c0_50 = arith.constant 0 : index
    %c0_51 = arith.constant 0 : index
    %62 = vector.load %arg6[%c2, %c0_50, %c0_51] : memref<5x256x256xbf16, #tpu.memory_space<vmem>>, vector<1x256x256xbf16>
    %63 = vector.shape_cast %62 : vector<1x256x256xbf16> to vector<256x256xbf16>
    %cst_52 = arith.constant dense<0.000000e+00> : vector<12x256xf32>
    %64 = tpu.matmul %61, %63, %cst_52 {dimension_numbers = #tpu.dot_dimension_numbers<[1], [0], [0], [1], [0, 0, 1, 1], [], []>} : vector<12x256xbf16>, vector<256x256xbf16>, vector<12x256xf32> -> vector<12x256xf32>
    %65 = arith.addf %55, %64 : vector<12x256xf32>
    %66 = vector.extract_strided_slice %34 {offsets = [9, 0], sizes = [6, 256], strides = [1, 1]} : vector<32x256xf32> to vector<6x256xf32>
    %c0_53 = arith.constant 0 : index
    %c0_54 = arith.constant 0 : index
    %67 = vector.load %arg19[%c0_53, %c0_54] : memref<12x256xf32, #tpu.memory_space<vmem>>, vector<6x256xf32>
    tpu.vector_store %arg19[%c0_53, %c0_54], %66 {strides = array<i32>} : memref<12x256xf32, #tpu.memory_space<vmem>>, vector<6x256xf32>,
    %68 = vector.extract_strided_slice %34 {offsets = [25, 0], sizes = [6, 256], strides = [1, 1]} : vector<32x256xf32> to vector<6x256xf32>
    %c6_55 = arith.constant 6 : index
    %c0_56 = arith.constant 0 : index
    %69 = vector.load %arg19[%c6_55, %c0_56] : memref<12x256xf32, #tpu.memory_space<vmem>>, vector<6x256xf32>
    tpu.vector_store %arg19[%c6_55, %c0_56], %68 {strides = array<i32>} : memref<12x256xf32, #tpu.memory_space<vmem>>, vector<6x256xf32>,
    %c0_57 = arith.constant 0 : index
    %c0_58 = arith.constant 0 : index
    %70 = vector.load %arg19[%c0_57, %c0_58] : memref<12x256xf32, #tpu.memory_space<vmem>>, vector<12x256xf32>
    %71 = arith.truncf %70 : vector<12x256xf32> to vector<12x256xbf16>
    %c3 = arith.constant 3 : index
    %c0_59 = arith.constant 0 : index
    %c0_60 = arith.constant 0 : index
    %72 = vector.load %arg6[%c3, %c0_59, %c0_60] : memref<5x256x256xbf16, #tpu.memory_space<vmem>>, vector<1x256x256xbf16>
    %73 = vector.shape_cast %72 : vector<1x256x256xbf16> to vector<256x256xbf16>
    %cst_61 = arith.constant dense<0.000000e+00> : vector<12x256xf32>
    %74 = tpu.matmul %71, %73, %cst_61 {dimension_numbers = #tpu.dot_dimension_numbers<[1], [0], [0], [1], [0, 0, 1, 1], [], []>} : vector<12x256xbf16>, vector<256x256xbf16>, vector<12x256xf32> -> vector<12x256xf32>
    %75 = arith.addf %65, %74 : vector<12x256xf32>
    %76 = vector.extract_strided_slice %34 {offsets = [2, 0], sizes = [6, 256], strides = [1, 1]} : vector<32x256xf32> to vector<6x256xf32>
    %c0_62 = arith.constant 0 : index
    %c0_63 = arith.constant 0 : index
    %77 = vector.load %arg19[%c0_62, %c0_63] : memref<12x256xf32, #tpu.memory_space<vmem>>, vector<6x256xf32>
    tpu.vector_store %arg19[%c0_62, %c0_63], %76 {strides = array<i32>} : memref<12x256xf32, #tpu.memory_space<vmem>>, vector<6x256xf32>,
    %78 = vector.extract_strided_slice %34 {offsets = [18, 0], sizes = [6, 256], strides = [1, 1]} : vector<32x256xf32> to vector<6x256xf32>
    %c6_64 = arith.constant 6 : index
    %c0_65 = arith.constant 0 : index
    %79 = vector.load %arg19[%c6_64, %c0_65] : memref<12x256xf32, #tpu.memory_space<vmem>>, vector<6x256xf32>
    tpu.vector_store %arg19[%c6_64, %c0_65], %78 {strides = array<i32>} : memref<12x256xf32, #tpu.memory_space<vmem>>, vector<6x256xf32>,
    %c0_66 = arith.constant 0 : index
    %c0_67 = arith.constant 0 : index
    %80 = vector.load %arg19[%c0_66, %c0_67] : memref<12x256xf32, #tpu.memory_space<vmem>>, vector<12x256xf32>
    %81 = arith.truncf %80 : vector<12x256xf32> to vector<12x256xbf16>
    %c4 = arith.constant 4 : index
    %c0_68 = arith.constant 0 : index
    %c0_69 = arith.constant 0 : index
    %82 = vector.load %arg6[%c4, %c0_68, %c0_69] : memref<5x256x256xbf16, #tpu.memory_space<vmem>>, vector<1x256x256xbf16>
    %83 = vector.shape_cast %82 : vector<1x256x256xbf16> to vector<256x256xbf16>
    %cst_70 = arith.constant dense<0.000000e+00> : vector<12x256xf32>
    %84 = tpu.matmul %81, %83, %cst_70 {dimension_numbers = #tpu.dot_dimension_numbers<[1], [0], [0], [1], [0, 0, 1, 1], [], []>} : vector<12x256xbf16>, vector<256x256xbf16>, vector<12x256xf32> -> vector<12x256xf32>
    %85 = arith.addf %75, %84 : vector<12x256xf32>
    %cst_71 = arith.constant dense<0.000000e+00> : vector<256xf32>
    %86 = vector.multi_reduction <add>, %85, %cst_71 [0] : vector<12x256xf32> to vector<256xf32>
    %87 = vector.shape_cast %86 : vector<256xf32> to vector<1x256xf32>
    %c0_72 = arith.constant 0 : index
    %c0_73 = arith.constant 0 : index
    %88 = vector.load %arg9[%c0_72, %c0_73] : memref<256x128xf32, #tpu.memory_space<vmem>>, vector<256x128xf32>
    %cst_74 = arith.constant dense<0.000000e+00> : vector<1x128xf32>
    %89 = tpu.matmul %87, %88, %cst_74 {dimension_numbers = #tpu.dot_dimension_numbers<[1], [0], [0], [1], [0, 0, 1, 1], [], []>} : vector<1x256xf32>, vector<256x128xf32>, vector<1x128xf32> -> vector<1x128xf32>
    %cst_75 = arith.constant 0.013888889 : f32
    %90 = vector.broadcast %cst_75 : f32 to vector<1x128xf32>
    %91 = arith.mulf %89, %90 : vector<1x128xf32>
    %c0_76 = arith.constant 0 : index
    %c0_77 = arith.constant 0 : index
    %92 = vector.load %arg10[%c0_76, %c0_77] : memref<128x256xf32, #tpu.memory_space<vmem>>, vector<128x256xf32>
    %cst_78 = arith.constant dense<0.000000e+00> : vector<1x256xf32>
    %93 = tpu.matmul %91, %92, %cst_78 {dimension_numbers = #tpu.dot_dimension_numbers<[1], [0], [0], [1], [0, 0, 1, 1], [], []>} : vector<1x128xf32>, vector<128x256xf32>, vector<1x256xf32> -> vector<1x256xf32>
    %94 = vector.broadcast %93 : vector<1x256xf32> to vector<12x256xf32>
    %95 = arith.subf %85, %94 : vector<12x256xf32>
    %96 = arith.mulf %95, %95 : vector<12x256xf32>
    %cst_79 = arith.constant dense<0.000000e+00> : vector<256xf32>
    %97 = vector.multi_reduction <add>, %96, %cst_79 [0] : vector<12x256xf32> to vector<256xf32>
    %98 = vector.shape_cast %97 : vector<256xf32> to vector<1x256xf32>
    %c0_80 = arith.constant 0 : index
    %c0_81 = arith.constant 0 : index
    %99 = vector.load %arg9[%c0_80, %c0_81] : memref<256x128xf32, #tpu.memory_space<vmem>>, vector<256x128xf32>
    %cst_82 = arith.constant dense<0.000000e+00> : vector<1x128xf32>
    %100 = tpu.matmul %98, %99, %cst_82 {dimension_numbers = #tpu.dot_dimension_numbers<[1], [0], [0], [1], [0, 0, 1, 1], [], []>} : vector<1x256xf32>, vector<256x128xf32>, vector<1x128xf32> -> vector<1x128xf32>
    %cst_83 = arith.constant 0.013888889 : f32
    %101 = vector.broadcast %cst_83 : f32 to vector<1x128xf32>
    %102 = arith.mulf %100, %101 : vector<1x128xf32>
    %c0_84 = arith.constant 0 : index
    %c0_85 = arith.constant 0 : index
    %103 = vector.load %arg10[%c0_84, %c0_85] : memref<128x256xf32, #tpu.memory_space<vmem>>, vector<128x256xf32>
    %cst_86 = arith.constant dense<0.000000e+00> : vector<1x256xf32>
    %104 = tpu.matmul %102, %103, %cst_86 {dimension_numbers = #tpu.dot_dimension_numbers<[1], [0], [0], [1], [0, 0, 1, 1], [], []>} : vector<1x128xf32>, vector<128x256xf32>, vector<1x256xf32> -> vector<1x256xf32>
    %cst_87 = arith.constant 9.99999974E-6 : f32
    %105 = vector.broadcast %cst_87 : f32 to vector<1x256xf32>
    %106 = arith.addf %104, %105 : vector<1x256xf32>
    %107 = math.rsqrt %106 : vector<1x256xf32>
    %108 = vector.broadcast %107 : vector<1x256xf32> to vector<12x256xf32>
    %109 = arith.mulf %95, %108 : vector<12x256xf32>
    %c0_88 = arith.constant 0 : index
    %c0_89 = arith.constant 0 : index
    %110 = vector.load %arg7[%c0_88, %c0_89] : memref<1x256xf32, #tpu.memory_space<vmem>>, vector<1x256xf32>
    %111 = vector.broadcast %110 : vector<1x256xf32> to vector<12x256xf32>
    %112 = arith.mulf %109, %111 : vector<12x256xf32>
    %c0_90 = arith.constant 0 : index
    %c0_91 = arith.constant 0 : index
    %113 = vector.load %arg8[%c0_90, %c0_91] : memref<1x256xf32, #tpu.memory_space<vmem>>, vector<1x256xf32>
    %114 = vector.broadcast %113 : vector<1x256xf32> to vector<12x256xf32>
    %115 = arith.addf %112, %114 : vector<12x256xf32>
    %cst_92 = arith.constant 0.000000e+00 : f32
    %116 = vector.broadcast %cst_92 : f32 to vector<12x256xf32>
    %117 = arith.maximumf %115, %116 : vector<12x256xf32>
    %cst_93 = arith.constant 0.000000e+00 : f32
    %118 = vector.broadcast %cst_93 : f32 to vector<2x128xf32>
    %119 = vector.extract_strided_slice %117 {offsets = [0, 0], sizes = [1, 256], strides = [1, 1]} : vector<12x256xf32> to vector<1x256xf32>
    %c0_94 = arith.constant 0 : index
    %c0_95 = arith.constant 0 : index
    %120 = vector.load %arg20[%c0_94, %c0_95] : memref<2x256xf32, #tpu.memory_space<vmem>>, vector<1x256xf32>
    tpu.vector_store %arg20[%c0_94, %c0_95], %119 {strides = array<i32>} : memref<2x256xf32, #tpu.memory_space<vmem>>, vector<1x256xf32>,
    %121 = vector.extract_strided_slice %117 {offsets = [6, 0], sizes = [1, 256], strides = [1, 1]} : vector<12x256xf32> to vector<1x256xf32>
    %c1_96 = arith.constant 1 : index
    %c0_97 = arith.constant 0 : index
    %122 = vector.load %arg20[%c1_96, %c0_97] : memref<2x256xf32, #tpu.memory_space<vmem>>, vector<1x256xf32>
    tpu.vector_store %arg20[%c1_96, %c0_97], %121 {strides = array<i32>} : memref<2x256xf32, #tpu.memory_space<vmem>>, vector<1x256xf32>,
    %c0_98 = arith.constant 0 : index
    %c0_99 = arith.constant 0 : index
    %123 = vector.load %arg20[%c0_98, %c0_99] : memref<2x256xf32, #tpu.memory_space<vmem>>, vector<2x256xf32>
    %124 = arith.truncf %123 : vector<2x256xf32> to vector<2x256xbf16>
    %c0_100 = arith.constant 0 : index
    %c0_101 = arith.constant 0 : index
    %c0_102 = arith.constant 0 : index
    %125 = vector.load %arg11[%c0_100, %c0_101, %c0_102] : memref<5x256x128xbf16, #tpu.memory_space<vmem>>, vector<1x256x128xbf16>
    %126 = vector.shape_cast %125 : vector<1x256x128xbf16> to vector<256x128xbf16>
    %cst_103 = arith.constant dense<0.000000e+00> : vector<2x128xf32>
    %127 = tpu.matmul %124, %126, %cst_103 {dimension_numbers = #tpu.dot_dimension_numbers<[1], [0], [0], [1], [0, 0, 1, 1], [], []>} : vector<2x256xbf16>, vector<256x128xbf16>, vector<2x128xf32> -> vector<2x128xf32>
    %128 = arith.addf %118, %127 : vector<2x128xf32>
    %129 = vector.extract_strided_slice %117 {offsets = [1, 0], sizes = [1, 256], strides = [1, 1]} : vector<12x256xf32> to vector<1x256xf32>
    %c0_104 = arith.constant 0 : index
    %c0_105 = arith.constant 0 : index
    %130 = vector.load %arg20[%c0_104, %c0_105] : memref<2x256xf32, #tpu.memory_space<vmem>>, vector<1x256xf32>
    tpu.vector_store %arg20[%c0_104, %c0_105], %129 {strides = array<i32>} : memref<2x256xf32, #tpu.memory_space<vmem>>, vector<1x256xf32>,
    %131 = vector.extract_strided_slice %117 {offsets = [7, 0], sizes = [1, 256], strides = [1, 1]} : vector<12x256xf32> to vector<1x256xf32>
    %c1_106 = arith.constant 1 : index
    %c0_107 = arith.constant 0 : index
    %132 = vector.load %arg20[%c1_106, %c0_107] : memref<2x256xf32, #tpu.memory_space<vmem>>, vector<1x256xf32>
    tpu.vector_store %arg20[%c1_106, %c0_107], %131 {strides = array<i32>} : memref<2x256xf32, #tpu.memory_space<vmem>>, vector<1x256xf32>,
    %c0_108 = arith.constant 0 : index
    %c0_109 = arith.constant 0 : index
    %133 = vector.load %arg20[%c0_108, %c0_109] : memref<2x256xf32, #tpu.memory_space<vmem>>, vector<2x256xf32>
    %134 = arith.truncf %133 : vector<2x256xf32> to vector<2x256xbf16>
    %c1_110 = arith.constant 1 : index
    %c0_111 = arith.constant 0 : index
    %c0_112 = arith.constant 0 : index
    %135 = vector.load %arg11[%c1_110, %c0_111, %c0_112] : memref<5x256x128xbf16, #tpu.memory_space<vmem>>, vector<1x256x128xbf16>
    %136 = vector.shape_cast %135 : vector<1x256x128xbf16> to vector<256x128xbf16>
    %cst_113 = arith.constant dense<0.000000e+00> : vector<2x128xf32>
    %137 = tpu.matmul %134, %136, %cst_113 {dimension_numbers = #tpu.dot_dimension_numbers<[1], [0], [0], [1], [0, 0, 1, 1], [], []>} : vector<2x256xbf16>, vector<256x128xbf16>, vector<2x128xf32> -> vector<2x128xf32>
    %138 = arith.addf %128, %137 : vector<2x128xf32>
    %139 = vector.extract_strided_slice %117 {offsets = [2, 0], sizes = [1, 256], strides = [1, 1]} : vector<12x256xf32> to vector<1x256xf32>
    %c0_114 = arith.constant 0 : index
    %c0_115 = arith.constant 0 : index
    %140 = vector.load %arg20[%c0_114, %c0_115] : memref<2x256xf32, #tpu.memory_space<vmem>>, vector<1x256xf32>
    tpu.vector_store %arg20[%c0_114, %c0_115], %139 {strides = array<i32>} : memref<2x256xf32, #tpu.memory_space<vmem>>, vector<1x256xf32>,
    %141 = vector.extract_strided_slice %117 {offsets = [8, 0], sizes = [1, 256], strides = [1, 1]} : vector<12x256xf32> to vector<1x256xf32>
    %c1_116 = arith.constant 1 : index
    %c0_117 = arith.constant 0 : index
    %142 = vector.load %arg20[%c1_116, %c0_117] : memref<2x256xf32, #tpu.memory_space<vmem>>, vector<1x256xf32>
    tpu.vector_store %arg20[%c1_116, %c0_117], %141 {strides = array<i32>} : memref<2x256xf32, #tpu.memory_space<vmem>>, vector<1x256xf32>,
    %c0_118 = arith.constant 0 : index
    %c0_119 = arith.constant 0 : index
    %143 = vector.load %arg20[%c0_118, %c0_119] : memref<2x256xf32, #tpu.memory_space<vmem>>, vector<2x256xf32>
    %144 = arith.truncf %143 : vector<2x256xf32> to vector<2x256xbf16>
    %c2_120 = arith.constant 2 : index
    %c0_121 = arith.constant 0 : index
    %c0_122 = arith.constant 0 : index
    %145 = vector.load %arg11[%c2_120, %c0_121, %c0_122] : memref<5x256x128xbf16, #tpu.memory_space<vmem>>, vector<1x256x128xbf16>
    %146 = vector.shape_cast %145 : vector<1x256x128xbf16> to vector<256x128xbf16>
    %cst_123 = arith.constant dense<0.000000e+00> : vector<2x128xf32>
    %147 = tpu.matmul %144, %146, %cst_123 {dimension_numbers = #tpu.dot_dimension_numbers<[1], [0], [0], [1], [0, 0, 1, 1], [], []>} : vector<2x256xbf16>, vector<256x128xbf16>, vector<2x128xf32> -> vector<2x128xf32>
    %148 = arith.addf %138, %147 : vector<2x128xf32>
    %149 = vector.extract_strided_slice %117 {offsets = [3, 0], sizes = [1, 256], strides = [1, 1]} : vector<12x256xf32> to vector<1x256xf32>
    %c0_124 = arith.constant 0 : index
    %c0_125 = arith.constant 0 : index
    %150 = vector.load %arg20[%c0_124, %c0_125] : memref<2x256xf32, #tpu.memory_space<vmem>>, vector<1x256xf32>
    tpu.vector_store %arg20[%c0_124, %c0_125], %149 {strides = array<i32>} : memref<2x256xf32, #tpu.memory_space<vmem>>, vector<1x256xf32>,
    %151 = vector.extract_strided_slice %117 {offsets = [9, 0], sizes = [1, 256], strides = [1, 1]} : vector<12x256xf32> to vector<1x256xf32>
    %c1_126 = arith.constant 1 : index
    %c0_127 = arith.constant 0 : index
    %152 = vector.load %arg20[%c1_126, %c0_127] : memref<2x256xf32, #tpu.memory_space<vmem>>, vector<1x256xf32>
    tpu.vector_store %arg20[%c1_126, %c0_127], %151 {strides = array<i32>} : memref<2x256xf32, #tpu.memory_space<vmem>>, vector<1x256xf32>,
    %c0_128 = arith.constant 0 : index
    %c0_129 = arith.constant 0 : index
    %153 = vector.load %arg20[%c0_128, %c0_129] : memref<2x256xf32, #tpu.memory_space<vmem>>, vector<2x256xf32>
    %154 = arith.truncf %153 : vector<2x256xf32> to vector<2x256xbf16>
    %c3_130 = arith.constant 3 : index
    %c0_131 = arith.constant 0 : index
    %c0_132 = arith.constant 0 : index
    %155 = vector.load %arg11[%c3_130, %c0_131, %c0_132] : memref<5x256x128xbf16, #tpu.memory_space<vmem>>, vector<1x256x128xbf16>
    %156 = vector.shape_cast %155 : vector<1x256x128xbf16> to vector<256x128xbf16>
    %cst_133 = arith.constant dense<0.000000e+00> : vector<2x128xf32>
    %157 = tpu.matmul %154, %156, %cst_133 {dimension_numbers = #tpu.dot_dimension_numbers<[1], [0], [0], [1], [0, 0, 1, 1], [], []>} : vector<2x256xbf16>, vector<256x128xbf16>, vector<2x128xf32> -> vector<2x128xf32>
    %158 = arith.addf %148, %157 : vector<2x128xf32>
    %159 = vector.extract_strided_slice %117 {offsets = [4, 0], sizes = [1, 256], strides = [1, 1]} : vector<12x256xf32> to vector<1x256xf32>
    %c0_134 = arith.constant 0 : index
    %c0_135 = arith.constant 0 : index
    %160 = vector.load %arg20[%c0_134, %c0_135] : memref<2x256xf32, #tpu.memory_space<vmem>>, vector<1x256xf32>
    tpu.vector_store %arg20[%c0_134, %c0_135], %159 {strides = array<i32>} : memref<2x256xf32, #tpu.memory_space<vmem>>, vector<1x256xf32>,
    %161 = vector.extract_strided_slice %117 {offsets = [10, 0], sizes = [1, 256], strides = [1, 1]} : vector<12x256xf32> to vector<1x256xf32>
    %c1_136 = arith.constant 1 : index
    %c0_137 = arith.constant 0 : index
    %162 = vector.load %arg20[%c1_136, %c0_137] : memref<2x256xf32, #tpu.memory_space<vmem>>, vector<1x256xf32>
    tpu.vector_store %arg20[%c1_136, %c0_137], %161 {strides = array<i32>} : memref<2x256xf32, #tpu.memory_space<vmem>>, vector<1x256xf32>,
    %c0_138 = arith.constant 0 : index
    %c0_139 = arith.constant 0 : index
    %163 = vector.load %arg20[%c0_138, %c0_139] : memref<2x256xf32, #tpu.memory_space<vmem>>, vector<2x256xf32>
    %164 = arith.truncf %163 : vector<2x256xf32> to vector<2x256xbf16>
    %c4_140 = arith.constant 4 : index
    %c0_141 = arith.constant 0 : index
    %c0_142 = arith.constant 0 : index
    %165 = vector.load %arg11[%c4_140, %c0_141, %c0_142] : memref<5x256x128xbf16, #tpu.memory_space<vmem>>, vector<1x256x128xbf16>
    %166 = vector.shape_cast %165 : vector<1x256x128xbf16> to vector<256x128xbf16>
    %cst_143 = arith.constant dense<0.000000e+00> : vector<2x128xf32>
    %167 = tpu.matmul %164, %166, %cst_143 {dimension_numbers = #tpu.dot_dimension_numbers<[1], [0], [0], [1], [0, 0, 1, 1], [], []>} : vector<2x256xbf16>, vector<256x128xbf16>, vector<2x128xf32> -> vector<2x128xf32>
    %168 = arith.addf %158, %167 : vector<2x128xf32>
    %cst_144 = arith.constant dense<0.000000e+00> : vector<128xf32>
    %169 = vector.multi_reduction <add>, %168, %cst_144 [0] : vector<2x128xf32> to vector<128xf32>
    %170 = vector.shape_cast %169 : vector<128xf32> to vector<1x128xf32>
    %c0_145 = arith.constant 0 : index
    %c0_146 = arith.constant 0 : index
    %171 = vector.load %arg14[%c0_145, %c0_146] : memref<128x128xf32, #tpu.memory_space<vmem>>, vector<128x128xf32>
    %cst_147 = arith.constant dense<0.000000e+00> : vector<1x128xf32>
    %172 = tpu.matmul %170, %171, %cst_147 {dimension_numbers = #tpu.dot_dimension_numbers<[1], [0], [0], [1], [0, 0, 1, 1], [], []>} : vector<1x128xf32>, vector<128x128xf32>, vector<1x128xf32> -> vector<1x128xf32>
    %cst_148 = arith.constant 5.000000e-01 : f32
    %173 = vector.broadcast %cst_148 : f32 to vector<1x128xf32>
    %174 = arith.mulf %172, %173 : vector<1x128xf32>
    %c0_149 = arith.constant 0 : index
    %c0_150 = arith.constant 0 : index
    %175 = vector.load %arg15[%c0_149, %c0_150] : memref<128x128xf32, #tpu.memory_space<vmem>>, vector<128x128xf32>
    %cst_151 = arith.constant dense<0.000000e+00> : vector<1x128xf32>
    %176 = tpu.matmul %174, %175, %cst_151 {dimension_numbers = #tpu.dot_dimension_numbers<[1], [0], [0], [1], [0, 0, 1, 1], [], []>} : vector<1x128xf32>, vector<128x128xf32>, vector<1x128xf32> -> vector<1x128xf32>
    %177 = vector.broadcast %176 : vector<1x128xf32> to vector<2x128xf32>
    %178 = arith.subf %168, %177 : vector<2x128xf32>
    %179 = arith.mulf %178, %178 : vector<2x128xf32>
    %cst_152 = arith.constant dense<0.000000e+00> : vector<128xf32>
    %180 = vector.multi_reduction <add>, %179, %cst_152 [0] : vector<2x128xf32> to vector<128xf32>
    %181 = vector.shape_cast %180 : vector<128xf32> to vector<1x128xf32>
    %c0_153 = arith.constant 0 : index
    %c0_154 = arith.constant 0 : index
    %182 = vector.load %arg14[%c0_153, %c0_154] : memref<128x128xf32, #tpu.memory_space<vmem>>, vector<128x128xf32>
    %cst_155 = arith.constant dense<0.000000e+00> : vector<1x128xf32>
    %183 = tpu.matmul %181, %182, %cst_155 {dimension_numbers = #tpu.dot_dimension_numbers<[1], [0], [0], [1], [0, 0, 1, 1], [], []>} : vector<1x128xf32>, vector<128x128xf32>, vector<1x128xf32> -> vector<1x128xf32>
    %cst_156 = arith.constant 5.000000e-01 : f32
    %184 = vector.broadcast %cst_156 : f32 to vector<1x128xf32>
    %185 = arith.mulf %183, %184 : vector<1x128xf32>
    %c0_157 = arith.constant 0 : index
    %c0_158 = arith.constant 0 : index
    %186 = vector.load %arg15[%c0_157, %c0_158] : memref<128x128xf32, #tpu.memory_space<vmem>>, vector<128x128xf32>
    %cst_159 = arith.constant dense<0.000000e+00> : vector<1x128xf32>
    %187 = tpu.matmul %185, %186, %cst_159 {dimension_numbers = #tpu.dot_dimension_numbers<[1], [0], [0], [1], [0, 0, 1, 1], [], []>} : vector<1x128xf32>, vector<128x128xf32>, vector<1x128xf32> -> vector<1x128xf32>
    %cst_160 = arith.constant 9.99999974E-6 : f32
    %188 = vector.broadcast %cst_160 : f32 to vector<1x128xf32>
    %189 = arith.addf %187, %188 : vector<1x128xf32>
    %190 = math.rsqrt %189 : vector<1x128xf32>
    %191 = vector.broadcast %190 : vector<1x128xf32> to vector<2x128xf32>
    %192 = arith.mulf %178, %191 : vector<2x128xf32>
    %c0_161 = arith.constant 0 : index
    %c0_162 = arith.constant 0 : index
    %193 = vector.load %arg12[%c0_161, %c0_162] : memref<1x128xf32, #tpu.memory_space<vmem>>, vector<1x128xf32>
    %194 = vector.broadcast %193 : vector<1x128xf32> to vector<2x128xf32>
    %195 = arith.mulf %192, %194 : vector<2x128xf32>
    %c0_163 = arith.constant 0 : index
    %c0_164 = arith.constant 0 : index
    %196 = vector.load %arg13[%c0_163, %c0_164] : memref<1x128xf32, #tpu.memory_space<vmem>>, vector<1x128xf32>
    %197 = vector.broadcast %196 : vector<1x128xf32> to vector<2x128xf32>
    %198 = arith.addf %195, %197 : vector<2x128xf32>
    %cst_165 = arith.constant 0.000000e+00 : f32
    %199 = vector.broadcast %cst_165 : f32 to vector<2x128xf32>
    %200 = arith.maximumf %198, %199 : vector<2x128xf32>
    %201 = arith.truncf %200 : vector<2x128xf32> to vector<2x128xbf16>
    %cst_166 = arith.constant 0.000000e+00 : f32
    %202 = vector.broadcast %cst_166 : f32 to vector<2x128xf32>
    %c0_167 = arith.constant 0 : index
    %c0_168 = arith.constant 0 : index
    %c0_169 = arith.constant 0 : index
    %203 = vector.load %arg16[%c0_167, %c0_168, %c0_169] : memref<1x128x128xbf16, #tpu.memory_space<vmem>>, vector<1x128x128xbf16>
    %204 = vector.shape_cast %203 : vector<1x128x128xbf16> to vector<128x128xbf16>
    %cst_170 = arith.constant dense<0.000000e+00> : vector<2x128xf32>
    %205 = tpu.matmul %201, %204, %cst_170 {dimension_numbers = #tpu.dot_dimension_numbers<[1], [0], [0], [1], [0, 0, 1, 1], [], []>} : vector<2x128xbf16>, vector<128x128xbf16>, vector<2x128xf32> -> vector<2x128xf32>
    %206 = arith.addf %202, %205 : vector<2x128xf32>
    %c0_171 = arith.constant 0 : index
    %c0_172 = arith.constant 0 : index
    %207 = vector.load %arg17[%c0_171, %c0_172] : memref<1x128xf32, #tpu.memory_space<vmem>>, vector<1x128xf32>
    %208 = vector.broadcast %207 : vector<1x128xf32> to vector<2x128xf32>
    %209 = arith.addf %206, %208 : vector<2x128xf32>
    %c0_173 = arith.constant 0 : index
    %c0_174 = arith.constant 0 : index
    %210 = vector.load %arg18[%c0_173, %c0_174] : memref<2x128xf32, #tpu.memory_space<vmem>>, vector<2x128xf32>
    tpu.vector_store %arg18[%c0_173, %c0_174], %209 {strides = array<i32>} : memref<2x128xf32, #tpu.memory_space<vmem>>, vector<2x128xf32>,
    return
  }
}

</mosaic_0001>

<llo_original>
// kernel: nature_cnn_forward.1
$region0: #{nature_cnn_forward.1}
  #allocation0 [shape = 'u32[]', space=smem, size = 0x4, offset = 0x4, fixed_abs, tag = 'smem constant byte address 0x4 - core index']
  #allocation1 [shape = 'u32[144,128]{1,0:T(1,128)}', space=vmem, size = 0x12000, scoped, tag = 'internal scratch']
  #allocation2 [shape = 'f32[12,256]{1,0:T(8,128)}', space=vmem, size = 0x4000, scoped, tag = 'scratch operand']
  #allocation3 [shape = 'f32[2,256]{1,0:T(2,128)}', space=vmem, size = 0x800, scoped, tag = 'scratch operand']
  %s0 = inlined_call_operand.vmem [shape: bf16[32,640], index: 0, kind: input, shape index: {}]
  %s1 = inlined_call_operand.vmem [shape: bf16[640,256], index: 1, kind: input, shape index: {}]
  %s2 = inlined_call_operand.vmem [shape: f32[1,256], index: 2, kind: input, shape index: {}]
  %s3 = inlined_call_operand.vmem [shape: f32[1,256], index: 3, kind: input, shape index: {}]
  %s4 = inlined_call_operand.vmem [shape: f32[256,128], index: 4, kind: input, shape index: {}]
  %s5 = inlined_call_operand.hbm [shape: f32[128,256], index: 5, kind: input, shape index: {}]
  %s6 = inlined_call_operand.vmem [shape: bf16[5,256,256], index: 6, kind: input, shape index: {}]
  %s7 = inlined_call_operand.vmem [shape: f32[1,256], index: 7, kind: input, shape index: {}]
  %s8 = inlined_call_operand.vmem [shape: f32[1,256], index: 8, kind: input, shape index: {}]
  %s9 = inlined_call_operand.hbm [shape: f32[256,128], index: 9, kind: input, shape index: {}]
  %s10 = inlined_call_operand.hbm [shape: f32[128,256], index: 10, kind: input, shape index: {}]
  %s11 = inlined_call_operand.hbm [shape: bf16[5,256,128], index: 11, kind: input, shape index: {}]
  %s12 = inlined_call_operand.vmem [shape: f32[1,128], index: 12, kind: input, shape index: {}]
  %s13 = inlined_call_operand.vmem [shape: f32[1,128], index: 13, kind: input, shape index: {}]
  %s14 = inlined_call_operand.hbm [shape: f32[128,128], index: 14, kind: input, shape index: {}]
  %s15 = inlined_call_operand.hbm [shape: f32[128,128], index: 15, kind: input, shape index: {}]
  %s16 = inlined_call_operand.hbm [shape: bf16[1,128,128], index: 16, kind: input, shape index: {}]
  %s17 = inlined_call_operand.vmem [shape: f32[1,128], index: 17, kind: input, shape index: {}]
  %s18 = inlined_call_operand.hbm [shape: f32[2,128], index: 18, kind: output, shape index: {}]
  %s19 = sld [smem:[#allocation0]]
  $region110: #{nature_cnn_forward.1} parent=0
    _
  %s21 = ssub.s32 1, %s19
  %s22 = scalar_select 0, %s21, %s19
  $region1: #{nature_cnn_forward.1} parent=0
    #allocation4 [shape = 'u8[131072]{0}', space=vmem, size = 0x20000, scoped, tag = 'input window, operand 5, single buffered']
    #allocation5 [shape = 's32[1]{0}', space=sflag, size = 0x4, scoped, tag = 'scoped memory for nature_cnn_forward.1']
    #allocation6 [shape = 's32[1]{0}', space=sflag, size = 0x4, scoped, tag = 'scoped memory for nature_cnn_forward.1']
    #allocation7 [shape = 'u8[131072]{0}', space=vmem, size = 0x20000, scoped, tag = 'input window, operand 9, single buffered']
    #allocation8 [shape = 's32[1]{0}', space=sflag, size = 0x4, scoped, tag = 'scoped memory for nature_cnn_forward.1']
    #allocation9 [shape = 'u8[131072]{0}', space=vmem, size = 0x20000, scoped, tag = 'input window, operand 10, single buffered']
    #allocation10 [shape = 'u8[327680]{0}', space=vmem, size = 0x50000, scoped, tag = 'input window, operand 11, single buffered']
    #allocation11 [shape = 's32[1]{0}', space=sflag, size = 0x4, scoped, tag = 'scoped memory for nature_cnn_forward.1']
    #allocation12 [shape = 'u8[65536]{0}', space=vmem, size = 0x10000, scoped, tag = 'input window, operand 14, single buffered']
    #allocation13 [shape = 'u8[65536]{0}', space=vmem, size = 0x10000, scoped, tag = 'input window, operand 15, single buffered']
    #allocation14 [shape = 's32[1]{0}', space=sflag, size = 0x4, scoped, tag = 'scoped memory for nature_cnn_forward.1']
    #allocation15 [shape = 'u8[32768]{0}', space=vmem, size = 0x8000, scoped, tag = 'input window, operand 16, single buffered']
    #allocation16 [shape = 'u8[1024]{0}', space=vmem, size = 0x400, scoped, tag = 'output window, operand 0, single buffered']
    %23 = vsyncpa [#allocation5], 0
    %24 = vsyncpa [#allocation8], 0
    %25 = vsyncpa [#allocation11], 0
    %26 = vsyncpa [#allocation14], 0
    %27 = vsyncpa [#allocation6], 0
    // Predicated region
    $region2: #{nature_cnn_forward.1} parent=1 // pred_check
      _
    $region3: #{nature_cnn_forward.1} parent=1 // pred_check_branch
      %29 = sbr.rel (0) target = $region5
    $region4: #{nature_cnn_forward.1} parent=1 // pred_region
      _
    $region5: #{nature_cnn_forward.1} parent=1 // pred_fallthru
      _
    // Predicated region
    $region6: #{nature_cnn_forward.1} parent=1 // pred_check
      _
    $region7: #{nature_cnn_forward.1} parent=1 // pred_check_branch
      %31 = sbr.rel (0) target = $region9
    $region8: #{nature_cnn_forward.1} parent=1 // pred_region
      _
    $region9: #{nature_cnn_forward.1} parent=1 // pred_fallthru
      _
    // Predicated region
    $region10: #{nature_cnn_forward.1} parent=1 // pred_check
      _
    $region11: #{nature_cnn_forward.1} parent=1 // pred_check_branch
      %33 = sbr.rel (0) target = $region13
    $region12: #{nature_cnn_forward.1} parent=1 // pred_region
      _
    $region13: #{nature_cnn_forward.1} parent=1 // pred_fallthru
      _
    // Predicated region
    $region14: #{nature_cnn_forward.1} parent=1 // pred_check
      _
    $region15: #{nature_cnn_forward.1} parent=1 // pred_check_branch
      %35 = sbr.rel (0) target = $region17
    $region16: #{nature_cnn_forward.1} parent=1 // pred_region
      _
    $region17: #{nature_cnn_forward.1} parent=1 // pred_fallthru
      _
    // Predicated region
    $region18: #{nature_cnn_forward.1} parent=1 // pred_check
      _
    $region19: #{nature_cnn_forward.1} parent=1 // pred_check_branch
      %37 = sbr.rel (0) target = $region21
    $region20: #{nature_cnn_forward.1} parent=1 // pred_region
      _
    $region21: #{nature_cnn_forward.1} parent=1 // pred_fallthru
      _
    // Predicated region
    $region22: #{nature_cnn_forward.1} parent=1 // pred_check
      _
    $region23: #{nature_cnn_forward.1} parent=1 // pred_check_branch
      %39 = sbr.rel (0) target = $region25
    $region24: #{nature_cnn_forward.1} parent=1 // pred_region
      %s41 = ssub.s32 4096, 4096
      %42 = vsyncadd [#allocation5], %s41
      %s43 = sshll.u32 [#allocation4], 4
      %s44 = int_to_ptr.vmem [resolvable:$true] %s43
      %49 = dma.hbm_to_vmem [thread:$0]  %s5, 4096, %s44, [#allocation5], 256, 256, 16
    $region25: #{nature_cnn_forward.1} parent=1 // pred_fallthru
      _
    // Predicated region
    $region26: #{nature_cnn_forward.1} parent=1 // pred_check
      _
    $region27: #{nature_cnn_forward.1} parent=1 // pred_check_branch
      %51 = sbr.rel (0) target = $region29
    $region28: #{nature_cnn_forward.1} parent=1 // pred_region
      _
    $region29: #{nature_cnn_forward.1} parent=1 // pred_fallthru
      _
    // Predicated region
    $region30: #{nature_cnn_forward.1} parent=1 // pred_check
      _
    $region31: #{nature_cnn_forward.1} parent=1 // pred_check_branch
      %53 = sbr.rel (0) target = $region33
    $region32: #{nature_cnn_forward.1} parent=1 // pred_region
      _
    $region33: #{nature_cnn_forward.1} parent=1 // pred_fallthru
      _
    // Predicated region
    $region34: #{nature_cnn_forward.1} parent=1 // pred_check
      _
    $region35: #{nature_cnn_forward.1} parent=1 // pred_check_branch
      %55 = sbr.rel (0) target = $region37
    $region36: #{nature_cnn_forward.1} parent=1 // pred_region
      _
    $region37: #{nature_cnn_forward.1} parent=1 // pred_fallthru
      _
    // Predicated region
    $region38: #{nature_cnn_forward.1} parent=1 // pred_check
      _
    $region39: #{nature_cnn_forward.1} parent=1 // pred_check_branch
      %57 = sbr.rel (0) target = $region41
    $region40: #{nature_cnn_forward.1} parent=1 // pred_region
      %s59 = ssub.s32 4096, 4096
      %60 = vsyncadd [#allocation8], %s59
      %s61 = sshll.u32 [#allocation7], 4
      %s62 = int_to_ptr.vmem [resolvable:$true] %s61
      %67 = dma.hbm_to_vmem [thread:$0]  %s9, 4096, %s62, [#allocation8], 128, 128, 8
    $region41: #{nature_cnn_forward.1} parent=1 // pred_fallthru
      _
    // Predicated region
    $region42: #{nature_cnn_forward.1} parent=1 // pred_check
      _
    $region43: #{nature_cnn_forward.1} parent=1 // pred_check_branch
      %69 = sbr.rel (0) target = $region45
    $region44: #{nature_cnn_forward.1} parent=1 // pred_region
      %s71 = ssub.s32 4096, 4096
      %72 = vsyncadd [#allocation8], %s71
      %s73 = sshll.u32 [#allocation9], 4
      %s74 = int_to_ptr.vmem [resolvable:$true] %s73
      %79 = dma.hbm_to_vmem [thread:$0]  %s10, 4096, %s74, [#allocation8], 256, 256, 16
    $region45: #{nature_cnn_forward.1} parent=1 // pred_fallthru
      _
    // Predicated region
    $region46: #{nature_cnn_forward.1} parent=1 // pred_check
      _
    $region47: #{nature_cnn_forward.1} parent=1 // pred_check_branch
      %81 = sbr.rel (0) target = $region49
    $region48: #{nature_cnn_forward.1} parent=1 // pred_region
      %s83 = ssub.s32 10240, 10240
      %84 = vsyncadd [#allocation11], %s83
      %s85 = sshll.u32 [#allocation10], 4
      %s86 = int_to_ptr.vmem [resolvable:$true] %s85
      %91 = dma.hbm_to_vmem [thread:$0]  %s11, 10240, %s86, [#allocation11], 64, 64, 4
    $region49: #{nature_cnn_forward.1} parent=1 // pred_fallthru
      _
    // Predicated region
    $region50: #{nature_cnn_forward.1} parent=1 // pred_check
      _
    $region51: #{nature_cnn_forward.1} parent=1 // pred_check_branch
      %93 = sbr.rel (0) target = $region53
    $region52: #{nature_cnn_forward.1} parent=1 // pred_region
      _
    $region53: #{nature_cnn_forward.1} parent=1 // pred_fallthru
      _
    // Predicated region
    $region54: #{nature_cnn_forward.1} parent=1 // pred_check
      _
    $region55: #{nature_cnn_forward.1} parent=1 // pred_check_branch
      %95 = sbr.rel (0) target = $region57
    $region56: #{nature_cnn_forward.1} parent=1 // pred_region
      _
    $region57: #{nature_cnn_forward.1} parent=1 // pred_fallthru
      _
    // Predicated region
    $region58: #{nature_cnn_forward.1} parent=1 // pred_check
      _
    $region59: #{nature_cnn_forward.1} parent=1 // pred_check_branch
      %97 = sbr.rel (0) target = $region61
    $region60: #{nature_cnn_forward.1} parent=1 // pred_region
      %s99 = ssub.s32 2048, 2048
      %100 = vsyncadd [#allocation11], %s99
      %s101 = sshll.u32 [#allocation12], 4
      %s102 = int_to_ptr.vmem [resolvable:$true] %s101
      %107 = dma.hbm_to_vmem [thread:$0]  %s14, 2048, %s102, [#allocation11], 128, 128, 8
    $region61: #{nature_cnn_forward.1} parent=1 // pred_fallthru
      _
    // Predicated region
    $region62: #{nature_cnn_forward.1} parent=1 // pred_check
      _
    $region63: #{nature_cnn_forward.1} parent=1 // pred_check_branch
      %109 = sbr.rel (0) target = $region65
    $region64: #{nature_cnn_forward.1} parent=1 // pred_region
      %s111 = ssub.s32 2048, 2048
      %112 = vsyncadd [#allocation14], %s111
      %s113 = sshll.u32 [#allocation13], 4
      %s114 = int_to_ptr.vmem [resolvable:$true] %s113
      %119 = dma.hbm_to_vmem [thread:$0]  %s15, 2048, %s114, [#allocation14], 128, 128, 8
    $region65: #{nature_cnn_forward.1} parent=1 // pred_fallthru
      _
    // Predicated region
    $region66: #{nature_cnn_forward.1} parent=1 // pred_check
      _
    $region67: #{nature_cnn_forward.1} parent=1 // pred_check_branch
      %121 = sbr.rel (0) target = $region69
    $region68: #{nature_cnn_forward.1} parent=1 // pred_region
      %s123 = ssub.s32 1024, 1024
      %124 = vsyncadd [#allocation14], %s123
      %s125 = sshll.u32 [#allocation15], 4
      %s126 = int_to_ptr.vmem [resolvable:$true] %s125
      %131 = dma.hbm_to_vmem [thread:$0]  %s16, 1024, %s126, [#allocation14], 64, 64, 4
    $region69: #{nature_cnn_forward.1} parent=1 // pred_fallthru
      _
    // Predicated region
    $region70: #{nature_cnn_forward.1} parent=1 // pred_check
      _
    $region71: #{nature_cnn_forward.1} parent=1 // pred_check_branch
      %133 = sbr.rel (0) target = $region73
    $region72: #{nature_cnn_forward.1} parent=1 // pred_region
      _
    $region73: #{nature_cnn_forward.1} parent=1 // pred_fallthru
      _
    // Predicated region
    $region74: #{nature_cnn_forward.1} parent=1 // pred_check
      _
    $region75: #{nature_cnn_forward.1} parent=1 // pred_check_branch
      %135 = sbr.rel (0) target = $region77
    $region76: #{nature_cnn_forward.1} parent=1 // pred_region
      %136 = dma.done [#allocation5], 4096
    $region77: #{nature_cnn_forward.1} parent=1 // pred_fallthru
      _
    // Predicated region
    $region78: #{nature_cnn_forward.1} parent=1 // pred_check
      _
    $region79: #{nature_cnn_forward.1} parent=1 // pred_check_branch
      %138 = sbr.rel (0) target = $region81
    $region80: #{nature_cnn_forward.1} parent=1 // pred_region
      %139 = dma.done [#allocation8], 4096
    $region81: #{nature_cnn_forward.1} parent=1 // pred_fallthru
      _
    // Predicated region
    $region82: #{nature_cnn_forward.1} parent=1 // pred_check
      _
    $region83: #{nature_cnn_forward.1} parent=1 // pred_check_branch
      %141 = sbr.rel (0) target = $region85
    $region84: #{nature_cnn_forward.1} parent=1 // pred_region
      %142 = dma.done [#allocation8], 4096
    $region85: #{nature_cnn_forward.1} parent=1 // pred_fallthru
      _
    // Predicated region
    $region86: #{nature_cnn_forward.1} parent=1 // pred_check
      _
    $region87: #{nature_cnn_forward.1} parent=1 // pred_check_branch
      %144 = sbr.rel (0) target = $region89
    $region88: #{nature_cnn_forward.1} parent=1 // pred_region
      %145 = dma.done [#allocation11], 10240
    $region89: #{nature_cnn_forward.1} parent=1 // pred_fallthru
      _
    // Predicated region
    $region90: #{nature_cnn_forward.1} parent=1 // pred_check
      _
    $region91: #{nature_cnn_forward.1} parent=1 // pred_check_branch
      %147 = sbr.rel (0) target = $region93
    $region92: #{nature_cnn_forward.1} parent=1 // pred_region
      %148 = dma.done [#allocation11], 2048
    $region93: #{nature_cnn_forward.1} parent=1 // pred_fallthru
      _
    // Predicated region
    $region94: #{nature_cnn_forward.1} parent=1 // pred_check
      _
    $region95: #{nature_cnn_forward.1} parent=1 // pred_check_branch
      %150 = sbr.rel (0) target = $region97
    $region96: #{nature_cnn_forward.1} parent=1 // pred_region
      %151 = dma.done [#allocation14], 2048
    $region97: #{nature_cnn_forward.1} parent=1 // pred_fallthru
      _
    // Predicated region
    $region98: #{nature_cnn_forward.1} parent=1 // pred_check
      _
    $region99: #{nature_cnn_forward.1} parent=1 // pred_check_branch
      %153 = sbr.rel (0) target = $region101
    $region100: #{nature_cnn_forward.1} parent=1 // pred_region
      %154 = dma.done [#allocation14], 1024
    $region101: #{nature_cnn_forward.1} parent=1 // pred_fallthru
      _
    %v156 = vld [vmem:[%s0] sm:$0xff]
    %v157 = vld [vmem:[%s0 + $0x8] sm:$0xff]
    %v158 = vld [vmem:[%s0 + $0x10] sm:$0xf]
    %v159 = vld [vmem:[%s0 + $0x14] sm:$0xff]
    %v160 = vld [vmem:[%s0 + $0x1c] sm:$0xff]
    %v161 = vld [vmem:[%s0 + $0x24] sm:$0xf]
    %v162 = vld [vmem:[%s0 + $0x28] sm:$0xff]
    %v163 = vld [vmem:[%s0 + $0x30] sm:$0xff]
    %v164 = vld [vmem:[%s0 + $0x38] sm:$0xf]
    %v165 = vld [vmem:[%s0 + $0x3c] sm:$0xff]
    %v166 = vld [vmem:[%s0 + $0x44] sm:$0xff]
    %v167 = vld [vmem:[%s0 + $0x4c] sm:$0xf]
    %v168 = vld [vmem:[%s1] sm:$0xff]
    %v169 = vld [vmem:[%s1 + $0x8] sm:$0xff]
    %v170 = vld [vmem:[%s1 + $0x10] sm:$0xff]
    %v171 = vld [vmem:[%s1 + $0x18] sm:$0xff]
    %v172 = vld [vmem:[%s1 + $0x20] sm:$0xff]
    %v173 = vld [vmem:[%s1 + $0x28] sm:$0xff]
    %v174 = vld [vmem:[%s1 + $0x30] sm:$0xff]
    %v175 = vld [vmem:[%s1 + $0x38] sm:$0xff]
    %v176 = vld [vmem:[%s1 + $0x40] sm:$0xff]
    %v177 = vld [vmem:[%s1 + $0x48] sm:$0xff]
    %v178 = vld [vmem:[%s1 + $0x50] sm:$0xff]
    %v179 = vld [vmem:[%s1 + $0x58] sm:$0xff]
    %v180 = vld [vmem:[%s1 + $0x60] sm:$0xff]
    %v181 = vld [vmem:[%s1 + $0x68] sm:$0xff]
    %v182 = vld [vmem:[%s1 + $0x70] sm:$0xff]
    %v183 = vld [vmem:[%s1 + $0x78] sm:$0xff]
    %v184 = vld [vmem:[%s1 + $0x80] sm:$0xff]
    %v185 = vld [vmem:[%s1 + $0x88] sm:$0xff]
    %v186 = vld [vmem:[%s1 + $0x90] sm:$0xff]
    %v187 = vld [vmem:[%s1 + $0x98] sm:$0xff]
    %v188 = vld [vmem:[%s1 + $0xa0] sm:$0xff]
    %v189 = vld [vmem:[%s1 + $0xa8] sm:$0xff]
    %v190 = vld [vmem:[%s1 + $0xb0] sm:$0xff]
    %v191 = vld [vmem:[%s1 + $0xb8] sm:$0xff]
    %v192 = vld [vmem:[%s1 + $0xc0] sm:$0xff]
    %v193 = vld [vmem:[%s1 + $0xc8] sm:$0xff]
    %v194 = vld [vmem:[%s1 + $0xd0] sm:$0xff]
    %v195 = vld [vmem:[%s1 + $0xd8] sm:$0xff]
    %v196 = vld [vmem:[%s1 + $0xe0] sm:$0xff]
    %v197 = vld [vmem:[%s1 + $0xe8] sm:$0xff]
    %v198 = vld [vmem:[%s1 + $0xf0] sm:$0xff]
    %v199 = vld [vmem:[%s1 + $0xf8] sm:$0xff]
    %v200 = vld [vmem:[%s1 + $0x100] sm:$0xff]
    %v201 = vld [vmem:[%s1 + $0x108] sm:$0xff]
    %v202 = vld [vmem:[%s1 + $0x110] sm:$0xff]
    %v203 = vld [vmem:[%s1 + $0x118] sm:$0xff]
    %v204 = vld [vmem:[%s1 + $0x120] sm:$0xff]
    %v205 = vld [vmem:[%s1 + $0x128] sm:$0xff]
    %v206 = vld [vmem:[%s1 + $0x130] sm:$0xff]
    %v207 = vld [vmem:[%s1 + $0x138] sm:$0xff]
    %v208 = vld [vmem:[%s1 + $0x140] sm:$0xff]
    %v209 = vld [vmem:[%s1 + $0x148] sm:$0xff]
    %v210 = vld [vmem:[%s1 + $0x150] sm:$0xff]
    %v211 = vld [vmem:[%s1 + $0x158] sm:$0xff]
    %v212 = vld [vmem:[%s1 + $0x160] sm:$0xff]
    %v213 = vld [vmem:[%s1 + $0x168] sm:$0xff]
    %v214 = vld [vmem:[%s1 + $0x170] sm:$0xff]
    %v215 = vld [vmem:[%s1 + $0x178] sm:$0xff]
    %v216 = vld [vmem:[%s1 + $0x180] sm:$0xff]
    %v217 = vld [vmem:[%s1 + $0x188] sm:$0xff]
    %v218 = vld [vmem:[%s1 + $0x190] sm:$0xff]
    %v219 = vld [vmem:[%s1 + $0x198] sm:$0xff]
    %v220 = vld [vmem:[%s1 + $0x1a0] sm:$0xff]
    %v221 = vld [vmem:[%s1 + $0x1a8] sm:$0xff]
    %v222 = vld [vmem:[%s1 + $0x1b0] sm:$0xff]
    %v223 = vld [vmem:[%s1 + $0x1b8] sm:$0xff]
    %v224 = vld [vmem:[%s1 + $0x1c0] sm:$0xff]
    %v225 = vld [vmem:[%s1 + $0x1c8] sm:$0xff]
    %v226 = vld [vmem:[%s1 + $0x1d0] sm:$0xff]
    %v227 = vld [vmem:[%s1 + $0x1d8] sm:$0xff]
    %v228 = vld [vmem:[%s1 + $0x1e0] sm:$0xff]
    %v229 = vld [vmem:[%s1 + $0x1e8] sm:$0xff]
    %v230 = vld [vmem:[%s1 + $0x1f0] sm:$0xff]
    %v231 = vld [vmem:[%s1 + $0x1f8] sm:$0xff]
    %v232 = vld [vmem:[%s1 + $0x200] sm:$0xff]
    %v233 = vld [vmem:[%s1 + $0x208] sm:$0xff]
    %v234 = vld [vmem:[%s1 + $0x210] sm:$0xff]
    %v235 = vld [vmem:[%s1 + $0x218] sm:$0xff]
    %v236 = vld [vmem:[%s1 + $0x220] sm:$0xff]
    %v237 = vld [vmem:[%s1 + $0x228] sm:$0xff]
    %v238 = vld [vmem:[%s1 + $0x230] sm:$0xff]
    %v239 = vld [vmem:[%s1 + $0x238] sm:$0xff]
    %v240 = vld [vmem:[%s1 + $0x240] sm:$0xff]
    %v241 = vld [vmem:[%s1 + $0x248] sm:$0xff]
    %v242 = vld [vmem:[%s1 + $0x250] sm:$0xff]
    %v243 = vld [vmem:[%s1 + $0x258] sm:$0xff]
    %v244 = vld [vmem:[%s1 + $0x260] sm:$0xff]
    %v245 = vld [vmem:[%s1 + $0x268] sm:$0xff]
    %v246 = vld [vmem:[%s1 + $0x270] sm:$0xff]
    %v247 = vld [vmem:[%s1 + $0x278] sm:$0xff]
    %v260 = vunpack.c.l.b16 %v156
    %v261 = vunpack.c.h.b16 %v156
    %v262 = vunpack.c.l.b16 %v157
    %v263 = vunpack.c.h.b16 %v157
    %v264 = vunpack.c.l.b16 %v158
    %v265 = vunpack.c.l.b16 %v159
    %v266 = vunpack.c.h.b16 %v159
    %v267 = vunpack.c.l.b16 %v160
    %v268 = vunpack.c.h.b16 %v160
    %v269 = vunpack.c.l.b16 %v161
    %v270 = vunpack.c.l.b16 %v162
    %v271 = vunpack.c.h.b16 %v162
    %v272 = vunpack.c.l.b16 %v163
    %v273 = vunpack.c.h.b16 %v163
    %v274 = vunpack.c.l.b16 %v164
    %v275 = vunpack.c.l.b16 %v165
    %v276 = vunpack.c.h.b16 %v165
    %v277 = vunpack.c.l.b16 %v166
    %v278 = vunpack.c.h.b16 %v166
    %v279 = vunpack.c.l.b16 %v167
    %v280 = vpack.c.b16 %v265, %v260
    %v281 = vpack.c.b16 %v266, %v261
    %v282 = vpack.c.b16 %v267, %v262
    %v283 = vpack.c.b16 %v268, %v263
    %v284 = vpack.c.b16 %v269, %v264
    %v285 = vpack.c.b16 %v275, %v270
    %v286 = vpack.c.b16 %v276, %v271
    %v287 = vpack.c.b16 %v277, %v272
    %v288 = vpack.c.b16 %v278, %v273
    %v289 = vpack.c.b16 %v279, %v274
    %v380 = vunpack.c.l.b16 %v168
    %v381 = vunpack.c.h.b16 %v168
    %v382 = vunpack.c.l.b16 %v169
    %v383 = vunpack.c.h.b16 %v169
    %v384 = vunpack.c.l.b16 %v170
    %v385 = vunpack.c.h.b16 %v170
    %v386 = vunpack.c.l.b16 %v171
    %v387 = vunpack.c.h.b16 %v171
    %v388 = vunpack.c.l.b16 %v172
    %v389 = vunpack.c.h.b16 %v172
    %v390 = vunpack.c.l.b16 %v173
    %v391 = vunpack.c.h.b16 %v173
    %v392 = vunpack.c.l.b16 %v174
    %v393 = vunpack.c.h.b16 %v174
    %v394 = vunpack.c.l.b16 %v175
    %v395 = vunpack.c.h.b16 %v175
    %v396 = vunpack.c.l.b16 %v176
    %v397 = vunpack.c.h.b16 %v176
    %v398 = vunpack.c.l.b16 %v177
    %v399 = vunpack.c.h.b16 %v177
    %v400 = vunpack.c.l.b16 %v178
    %v401 = vunpack.c.h.b16 %v178
    %v402 = vunpack.c.l.b16 %v179
    %v403 = vunpack.c.h.b16 %v179
    %v404 = vunpack.c.l.b16 %v180
    %v405 = vunpack.c.h.b16 %v180
    %v406 = vunpack.c.l.b16 %v181
    %v407 = vunpack.c.h.b16 %v181
    %v408 = vunpack.c.l.b16 %v182
    %v409 = vunpack.c.h.b16 %v182
    %v410 = vunpack.c.l.b16 %v183
    %v411 = vunpack.c.h.b16 %v183
    %v412 = vunpack.c.l.b16 %v184
    %v413 = vunpack.c.h.b16 %v184
    %v414 = vunpack.c.l.b16 %v185
    %v415 = vunpack.c.h.b16 %v185
    %v416 = vunpack.c.l.b16 %v186
    %v417 = vunpack.c.h.b16 %v186
    %v418 = vunpack.c.l.b16 %v187
    %v419 = vunpack.c.h.b16 %v187
    %v420 = vunpack.c.l.b16 %v188
    %v421 = vunpack.c.h.b16 %v188
    %v422 = vunpack.c.l.b16 %v189
    %v423 = vunpack.c.h.b16 %v189
    %v424 = vunpack.c.l.b16 %v190
    %v425 = vunpack.c.h.b16 %v190
    %v426 = vunpack.c.l.b16 %v191
    %v427 = vunpack.c.h.b16 %v191
    %v428 = vunpack.c.l.b16 %v192
    %v429 = vunpack.c.h.b16 %v192
    %v430 = vunpack.c.l.b16 %v193
    %v431 = vunpack.c.h.b16 %v193
    %v432 = vunpack.c.l.b16 %v194
    %v433 = vunpack.c.h.b16 %v194
    %v434 = vunpack.c.l.b16 %v195
    %v435 = vunpack.c.h.b16 %v195
    %v436 = vunpack.c.l.b16 %v196
    %v437 = vunpack.c.h.b16 %v196
    %v438 = vunpack.c.l.b16 %v197
    %v439 = vunpack.c.h.b16 %v197
    %v440 = vunpack.c.l.b16 %v198
    %v441 = vunpack.c.h.b16 %v198
    %v442 = vunpack.c.l.b16 %v199
    %v443 = vunpack.c.h.b16 %v199
    %v444 = vunpack.c.l.b16 %v200
    %v445 = vunpack.c.h.b16 %v200
    %v446 = vunpack.c.l.b16 %v201
    %v447 = vunpack.c.h.b16 %v201
    %v448 = vunpack.c.l.b16 %v202
    %v449 = vunpack.c.h.b16 %v202
    %v450 = vunpack.c.l.b16 %v203
    %v451 = vunpack.c.h.b16 %v203
    %v452 = vunpack.c.l.b16 %v204
    %v453 = vunpack.c.h.b16 %v204
    %v454 = vunpack.c.l.b16 %v205
    %v455 = vunpack.c.h.b16 %v205
    %v456 = vunpack.c.l.b16 %v206
    %v457 = vunpack.c.h.b16 %v206
    %v458 = vunpack.c.l.b16 %v207
    %v459 = vunpack.c.h.b16 %v207
    %v460 = vunpack.c.l.b16 %v208
    %v461 = vunpack.c.h.b16 %v208
    %v462 = vunpack.c.l.b16 %v209
    %v463 = vunpack.c.h.b16 %v209
    %v464 = vunpack.c.l.b16 %v210
    %v465 = vunpack.c.h.b16 %v210
    %v466 = vunpack.c.l.b16 %v211
    %v467 = vunpack.c.h.b16 %v211
    %v468 = vunpack.c.l.b16 %v212
    %v469 = vunpack.c.h.b16 %v212
    %v470 = vunpack.c.l.b16 %v213
    %v471 = vunpack.c.h.b16 %v213
    %v472 = vunpack.c.l.b16 %v214
    %v473 = vunpack.c.h.b16 %v214
    %v474 = vunpack.c.l.b16 %v215
    %v475 = vunpack.c.h.b16 %v215
    %v476 = vunpack.c.l.b16 %v216
    %v477 = vunpack.c.h.b16 %v216
    %v478 = vunpack.c.l.b16 %v217
    %v479 = vunpack.c.h.b16 %v217
    %v480 = vunpack.c.l.b16 %v218
    %v481 = vunpack.c.h.b16 %v218
    %v482 = vunpack.c.l.b16 %v219
    %v483 = vunpack.c.h.b16 %v219
    %v484 = vunpack.c.l.b16 %v220
    %v485 = vunpack.c.h.b16 %v220
    %v486 = vunpack.c.l.b16 %v221
    %v487 = vunpack.c.h.b16 %v221
    %v488 = vunpack.c.l.b16 %v222
    %v489 = vunpack.c.h.b16 %v222
    %v490 = vunpack.c.l.b16 %v223
    %v491 = vunpack.c.h.b16 %v223
    %v492 = vunpack.c.l.b16 %v224
    %v493 = vunpack.c.h.b16 %v224
    %v494 = vunpack.c.l.b16 %v225
    %v495 = vunpack.c.h.b16 %v225
    %v496 = vunpack.c.l.b16 %v226
    %v497 = vunpack.c.h.b16 %v226
    %v498 = vunpack.c.l.b16 %v227
    %v499 = vunpack.c.h.b16 %v227
    %v500 = vunpack.c.l.b16 %v228
    %v501 = vunpack.c.h.b16 %v228
    %v502 = vunpack.c.l.b16 %v229
    %v503 = vunpack.c.h.b16 %v229
    %v504 = vunpack.c.l.b16 %v230
    %v505 = vunpack.c.h.b16 %v230
    %v506 = vunpack.c.l.b16 %v231
    %v507 = vunpack.c.h.b16 %v231
    %v508 = vunpack.c.l.b16 %v232
    %v509 = vunpack.c.h.b16 %v232
    %v510 = vunpack.c.l.b16 %v233
    %v511 = vunpack.c.h.b16 %v233
    %v512 = vunpack.c.l.b16 %v234
    %v513 = vunpack.c.h.b16 %v234
    %v514 = vunpack.c.l.b16 %v235
    %v515 = vunpack.c.h.b16 %v235
    %v516 = vunpack.c.l.b16 %v236
    %v517 = vunpack.c.h.b16 %v236
    %v518 = vunpack.c.l.b16 %v237
    %v519 = vunpack.c.h.b16 %v237
    %v520 = vunpack.c.l.b16 %v238
    %v521 = vunpack.c.h.b16 %v238
    %v522 = vunpack.c.l.b16 %v239
    %v523 = vunpack.c.h.b16 %v239
    %v524 = vunpack.c.l.b16 %v240
    %v525 = vunpack.c.h.b16 %v240
    %v526 = vunpack.c.l.b16 %v241
    %v527 = vunpack.c.h.b16 %v241
    %v528 = vunpack.c.l.b16 %v242
    %v529 = vunpack.c.h.b16 %v242
    %v530 = vunpack.c.l.b16 %v243
    %v531 = vunpack.c.h.b16 %v243
    %v532 = vunpack.c.l.b16 %v244
    %v533 = vunpack.c.h.b16 %v244
    %v534 = vunpack.c.l.b16 %v245
    %v535 = vunpack.c.h.b16 %v245
    %v536 = vunpack.c.l.b16 %v246
    %v537 = vunpack.c.h.b16 %v246
    %v538 = vunpack.c.l.b16 %v247
    %v539 = vunpack.c.h.b16 %v247
    %v540 = vpack.c.b16 %v382, %v380
    %v541 = vpack.c.b16 %v383, %v381
    %v542 = vpack.c.b16 %v386, %v384
    %v543 = vpack.c.b16 %v387, %v385
    %v544 = vpack.c.b16 %v390, %v388
    %v545 = vpack.c.b16 %v391, %v389
    %v546 = vpack.c.b16 %v394, %v392
    %v547 = vpack.c.b16 %v395, %v393
    %v548 = vpack.c.b16 %v398, %v396
    %v549 = vpack.c.b16 %v399, %v397
    %v550 = vpack.c.b16 %v402, %v400
    %v551 = vpack.c.b16 %v403, %v401
    %v552 = vpack.c.b16 %v406, %v404
    %v553 = vpack.c.b16 %v407, %v405
    %v554 = vpack.c.b16 %v410, %v408
    %v555 = vpack.c.b16 %v411, %v409
    %v556 = vpack.c.b16 %v414, %v412
    %v557 = vpack.c.b16 %v415, %v413
    %v558 = vpack.c.b16 %v418, %v416
    %v559 = vpack.c.b16 %v419, %v417
    %v560 = vpack.c.b16 %v422, %v420
    %v561 = vpack.c.b16 %v423, %v421
    %v562 = vpack.c.b16 %v426, %v424
    %v563 = vpack.c.b16 %v427, %v425
    %v564 = vpack.c.b16 %v430, %v428
    %v565 = vpack.c.b16 %v431, %v429
    %v566 = vpack.c.b16 %v434, %v432
    %v567 = vpack.c.b16 %v435, %v433
    %v568 = vpack.c.b16 %v438, %v436
    %v569 = vpack.c.b16 %v439, %v437
    %v570 = vpack.c.b16 %v442, %v440
    %v571 = vpack.c.b16 %v443, %v441
    %v572 = vpack.c.b16 %v446, %v444
    %v573 = vpack.c.b16 %v447, %v445
    %v574 = vpack.c.b16 %v450, %v448
    %v575 = vpack.c.b16 %v451, %v449
    %v576 = vpack.c.b16 %v454, %v452
    %v577 = vpack.c.b16 %v455, %v453
    %v578 = vpack.c.b16 %v458, %v456
    %v579 = vpack.c.b16 %v459, %v457
    %v580 = vpack.c.b16 %v462, %v460
    %v581 = vpack.c.b16 %v463, %v461
    %v582 = vpack.c.b16 %v466, %v464
    %v583 = vpack.c.b16 %v467, %v465
    %v584 = vpack.c.b16 %v470, %v468
    %v585 = vpack.c.b16 %v471, %v469
    %v586 = vpack.c.b16 %v474, %v472
    %v587 = vpack.c.b16 %v475, %v473
    %v588 = vpack.c.b16 %v478, %v476
    %v589 = vpack.c.b16 %v479, %v477
    %v590 = vpack.c.b16 %v482, %v480
    %v591 = vpack.c.b16 %v483, %v481
    %v592 = vpack.c.b16 %v486, %v484
    %v593 = vpack.c.b16 %v487, %v485
    %v594 = vpack.c.b16 %v490, %v488
    %v595 = vpack.c.b16 %v491, %v489
    %v596 = vpack.c.b16 %v494, %v492
    %v597 = vpack.c.b16 %v495, %v493
    %v598 = vpack.c.b16 %v498, %v496
    %v599 = vpack.c.b16 %v499, %v497
    %v600 = vpack.c.b16 %v502, %v500
    %v601 = vpack.c.b16 %v503, %v501
    %v602 = vpack.c.b16 %v506, %v504
    %v603 = vpack.c.b16 %v507, %v505
    %v604 = vpack.c.b16 %v510, %v508
    %v605 = vpack.c.b16 %v511, %v509
    %v606 = vpack.c.b16 %v514, %v512
    %v607 = vpack.c.b16 %v515, %v513
    %v608 = vpack.c.b16 %v518, %v516
    %v609 = vpack.c.b16 %v519, %v517
    %v610 = vpack.c.b16 %v522, %v520
    %v611 = vpack.c.b16 %v523, %v521
    %v612 = vpack.c.b16 %v526, %v524
    %v613 = vpack.c.b16 %v527, %v525
    %v614 = vpack.c.b16 %v530, %v528
    %v615 = vpack.c.b16 %v531, %v529
    %v616 = vpack.c.b16 %v534, %v532
    %v617 = vpack.c.b16 %v535, %v533
    %v618 = vpack.c.b16 %v538, %v536
    %v619 = vpack.c.b16 %v539, %v537
    %700 = vmatprep.subr.bf16.mxu0 %v541
    %701 = vmatpush1.bf16.msra.mxu0 %v540
    %702 = vmatprep.subr.bf16.mxu0 %v543
    %703 = vmatpush1.bf16.msra.mxu0 %v542
    %704 = vmatprep.subr.bf16.mxu0 %v545
    %705 = vmatpush1.bf16.msra.mxu0 %v544
    %706 = vmatprep.subr.bf16.mxu0 %v547
    %707 = vmatpush1.bf16.msra.mxu0 %v546
    %708 = vmatprep.subr.bf16.mxu0 %v549
    %709 = vmatpush1.bf16.msra.mxu0 %v548
    %710 = vmatprep.subr.bf16.mxu0 %v551
    %711 = vmatpush1.bf16.msra.mxu0 %v550
    %712 = vmatprep.subr.bf16.mxu0 %v553
    %713 = vmatpush1.bf16.msra.mxu0 %v552
    %714 = vmatprep.subr.bf16.mxu0 %v555
    %715 = vmatpush1.bf16.msra.mxu0 %v554
    %716 = vmatprep.subr.bf16.mxu0 %v557
    %717 = vmatpush1.bf16.msra.mxu0 %v556
    %718 = vmatprep.subr.bf16.mxu0 %v559
    %719 = vmatpush1.bf16.msra.mxu0 %v558
    %720 = vmatprep.subr.bf16.mxu0 %v561
    %721 = vmatpush1.bf16.msra.mxu0 %v560
    %722 = vmatprep.subr.bf16.mxu0 %v563
    %723 = vmatpush1.bf16.msra.mxu0 %v562
    %724 = vmatprep.subr.bf16.mxu0 %v565
    %725 = vmatpush1.bf16.msra.mxu0 %v564
    %726 = vmatprep.subr.bf16.mxu0 %v567
    %727 = vmatpush1.bf16.msra.mxu0 %v566
    %728 = vmatprep.subr.bf16.mxu0 %v569
    %729 = vmatpush1.bf16.msra.mxu0 %v568
    %730 = vmatprep.subr.bf16.mxu0 %v571
    %731 = vmatpush1.bf16.msra.mxu0 %v570
    %732 = vmatprep.mubr.bf16.mxu0 %v281
    %733 = vmatmul.mubr.bf16.gmra.mrb[0].mxu0 %v280
    %v734 = vpop.f32.mrb[0].mxu0
    %v735 = vadd.f32 0.0, %v734
    %v736 = vpop.f32.mrb[0].mxu0
    %v737 = vadd.f32 0.0, %v736
    %v738 = vpop.f32.mrb[0].mxu0
    %v739 = vadd.f32 0.0, %v738
    %v740 = vpop.f32.mrb[0].mxu0
    %v741 = vadd.f32 0.0, %v740
    %742 = vmatprep.mubr.bf16.mxu0 %v286
    %743 = vmatmul.mubr.bf16.gmra.mrb[0].mxu0 %v285
    %v744 = vpop.f32.mrb[0].mxu0
    %v745 = vadd.f32 0.0, %v744
    %v746 = vpop.f32.mrb[0].mxu0
    %v747 = vadd.f32 0.0, %v746
    %v748 = vpop.f32.mrb[0].mxu0
    %v749 = vadd.f32 0.0, %v748
    %v750 = vpop.f32.mrb[0].mxu0
    %v751 = vadd.f32 0.0, %v750
    %752 = vdwg.mxu0
    %753 = vmatprep.subr.bf16.mxu0 %v573
    %754 = vmatpush1.bf16.msra.mxu0 %v572
    %755 = vmatprep.subr.bf16.mxu0 %v575
    %756 = vmatpush1.bf16.msra.mxu0 %v574
    %757 = vmatprep.subr.bf16.mxu0 %v577
    %758 = vmatpush1.bf16.msra.mxu0 %v576
    %759 = vmatprep.subr.bf16.mxu0 %v579
    %760 = vmatpush1.bf16.msra.mxu0 %v578
    %761 = vmatprep.subr.bf16.mxu0 %v581
    %762 = vmatpush1.bf16.msra.mxu0 %v580
    %763 = vmatprep.subr.bf16.mxu0 %v583
    %764 = vmatpush1.bf16.msra.mxu0 %v582
    %765 = vmatprep.subr.bf16.mxu0 %v585
    %766 = vmatpush1.bf16.msra.mxu0 %v584
    %767 = vmatprep.subr.bf16.mxu0 %v587
    %768 = vmatpush1.bf16.msra.mxu0 %v586
    %769 = vmatprep.subr.bf16.mxu0 %v589
    %770 = vmatpush1.bf16.msra.mxu0 %v588
    %771 = vmatprep.subr.bf16.mxu0 %v591
    %772 = vmatpush1.bf16.msra.mxu0 %v590
    %773 = vmatprep.subr.bf16.mxu0 %v593
    %774 = vmatpush1.bf16.msra.mxu0 %v592
    %775 = vmatprep.subr.bf16.mxu0 %v595
    %776 = vmatpush1.bf16.msra.mxu0 %v594
    %777 = vmatprep.subr.bf16.mxu0 %v597
    %778 = vmatpush1.bf16.msra.mxu0 %v596
    %779 = vmatprep.subr.bf16.mxu0 %v599
    %780 = vmatpush1.bf16.msra.mxu0 %v598
    %781 = vmatprep.subr.bf16.mxu0 %v601
    %782 = vmatpush1.bf16.msra.mxu0 %v600
    %783 = vmatprep.subr.bf16.mxu0 %v603
    %784 = vmatpush1.bf16.msra.mxu0 %v602
    %785 = vmatprep.mubr.bf16.mxu0 %v283
    %786 = vmatmul.mubr.bf16.gmra.mrb[0].mxu0 %v282
    %v787 = vpop.f32.mrb[0].mxu0
    %v788 = vadd.f32 %v735, %v787
    %v789 = vpop.f32.mrb[0].mxu0
    %v790 = vadd.f32 %v737, %v789
    %v791 = vpop.f32.mrb[0].mxu0
    %v792 = vadd.f32 %v739, %v791
    %v793 = vpop.f32.mrb[0].mxu0
    %v794 = vadd.f32 %v741, %v793
    %795 = vmatprep.mubr.bf16.mxu0 %v288
    %796 = vmatmul.mubr.bf16.gmra.mrb[0].mxu0 %v287
    %v797 = vpop.f32.mrb[0].mxu0
    %v798 = vadd.f32 %v745, %v797
    %v799 = vpop.f32.mrb[0].mxu0
    %v800 = vadd.f32 %v747, %v799
    %v801 = vpop.f32.mrb[0].mxu0
    %v802 = vadd.f32 %v749, %v801
    %v803 = vpop.f32.mrb[0].mxu0
    %v804 = vadd.f32 %v751, %v803
    %805 = vdwg.mxu0
    %806 = vmatprep.subr.bf16.mxu0 %v605
    %807 = vmatpush1.bf16.msra.mxu0 %v604
    %808 = vmatprep.subr.bf16.mxu0 %v607
    %809 = vmatpush1.bf16.msra.mxu0 %v606
    %810 = vmatprep.subr.bf16.mxu0 %v609
    %811 = vmatpush1.bf16.msra.mxu0 %v608
    %812 = vmatprep.subr.bf16.mxu0 %v611
    %813 = vmatpush1.bf16.msra.mxu0 %v610
    %814 = vmatprep.subr.bf16.mxu0 %v613
    %815 = vmatpush1.bf16.msra.mxu0 %v612
    %816 = vmatprep.subr.bf16.mxu0 %v615
    %817 = vmatpush1.bf16.msra.mxu0 %v614
    %818 = vmatprep.subr.bf16.mxu0 %v617
    %819 = vmatpush1.bf16.msra.mxu0 %v616
    %820 = vmatprep.subr.bf16.mxu0 %v619
    %821 = vmatpush1.bf16.msra.mxu0 %v618
    %822 = vmatprep.subr.bf16.mxu0 0
    %823 = vmatpush1.bf16.msra.mxu0 0
    %824 = vmatprep.subr.bf16.mxu0 0
    %825 = vmatpush1.bf16.msra.mxu0 0
    %826 = vmatprep.subr.bf16.mxu0 0
    %827 = vmatpush1.bf16.msra.mxu0 0
    %828 = vmatprep.subr.bf16.mxu0 0
    %829 = vmatpush1.bf16.msra.mxu0 0
    %830 = vmatprep.subr.bf16.mxu0 0
    %831 = vmatpush1.bf16.msra.mxu0 0
    %832 = vmatprep.subr.bf16.mxu0 0
    %833 = vmatpush1.bf16.msra.mxu0 0
    %834 = vmatprep.subr.bf16.mxu0 0
    %835 = vmatpush1.bf16.msra.mxu0 0
    %836 = vmatprep.subr.bf16.mxu0 0
    %837 = vmatpush1.bf16.msra.mxu0 0
    %838 = vmatprep.mubr.bf16.mxu0 0
    %839 = vmatmul.mubr.bf16.gmra.mrb[0].mxu0 %v284
    %v840 = vpop.f32.mrb[0].mxu0
    %v841 = vadd.f32 %v788, %v840
    %v842 = vpop.f32.mrb[0].mxu0
    %v843 = vadd.f32 %v790, %v842
    %v844 = vpop.f32.mrb[0].mxu0
    %v845 = vadd.f32 %v792, %v844
    %v846 = vpop.f32.mrb[0].mxu0
    %v847 = vadd.f32 %v794, %v846
    %848 = vmatprep.mubr.bf16.mxu0 0
    %849 = vmatmul.mubr.bf16.gmra.mrb[0].mxu0 %v289
    %v850 = vpop.f32.mrb[0].mxu0
    %v851 = vadd.f32 %v798, %v850
    %v852 = vpop.f32.mrb[0].mxu0
    %v853 = vadd.f32 %v800, %v852
    %v854 = vpop.f32.mrb[0].mxu0
    %v855 = vadd.f32 %v802, %v854
    %v856 = vpop.f32.mrb[0].mxu0
    %v857 = vadd.f32 %v804, %v856
    %858 = vdwg.mxu0
    %v859 = vadd.f32 %v841, %v845
    %v860 = vadd.f32 %v859, %v851
    %v861 = vadd.f32 %v860, %v855
    %v862 = vrot.slane %v861, 4
    %v863 = vadd.f32 %v861, %v862
    %v864 = vrot.slane %v863, 2
    %v865 = vadd.f32 %v863, %v864
    %v866 = vrot.slane %v865, 1
    %v867 = vadd.f32 %v865, %v866
    %v868 = vadd.f32 %v843, %v847
    %v869 = vadd.f32 %v868, %v853
    %v870 = vadd.f32 %v869, %v857
    %v871 = vrot.slane %v870, 4
    %v872 = vadd.f32 %v870, %v871
    %v873 = vrot.slane %v872, 2
    %v874 = vadd.f32 %v872, %v873
    %v875 = vrot.slane %v874, 1
    %v876 = vadd.f32 %v874, %v875
    %v877 = vld [vmem:[%s4] sm:$0xff]
    %v878 = vld [vmem:[%s4 + $0x8] sm:$0xff]
    %v879 = vld [vmem:[%s4 + $0x10] sm:$0xff]
    %v880 = vld [vmem:[%s4 + $0x18] sm:$0xff]
    %v881 = vld [vmem:[%s4 + $0x20] sm:$0xff]
    %v882 = vld [vmem:[%s4 + $0x28] sm:$0xff]
    %v883 = vld [vmem:[%s4 + $0x30] sm:$0xff]
    %v884 = vld [vmem:[%s4 + $0x38] sm:$0xff]
    %v885 = vld [vmem:[%s4 + $0x40] sm:$0xff]
    %v886 = vld [vmem:[%s4 + $0x48] sm:$0xff]
    %v887 = vld [vmem:[%s4 + $0x50] sm:$0xff]
    %v888 = vld [vmem:[%s4 + $0x58] sm:$0xff]
    %v889 = vld [vmem:[%s4 + $0x60] sm:$0xff]
    %v890 = vld [vmem:[%s4 + $0x68] sm:$0xff]
    %v891 = vld [vmem:[%s4 + $0x70] sm:$0xff]
    %v892 = vld [vmem:[%s4 + $0x78] sm:$0xff]
    %v893 = vld [vmem:[%s4 + $0x80] sm:$0xff]
    %v894 = vld [vmem:[%s4 + $0x88] sm:$0xff]
    %v895 = vld [vmem:[%s4 + $0x90] sm:$0xff]
    %v896 = vld [vmem:[%s4 + $0x98] sm:$0xff]
    %v897 = vld [vmem:[%s4 + $0xa0] sm:$0xff]
    %v898 = vld [vmem:[%s4 + $0xa8] sm:$0xff]
    %v899 = vld [vmem:[%s4 + $0xb0] sm:$0xff]
    %v900 = vld [vmem:[%s4 + $0xb8] sm:$0xff]
    %v901 = vld [vmem:[%s4 + $0xc0] sm:$0xff]
    %v902 = vld [vmem:[%s4 + $0xc8] sm:$0xff]
    %v903 = vld [vmem:[%s4 + $0xd0] sm:$0xff]
    %v904 = vld [vmem:[%s4 + $0xd8] sm:$0xff]
    %v905 = vld [vmem:[%s4 + $0xe0] sm:$0xff]
    %v906 = vld [vmem:[%s4 + $0xe8] sm:$0xff]
    %v907 = vld [vmem:[%s4 + $0xf0] sm:$0xff]
    %v908 = vld [vmem:[%s4 + $0xf8] sm:$0xff]
    %909 = vmatprep.subr.mxu0 0.0
    %910 = vmatpush1.msra.mxu0 %v877
    %911 = vmatprep.subr.mxu0 0.0
    %912 = vmatpush1.msra.mxu0 %v878
    %913 = vmatprep.subr.mxu0 0.0
    %914 = vmatpush1.msra.mxu0 %v879
    %915 = vmatprep.subr.mxu0 0.0
    %916 = vmatpush1.msra.mxu0 %v880
    %917 = vmatprep.subr.mxu0 0.0
    %918 = vmatpush1.msra.mxu0 %v881
    %919 = vmatprep.subr.mxu0 0.0
    %920 = vmatpush1.msra.mxu0 %v882
    %921 = vmatprep.subr.mxu0 0.0
    %922 = vmatpush1.msra.mxu0 %v883
    %923 = vmatprep.subr.mxu0 0.0
    %924 = vmatpush1.msra.mxu0 %v884
    %925 = vmatprep.subr.mxu0 0.0
    %926 = vmatpush1.msra.mxu0 %v885
    %927 = vmatprep.subr.mxu0 0.0
    %928 = vmatpush1.msra.mxu0 %v886
    %929 = vmatprep.subr.mxu0 0.0
    %930 = vmatpush1.msra.mxu0 %v887
    %931 = vmatprep.subr.mxu0 0.0
    %932 = vmatpush1.msra.mxu0 %v888
    %933 = vmatprep.subr.mxu0 0.0
    %934 = vmatpush1.msra.mxu0 %v889
    %935 = vmatprep.subr.mxu0 0.0
    %936 = vmatpush1.msra.mxu0 %v890
    %937 = vmatprep.subr.mxu0 0.0
    %938 = vmatpush1.msra.mxu0 %v891
    %939 = vmatprep.subr.mxu0 0.0
    %940 = vmatpush1.msra.mxu0 %v892
    %941 = vmatprep.subr.mxu0 0.0
    %942 = vmatpush1.msra.mxu0 %v893
    %943 = vmatprep.subr.mxu0 0.0
    %944 = vmatpush1.msra.mxu0 %v894
    %945 = vmatprep.subr.mxu0 0.0
    %946 = vmatpush1.msra.mxu0 %v895
    %947 = vmatprep.subr.mxu0 0.0
    %948 = vmatpush1.msra.mxu0 %v896
    %949 = vmatprep.subr.mxu0 0.0
    %950 = vmatpush1.msra.mxu0 %v897
    %951 = vmatprep.subr.mxu0 0.0
    %952 = vmatpush1.msra.mxu0 %v898
    %953 = vmatprep.subr.mxu0 0.0
    %954 = vmatpush1.msra.mxu0 %v899
    %955 = vmatprep.subr.mxu0 0.0
    %956 = vmatpush1.msra.mxu0 %v900
    %957 = vmatprep.subr.mxu0 0.0
    %958 = vmatpush1.msra.mxu0 %v901
    %959 = vmatprep.subr.mxu0 0.0
    %960 = vmatpush1.msra.mxu0 %v902
    %961 = vmatprep.subr.mxu0 0.0
    %962 = vmatpush1.msra.mxu0 %v903
    %963 = vmatprep.subr.mxu0 0.0
    %964 = vmatpush1.msra.mxu0 %v904
    %965 = vmatprep.subr.mxu0 0.0
    %966 = vmatpush1.msra.mxu0 %v905
    %967 = vmatprep.subr.mxu0 0.0
    %968 = vmatpush1.msra.mxu0 %v906
    %969 = vmatprep.subr.mxu0 0.0
    %970 = vmatpush1.msra.mxu0 %v907
    %971 = vmatprep.subr.mxu0 0.0
    %972 = vmatpush1.msra.mxu0 %v908
    %973 = vmatprep.mubr.f32.mxu0 %v876
    %974 = vmatmul.mubr.f32.gmra.mrb[0].mxu0 %v867
    %v975 = vpop.f32.mrb[0].mxu0
    %v976 = vadd.f32 0.0, %v975
    %v977 = vpop.f32.mrb[0].mxu0
    %978 = vdwg.mxu0
    %v979 = vmul.f32 %v976, 0.001953125
    %v980 = vld [vmem:[#allocation4] sm:$0xff]
    %v981 = vld [vmem:[#allocation4 + $0x8] sm:$0xff]
    %v982 = vld [vmem:[#allocation4 + $0x10] sm:$0xff]
    %v983 = vld [vmem:[#allocation4 + $0x18] sm:$0xff]
    %v984 = vld [vmem:[#allocation4 + $0x20] sm:$0xff]
    %v985 = vld [vmem:[#allocation4 + $0x28] sm:$0xff]
    %v986 = vld [vmem:[#allocation4 + $0x30] sm:$0xff]
    %v987 = vld [vmem:[#allocation4 + $0x38] sm:$0xff]
    %v988 = vld [vmem:[#allocation4 + $0x40] sm:$0xff]
    %v989 = vld [vmem:[#allocation4 + $0x48] sm:$0xff]
    %v990 = vld [vmem:[#allocation4 + $0x50] sm:$0xff]
    %v991 = vld [vmem:[#allocation4 + $0x58] sm:$0xff]
    %v992 = vld [vmem:[#allocation4 + $0x60] sm:$0xff]
    %v993 = vld [vmem:[#allocation4 + $0x68] sm:$0xff]
    %v994 = vld [vmem:[#allocation4 + $0x70] sm:$0xff]
    %v995 = vld [vmem:[#allocation4 + $0x78] sm:$0xff]
    %v996 = vld [vmem:[#allocation4 + $0x80] sm:$0xff]
    %v997 = vld [vmem:[#allocation4 + $0x88] sm:$0xff]
    %v998 = vld [vmem:[#allocation4 + $0x90] sm:$0xff]
    %v999 = vld [vmem:[#allocation4 + $0x98] sm:$0xff]
    %v1000 = vld [vmem:[#allocation4 + $0xa0] sm:$0xff]
    %v1001 = vld [vmem:[#allocation4 + $0xa8] sm:$0xff]
    %v1002 = vld [vmem:[#allocation4 + $0xb0] sm:$0xff]
    %v1003 = vld [vmem:[#allocation4 + $0xb8] sm:$0xff]
    %v1004 = vld [vmem:[#allocation4 + $0xc0] sm:$0xff]
    %v1005 = vld [vmem:[#allocation4 + $0xc8] sm:$0xff]
    %v1006 = vld [vmem:[#allocation4 + $0xd0] sm:$0xff]
    %v1007 = vld [vmem:[#allocation4 + $0xd8] sm:$0xff]
    %v1008 = vld [vmem:[#allocation4 + $0xe0] sm:$0xff]
    %v1009 = vld [vmem:[#allocation4 + $0xe8] sm:$0xff]
    %v1010 = vld [vmem:[#allocation4 + $0xf0] sm:$0xff]
    %v1011 = vld [vmem:[#allocation4 + $0xf8] sm:$0xff]
    %1012 = vmatprep.subr.mxu0 %v981
    %1013 = vmatpush1.msra.mxu0 %v980
    %1014 = vmatprep.subr.mxu0 %v983
    %1015 = vmatpush1.msra.mxu0 %v982
    %1016 = vmatprep.subr.mxu0 %v985
    %1017 = vmatpush1.msra.mxu0 %v984
    %1018 = vmatprep.subr.mxu0 %v987
    %1019 = vmatpush1.msra.mxu0 %v986
    %1020 = vmatprep.subr.mxu0 %v989
    %1021 = vmatpush1.msra.mxu0 %v988
    %1022 = vmatprep.subr.mxu0 %v991
    %1023 = vmatpush1.msra.mxu0 %v990
    %1024 = vmatprep.subr.mxu0 %v993
    %1025 = vmatpush1.msra.mxu0 %v992
    %1026 = vmatprep.subr.mxu0 %v995
    %1027 = vmatpush1.msra.mxu0 %v994
    %1028 = vmatprep.subr.mxu0 %v997
    %1029 = vmatpush1.msra.mxu0 %v996
    %1030 = vmatprep.subr.mxu0 %v999
    %1031 = vmatpush1.msra.mxu0 %v998
    %1032 = vmatprep.subr.mxu0 %v1001
    %1033 = vmatpush1.msra.mxu0 %v1000
    %1034 = vmatprep.subr.mxu0 %v1003
    %1035 = vmatpush1.msra.mxu0 %v1002
    %1036 = vmatprep.subr.mxu0 %v1005
    %1037 = vmatpush1.msra.mxu0 %v1004
    %1038 = vmatprep.subr.mxu0 %v1007
    %1039 = vmatpush1.msra.mxu0 %v1006
    %1040 = vmatprep.subr.mxu0 %v1009
    %1041 = vmatpush1.msra.mxu0 %v1008
    %1042 = vmatprep.subr.mxu0 %v1011
    %1043 = vmatpush1.msra.mxu0 %v1010
    %1044 = vmatprep.subr.mxu0 0.0
    %1045 = vmatpush1.msra.mxu0 0.0
    %1046 = vmatprep.subr.mxu0 0.0
    %1047 = vmatpush1.msra.mxu0 0.0
    %1048 = vmatprep.subr.mxu0 0.0
    %1049 = vmatpush1.msra.mxu0 0.0
    %1050 = vmatprep.subr.mxu0 0.0
    %1051 = vmatpush1.msra.mxu0 0.0
    %1052 = vmatprep.subr.mxu0 0.0
    %1053 = vmatpush1.msra.mxu0 0.0
    %1054 = vmatprep.subr.mxu0 0.0
    %1055 = vmatpush1.msra.mxu0 0.0
    %1056 = vmatprep.subr.mxu0 0.0
    %1057 = vmatpush1.msra.mxu0 0.0
    %1058 = vmatprep.subr.mxu0 0.0
    %1059 = vmatpush1.msra.mxu0 0.0
    %1060 = vmatprep.subr.mxu0 0.0
    %1061 = vmatpush1.msra.mxu0 0.0
    %1062 = vmatprep.subr.mxu0 0.0
    %1063 = vmatpush1.msra.mxu0 0.0
    %1064 = vmatprep.subr.mxu0 0.0
    %1065 = vmatpush1.msra.mxu0 0.0
    %1066 = vmatprep.subr.mxu0 0.0
    %1067 = vmatpush1.msra.mxu0 0.0
    %1068 = vmatprep.subr.mxu0 0.0
    %1069 = vmatpush1.msra.mxu0 0.0
    %1070 = vmatprep.subr.mxu0 0.0
    %1071 = vmatpush1.msra.mxu0 0.0
    %1072 = vmatprep.subr.mxu0 0.0
    %1073 = vmatpush1.msra.mxu0 0.0
    %1074 = vmatprep.subr.mxu0 0.0
    %1075 = vmatpush1.msra.mxu0 0.0
    %1076 = vmatprep.mubr.f32.mxu0 0.0
    %1077 = vmatmul.mubr.f32.gmra.mrb[0].mxu0 %v979
    %v1078 = vpop.f32.mrb[0].mxu0
    %v1079 = vadd.f32 0.0, %v1078
    %v1080 = vpop.f32.mrb[0].mxu0
    %v1081 = vadd.f32 0.0, %v1080
    %1082 = vdwg.mxu0
    %v1083 = vlaneseq
    %v1084 = vshrl.u32 %v1083, 7
    %v1085 = vsub.s32 0, %v1084
    %v1086 = vrot.slane %v1079, %v1085
    %v1087 = vlaneseq
    %v1088 = vshrl.u32 %v1087, 7
    %v1089 = vsub.s32 0, %v1088
    %v1090 = vrot.slane %v1081, %v1089
    %v1091 = vsub.f32 %v841, %v1086
    %v1092 = vsub.f32 %v843, %v1090
    %v1093 = vsub.f32 %v845, %v1086
    %v1094 = vsub.f32 %v847, %v1090
    %v1095 = vsub.f32 %v851, %v1086
    %v1096 = vsub.f32 %v853, %v1090
    %v1097 = vsub.f32 %v855, %v1086
    %v1098 = vsub.f32 %v857, %v1090
    %v1099 = vmul.f32 %v1091, %v1091
    %v1100 = vmul.f32 %v1092, %v1092
    %v1101 = vmul.f32 %v1093, %v1093
    %v1102 = vmul.f32 %v1094, %v1094
    %v1103 = vmul.f32 %v1095, %v1095
    %v1104 = vmul.f32 %v1096, %v1096
    %v1105 = vmul.f32 %v1097, %v1097
    %v1106 = vmul.f32 %v1098, %v1098
    %v1107 = vadd.f32 %v1099, %v1101
    %v1108 = vadd.f32 %v1107, %v1103
    %v1109 = vadd.f32 %v1108, %v1105
    %v1110 = vrot.slane %v1109, 4
    %v1111 = vadd.f32 %v1109, %v1110
    %v1112 = vrot.slane %v1111, 2
    %v1113 = vadd.f32 %v1111, %v1112
    %v1114 = vrot.slane %v1113, 1
    %v1115 = vadd.f32 %v1113, %v1114
    %v1116 = vadd.f32 %v1100, %v1102
    %v1117 = vadd.f32 %v1116, %v1104
    %v1118 = vadd.f32 %v1117, %v1106
    %v1119 = vrot.slane %v1118, 4
    %v1120 = vadd.f32 %v1118, %v1119
    %v1121 = vrot.slane %v1120, 2
    %v1122 = vadd.f32 %v1120, %v1121
    %v1123 = vrot.slane %v1122, 1
    %v1124 = vadd.f32 %v1122, %v1123
    %1125 = vmatprep.subr.mxu0 0.0
    %1126 = vmatpush1.msra.mxu0 %v877
    %1127 = vmatprep.subr.mxu0 0.0
    %1128 = vmatpush1.msra.mxu0 %v878
    %1129 = vmatprep.subr.mxu0 0.0
    %1130 = vmatpush1.msra.mxu0 %v879
    %1131 = vmatprep.subr.mxu0 0.0
    %1132 = vmatpush1.msra.mxu0 %v880
    %1133 = vmatprep.subr.mxu0 0.0
    %1134 = vmatpush1.msra.mxu0 %v881
    %1135 = vmatprep.subr.mxu0 0.0
    %1136 = vmatpush1.msra.mxu0 %v882
    %1137 = vmatprep.subr.mxu0 0.0
    %1138 = vmatpush1.msra.mxu0 %v883
    %1139 = vmatprep.subr.mxu0 0.0
    %1140 = vmatpush1.msra.mxu0 %v884
    %1141 = vmatprep.subr.mxu0 0.0
    %1142 = vmatpush1.msra.mxu0 %v885
    %1143 = vmatprep.subr.mxu0 0.0
    %1144 = vmatpush1.msra.mxu0 %v886
    %1145 = vmatprep.subr.mxu0 0.0
    %1146 = vmatpush1.msra.mxu0 %v887
    %1147 = vmatprep.subr.mxu0 0.0
    %1148 = vmatpush1.msra.mxu0 %v888
    %1149 = vmatprep.subr.mxu0 0.0
    %1150 = vmatpush1.msra.mxu0 %v889
    %1151 = vmatprep.subr.mxu0 0.0
    %1152 = vmatpush1.msra.mxu0 %v890
    %1153 = vmatprep.subr.mxu0 0.0
    %1154 = vmatpush1.msra.mxu0 %v891
    %1155 = vmatprep.subr.mxu0 0.0
    %1156 = vmatpush1.msra.mxu0 %v892
    %1157 = vmatprep.subr.mxu0 0.0
    %1158 = vmatpush1.msra.mxu0 %v893
    %1159 = vmatprep.subr.mxu0 0.0
    %1160 = vmatpush1.msra.mxu0 %v894
    %1161 = vmatprep.subr.mxu0 0.0
    %1162 = vmatpush1.msra.mxu0 %v895
    %1163 = vmatprep.subr.mxu0 0.0
    %1164 = vmatpush1.msra.mxu0 %v896
    %1165 = vmatprep.subr.mxu0 0.0
    %1166 = vmatpush1.msra.mxu0 %v897
    %1167 = vmatprep.subr.mxu0 0.0
    %1168 = vmatpush1.msra.mxu0 %v898
    %1169 = vmatprep.subr.mxu0 0.0
    %1170 = vmatpush1.msra.mxu0 %v899
    %1171 = vmatprep.subr.mxu0 0.0
    %1172 = vmatpush1.msra.mxu0 %v900
    %1173 = vmatprep.subr.mxu0 0.0
    %1174 = vmatpush1.msra.mxu0 %v901
    %1175 = vmatprep.subr.mxu0 0.0
    %1176 = vmatpush1.msra.mxu0 %v902
    %1177 = vmatprep.subr.mxu0 0.0
    %1178 = vmatpush1.msra.mxu0 %v903
    %1179 = vmatprep.subr.mxu0 0.0
    %1180 = vmatpush1.msra.mxu0 %v904
    %1181 = vmatprep.subr.mxu0 0.0
    %1182 = vmatpush1.msra.mxu0 %v905
    %1183 = vmatprep.subr.mxu0 0.0
    %1184 = vmatpush1.msra.mxu0 %v906
    %1185 = vmatprep.subr.mxu0 0.0
    %1186 = vmatpush1.msra.mxu0 %v907
    %1187 = vmatprep.subr.mxu0 0.0
    %1188 = vmatpush1.msra.mxu0 %v908
    %1189 = vmatprep.mubr.f32.mxu0 %v1124
    %1190 = vmatmul.mubr.f32.gmra.mrb[0].mxu0 %v1115
    %v1191 = vpop.f32.mrb[0].mxu0
    %v1192 = vadd.f32 0.0, %v1191
    %v1193 = vpop.f32.mrb[0].mxu0
    %1194 = vdwg.mxu0
    %v1195 = vmul.f32 %v1192, 0.001953125
    %1196 = vmatprep.subr.mxu0 %v981
    %1197 = vmatpush1.msra.mxu0 %v980
    %1198 = vmatprep.subr.mxu0 %v983
    %1199 = vmatpush1.msra.mxu0 %v982
    %1200 = vmatprep.subr.mxu0 %v985
    %1201 = vmatpush1.msra.mxu0 %v984
    %1202 = vmatprep.subr.mxu0 %v987
    %1203 = vmatpush1.msra.mxu0 %v986
    %1204 = vmatprep.subr.mxu0 %v989
    %1205 = vmatpush1.msra.mxu0 %v988
    %1206 = vmatprep.subr.mxu0 %v991
    %1207 = vmatpush1.msra.mxu0 %v990
    %1208 = vmatprep.subr.mxu0 %v993
    %1209 = vmatpush1.msra.mxu0 %v992
    %1210 = vmatprep.subr.mxu0 %v995
    %1211 = vmatpush1.msra.mxu0 %v994
    %1212 = vmatprep.subr.mxu0 %v997
    %1213 = vmatpush1.msra.mxu0 %v996
    %1214 = vmatprep.subr.mxu0 %v999
    %1215 = vmatpush1.msra.mxu0 %v998
    %1216 = vmatprep.subr.mxu0 %v1001
    %1217 = vmatpush1.msra.mxu0 %v1000
    %1218 = vmatprep.subr.mxu0 %v1003
    %1219 = vmatpush1.msra.mxu0 %v1002
    %1220 = vmatprep.subr.mxu0 %v1005
    %1221 = vmatpush1.msra.mxu0 %v1004
    %1222 = vmatprep.subr.mxu0 %v1007
    %1223 = vmatpush1.msra.mxu0 %v1006
    %1224 = vmatprep.subr.mxu0 %v1009
    %1225 = vmatpush1.msra.mxu0 %v1008
    %1226 = vmatprep.subr.mxu0 %v1011
    %1227 = vmatpush1.msra.mxu0 %v1010
    %1228 = vmatprep.subr.mxu0 0.0
    %1229 = vmatpush1.msra.mxu0 0.0
    %1230 = vmatprep.subr.mxu0 0.0
    %1231 = vmatpush1.msra.mxu0 0.0
    %1232 = vmatprep.subr.mxu0 0.0
    %1233 = vmatpush1.msra.mxu0 0.0
    %1234 = vmatprep.subr.mxu0 0.0
    %1235 = vmatpush1.msra.mxu0 0.0
    %1236 = vmatprep.subr.mxu0 0.0
    %1237 = vmatpush1.msra.mxu0 0.0
    %1238 = vmatprep.subr.mxu0 0.0
    %1239 = vmatpush1.msra.mxu0 0.0
    %1240 = vmatprep.subr.mxu0 0.0
    %1241 = vmatpush1.msra.mxu0 0.0
    %1242 = vmatprep.subr.mxu0 0.0
    %1243 = vmatpush1.msra.mxu0 0.0
    %1244 = vmatprep.subr.mxu0 0.0
    %1245 = vmatpush1.msra.mxu0 0.0
    %1246 = vmatprep.subr.mxu0 0.0
    %1247 = vmatpush1.msra.mxu0 0.0
    %1248 = vmatprep.subr.mxu0 0.0
    %1249 = vmatpush1.msra.mxu0 0.0
    %1250 = vmatprep.subr.mxu0 0.0
    %1251 = vmatpush1.msra.mxu0 0.0
    %1252 = vmatprep.subr.mxu0 0.0
    %1253 = vmatpush1.msra.mxu0 0.0
    %1254 = vmatprep.subr.mxu0 0.0
    %1255 = vmatpush1.msra.mxu0 0.0
    %1256 = vmatprep.subr.mxu0 0.0
    %1257 = vmatpush1.msra.mxu0 0.0
    %1258 = vmatprep.subr.mxu0 0.0
    %1259 = vmatpush1.msra.mxu0 0.0
    %1260 = vmatprep.mubr.f32.mxu0 0.0
    %1261 = vmatmul.mubr.f32.gmra.mrb[0].mxu0 %v1195
    %v1262 = vpop.f32.mrb[0].mxu0
    %v1263 = vadd.f32 1e-05, %v1262
    %v1264 = vpop.f32.mrb[0].mxu0
    %v1265 = vadd.f32 1e-05, %v1264
    %1266 = vdwg.mxu0
    %v1267 = vrsqrt.pop %v1263
    %v1268 = vrsqrt.pop %v1265
    %v1269 = vlaneseq
    %v1270 = vshrl.u32 %v1269, 7
    %v1271 = vsub.s32 0, %v1270
    %v1272 = vrot.slane %v1267, %v1271
    %v1273 = vlaneseq
    %v1274 = vshrl.u32 %v1273, 7
    %v1275 = vsub.s32 0, %v1274
    %v1276 = vrot.slane %v1268, %v1275
    %v1277 = vmul.f32 %v1091, %v1272
    %v1278 = vmul.f32 %v1092, %v1276
    %v1279 = vmul.f32 %v1093, %v1272
    %v1280 = vmul.f32 %v1094, %v1276
    %v1281 = vmul.f32 %v1095, %v1272
    %v1282 = vmul.f32 %v1096, %v1276
    %v1283 = vmul.f32 %v1097, %v1272
    %v1284 = vmul.f32 %v1098, %v1276
    %v1285 = vld [vmem:[%s2] sm:$0x3]
    %v1287 = vlaneseq
    %v1288 = vshrl.u32 %v1287, 7
    %v1289 = vsub.s32 0, %v1288
    %v1290 = vrot.slane %v1285, %v1289
    %v1291 = vlaneseq
    %v1292 = vshrl.u32 %v1291, 7
    %v1293 = vsub.s32 1, %v1292
    %v1294 = vrot.slane %v1285, %v1293
    %v1297 = vmul.f32 %v1277, %v1290
    %v1298 = vmul.f32 %v1278, %v1294
    %v1299 = vmul.f32 %v1279, %v1290
    %v1300 = vmul.f32 %v1280, %v1294
    %v1301 = vmul.f32 %v1281, %v1290
    %v1302 = vmul.f32 %v1282, %v1294
    %v1303 = vmul.f32 %v1283, %v1290
    %v1304 = vmul.f32 %v1284, %v1294
    %v1305 = vld [vmem:[%s3] sm:$0x3]
    %v1307 = vlaneseq
    %v1308 = vshrl.u32 %v1307, 7
    %v1309 = vsub.s32 0, %v1308
    %v1310 = vrot.slane %v1305, %v1309
    %v1311 = vlaneseq
    %v1312 = vshrl.u32 %v1311, 7
    %v1313 = vsub.s32 1, %v1312
    %v1314 = vrot.slane %v1305, %v1313
    %v1317 = vadd.f32 %v1297, %v1310
    %v1318 = vadd.f32 %v1298, %v1314
    %v1319 = vadd.f32 %v1299, %v1310
    %v1320 = vadd.f32 %v1300, %v1314
    %v1321 = vadd.f32 %v1301, %v1310
    %v1322 = vadd.f32 %v1302, %v1314
    %v1323 = vadd.f32 %v1303, %v1310
    %v1324 = vadd.f32 %v1304, %v1314
    %v1325 = vmax.f32 %v1317, 0.0
    %v1326 = vmax.f32 %v1318, 0.0
    %v1327 = vmax.f32 %v1319, 0.0
    %v1328 = vmax.f32 %v1320, 0.0
    %v1329 = vmax.f32 %v1321, 0.0
    %v1330 = vmax.f32 %v1322, 0.0
    %v1331 = vmax.f32 %v1323, 0.0
    %v1332 = vmax.f32 %v1324, 0.0
    %1333 = vst [vmem:[#allocation2] sm:$0x3f] %v1325
    %1334 = vst [vmem:[#allocation2 + $0x8] sm:$0x3f] %v1326
    %v1337 = vrot.slane %v1329, 2
    %v1338 = vrot.slane %v1330, 2
    %1341 = vst [vmem:[#allocation2] sm:$0xc0] %v1337
    %1342 = vst [vmem:[#allocation2 + $0x8] sm:$0xc0] %v1338
    %1343 = vst [vmem:[#allocation2 + $0x10] sm:$0xf] %v1337
    %1344 = vst [vmem:[#allocation2 + $0x18] sm:$0xf] %v1338
    %v1345 = vld [vmem:[#allocation2] sm:$0xff]
    %v1346 = vld [vmem:[#allocation2 + $0x8] sm:$0xff]
    %v1347 = vld [vmem:[#allocation2 + $0x10] sm:$0xf]
    %v1348 = vld [vmem:[#allocation2 + $0x18] sm:$0xf]
    %v1349 = vpack.c.bf16 %v1347, %v1345
    %v1350 = vpack.c.bf16 %v1348, %v1346
    %v1351 = vld [vmem:[%s6] sm:$0xff]
    %v1352 = vld [vmem:[%s6 + $0x8] sm:$0xff]
    %v1353 = vld [vmem:[%s6 + $0x10] sm:$0xff]
    %v1354 = vld [vmem:[%s6 + $0x18] sm:$0xff]
    %v1355 = vld [vmem:[%s6 + $0x20] sm:$0xff]
    %v1356 = vld [vmem:[%s6 + $0x28] sm:$0xff]
    %v1357 = vld [vmem:[%s6 + $0x30] sm:$0xff]
    %v1358 = vld [vmem:[%s6 + $0x38] sm:$0xff]
    %v1359 = vld [vmem:[%s6 + $0x40] sm:$0xff]
    %v1360 = vld [vmem:[%s6 + $0x48] sm:$0xff]
    %v1361 = vld [vmem:[%s6 + $0x50] sm:$0xff]
    %v1362 = vld [vmem:[%s6 + $0x58] sm:$0xff]
    %v1363 = vld [vmem:[%s6 + $0x60] sm:$0xff]
    %v1364 = vld [vmem:[%s6 + $0x68] sm:$0xff]
    %v1365 = vld [vmem:[%s6 + $0x70] sm:$0xff]
    %v1366 = vld [vmem:[%s6 + $0x78] sm:$0xff]
    %v1367 = vld [vmem:[%s6 + $0x80] sm:$0xff]
    %v1368 = vld [vmem:[%s6 + $0x88] sm:$0xff]
    %v1369 = vld [vmem:[%s6 + $0x90] sm:$0xff]
    %v1370 = vld [vmem:[%s6 + $0x98] sm:$0xff]
    %v1371 = vld [vmem:[%s6 + $0xa0] sm:$0xff]
    %v1372 = vld [vmem:[%s6 + $0xa8] sm:$0xff]
    %v1373 = vld [vmem:[%s6 + $0xb0] sm:$0xff]
    %v1374 = vld [vmem:[%s6 + $0xb8] sm:$0xff]
    %v1375 = vld [vmem:[%s6 + $0xc0] sm:$0xff]
    %v1376 = vld [vmem:[%s6 + $0xc8] sm:$0xff]
    %v1377 = vld [vmem:[%s6 + $0xd0] sm:$0xff]
    %v1378 = vld [vmem:[%s6 + $0xd8] sm:$0xff]
    %v1379 = vld [vmem:[%s6 + $0xe0] sm:$0xff]
    %v1380 = vld [vmem:[%s6 + $0xe8] sm:$0xff]
    %v1381 = vld [vmem:[%s6 + $0xf0] sm:$0xff]
    %v1382 = vld [vmem:[%s6 + $0xf8] sm:$0xff]
    %1383 = vst [vmem:[#allocation2] sm:$0x3f] %v1327
    %1384 = vst [vmem:[#allocation2 + $0x8] sm:$0x3f] %v1328
    %v1387 = vrot.slane %v1331, 2
    %v1388 = vrot.slane %v1332, 2
    %1391 = vst [vmem:[#allocation2] sm:$0xc0] %v1387
    %1392 = vst [vmem:[#allocation2 + $0x8] sm:$0xc0] %v1388
    %1393 = vst [vmem:[#allocation2 + $0x10] sm:$0xf] %v1387
    %1394 = vst [vmem:[#allocation2 + $0x18] sm:$0xf] %v1388
    %v1395 = vld [vmem:[#allocation2] sm:$0xff]
    %v1396 = vld [vmem:[#allocation2 + $0x8] sm:$0xff]
    %v1397 = vld [vmem:[#allocation2 + $0x10] sm:$0xf]
    %v1398 = vld [vmem:[#allocation2 + $0x18] sm:$0xf]
    %v1399 = vpack.c.bf16 %v1397, %v1395
    %v1400 = vpack.c.bf16 %v1398, %v1396
    %s1401 = scalar_lea.vmem %s6, 256
    %v1402 = vld [vmem:[%s1401] sm:$0xff]
    %v1403 = vld [vmem:[%s1401 + $0x8] sm:$0xff]
    %v1404 = vld [vmem:[%s1401 + $0x10] sm:$0xff]
    %v1405 = vld [vmem:[%s1401 + $0x18] sm:$0xff]
    %v1406 = vld [vmem:[%s1401 + $0x20] sm:$0xff]
    %v1407 = vld [vmem:[%s1401 + $0x28] sm:$0xff]
    %v1408 = vld [vmem:[%s1401 + $0x30] sm:$0xff]
    %v1409 = vld [vmem:[%s1401 + $0x38] sm:$0xff]
    %v1410 = vld [vmem:[%s1401 + $0x40] sm:$0xff]
    %v1411 = vld [vmem:[%s1401 + $0x48] sm:$0xff]
    %v1412 = vld [vmem:[%s1401 + $0x50] sm:$0xff]
    %v1413 = vld [vmem:[%s1401 + $0x58] sm:$0xff]
    %v1414 = vld [vmem:[%s1401 + $0x60] sm:$0xff]
    %v1415 = vld [vmem:[%s1401 + $0x68] sm:$0xff]
    %v1416 = vld [vmem:[%s1401 + $0x70] sm:$0xff]
    %v1417 = vld [vmem:[%s1401 + $0x78] sm:$0xff]
    %v1418 = vld [vmem:[%s1401 + $0x80] sm:$0xff]
    %v1419 = vld [vmem:[%s1401 + $0x88] sm:$0xff]
    %v1420 = vld [vmem:[%s1401 + $0x90] sm:$0xff]
    %v1421 = vld [vmem:[%s1401 + $0x98] sm:$0xff]
    %v1422 = vld [vmem:[%s1401 + $0xa0] sm:$0xff]
    %v1423 = vld [vmem:[%s1401 + $0xa8] sm:$0xff]
    %v1424 = vld [vmem:[%s1401 + $0xb0] sm:$0xff]
    %v1425 = vld [vmem:[%s1401 + $0xb8] sm:$0xff]
    %v1426 = vld [vmem:[%s1401 + $0xc0] sm:$0xff]
    %v1427 = vld [vmem:[%s1401 + $0xc8] sm:$0xff]
    %v1428 = vld [vmem:[%s1401 + $0xd0] sm:$0xff]
    %v1429 = vld [vmem:[%s1401 + $0xd8] sm:$0xff]
    %v1430 = vld [vmem:[%s1401 + $0xe0] sm:$0xff]
    %v1431 = vld [vmem:[%s1401 + $0xe8] sm:$0xff]
    %v1432 = vld [vmem:[%s1401 + $0xf0] sm:$0xff]
    %v1433 = vld [vmem:[%s1401 + $0xf8] sm:$0xff]
    %v1466 = vunpack.c.l.b16 %v1402
    %v1467 = vunpack.c.h.b16 %v1402
    %v1468 = vunpack.c.l.b16 %v1403
    %v1469 = vunpack.c.h.b16 %v1403
    %v1470 = vunpack.c.l.b16 %v1404
    %v1471 = vunpack.c.h.b16 %v1404
    %v1472 = vunpack.c.l.b16 %v1405
    %v1473 = vunpack.c.h.b16 %v1405
    %v1474 = vunpack.c.l.b16 %v1406
    %v1475 = vunpack.c.h.b16 %v1406
    %v1476 = vunpack.c.l.b16 %v1407
    %v1477 = vunpack.c.h.b16 %v1407
    %v1478 = vunpack.c.l.b16 %v1408
    %v1479 = vunpack.c.h.b16 %v1408
    %v1480 = vunpack.c.l.b16 %v1409
    %v1481 = vunpack.c.h.b16 %v1409
    %v1482 = vunpack.c.l.b16 %v1410
    %v1483 = vunpack.c.h.b16 %v1410
    %v1484 = vunpack.c.l.b16 %v1411
    %v1485 = vunpack.c.h.b16 %v1411
    %v1486 = vunpack.c.l.b16 %v1412
    %v1487 = vunpack.c.h.b16 %v1412
    %v1488 = vunpack.c.l.b16 %v1413
    %v1489 = vunpack.c.h.b16 %v1413
    %v1490 = vunpack.c.l.b16 %v1414
    %v1491 = vunpack.c.h.b16 %v1414
    %v1492 = vunpack.c.l.b16 %v1415
    %v1493 = vunpack.c.h.b16 %v1415
    %v1494 = vunpack.c.l.b16 %v1416
    %v1495 = vunpack.c.h.b16 %v1416
    %v1496 = vunpack.c.l.b16 %v1417
    %v1497 = vunpack.c.h.b16 %v1417
    %v1498 = vunpack.c.l.b16 %v1418
    %v1499 = vunpack.c.h.b16 %v1418
    %v1500 = vunpack.c.l.b16 %v1419
    %v1501 = vunpack.c.h.b16 %v1419
    %v1502 = vunpack.c.l.b16 %v1420
    %v1503 = vunpack.c.h.b16 %v1420
    %v1504 = vunpack.c.l.b16 %v1421
    %v1505 = vunpack.c.h.b16 %v1421
    %v1506 = vunpack.c.l.b16 %v1422
    %v1507 = vunpack.c.h.b16 %v1422
    %v1508 = vunpack.c.l.b16 %v1423
    %v1509 = vunpack.c.h.b16 %v1423
    %v1510 = vunpack.c.l.b16 %v1424
    %v1511 = vunpack.c.h.b16 %v1424
    %v1512 = vunpack.c.l.b16 %v1425
    %v1513 = vunpack.c.h.b16 %v1425
    %v1514 = vunpack.c.l.b16 %v1426
    %v1515 = vunpack.c.h.b16 %v1426
    %v1516 = vunpack.c.l.b16 %v1427
    %v1517 = vunpack.c.h.b16 %v1427
    %v1518 = vunpack.c.l.b16 %v1428
    %v1519 = vunpack.c.h.b16 %v1428
    %v1520 = vunpack.c.l.b16 %v1429
    %v1521 = vunpack.c.h.b16 %v1429
    %v1522 = vunpack.c.l.b16 %v1430
    %v1523 = vunpack.c.h.b16 %v1430
    %v1524 = vunpack.c.l.b16 %v1431
    %v1525 = vunpack.c.h.b16 %v1431
    %v1526 = vunpack.c.l.b16 %v1432
    %v1527 = vunpack.c.h.b16 %v1432
    %v1528 = vunpack.c.l.b16 %v1433
    %v1529 = vunpack.c.h.b16 %v1433
    %v1530 = vpack.c.b16 %v1468, %v1466
    %v1531 = vpack.c.b16 %v1469, %v1467
    %v1532 = vpack.c.b16 %v1472, %v1470
    %v1533 = vpack.c.b16 %v1473, %v1471
    %v1534 = vpack.c.b16 %v1476, %v1474
    %v1535 = vpack.c.b16 %v1477, %v1475
    %v1536 = vpack.c.b16 %v1480, %v1478
    %v1537 = vpack.c.b16 %v1481, %v1479
    %v1538 = vpack.c.b16 %v1484, %v1482
    %v1539 = vpack.c.b16 %v1485, %v1483
    %v1540 = vpack.c.b16 %v1488, %v1486
    %v1541 = vpack.c.b16 %v1489, %v1487
    %v1542 = vpack.c.b16 %v1492, %v1490
    %v1543 = vpack.c.b16 %v1493, %v1491
    %v1544 = vpack.c.b16 %v1496, %v1494
    %v1545 = vpack.c.b16 %v1497, %v1495
    %v1546 = vpack.c.b16 %v1500, %v1498
    %v1547 = vpack.c.b16 %v1501, %v1499
    %v1548 = vpack.c.b16 %v1504, %v1502
    %v1549 = vpack.c.b16 %v1505, %v1503
    %v1550 = vpack.c.b16 %v1508, %v1506
    %v1551 = vpack.c.b16 %v1509, %v1507
    %v1552 = vpack.c.b16 %v1512, %v1510
    %v1553 = vpack.c.b16 %v1513, %v1511
    %v1554 = vpack.c.b16 %v1516, %v1514
    %v1555 = vpack.c.b16 %v1517, %v1515
    %v1556 = vpack.c.b16 %v1520, %v1518
    %v1557 = vpack.c.b16 %v1521, %v1519
    %v1558 = vpack.c.b16 %v1524, %v1522
    %v1559 = vpack.c.b16 %v1525, %v1523
    %v1560 = vpack.c.b16 %v1528, %v1526
    %v1561 = vpack.c.b16 %v1529, %v1527
    %1594 = vmatprep.subr.bf16.mxu0 %v1531
    %1595 = vmatpush1.bf16.msra.mxu0 %v1530
    %1596 = vmatprep.subr.bf16.mxu0 %v1533
    %1597 = vmatpush1.bf16.msra.mxu0 %v1532
    %1598 = vmatprep.subr.bf16.mxu0 %v1535
    %1599 = vmatpush1.bf16.msra.mxu0 %v1534
    %1600 = vmatprep.subr.bf16.mxu0 %v1537
    %1601 = vmatpush1.bf16.msra.mxu0 %v1536
    %1602 = vmatprep.subr.bf16.mxu0 %v1539
    %1603 = vmatpush1.bf16.msra.mxu0 %v1538
    %1604 = vmatprep.subr.bf16.mxu0 %v1541
    %1605 = vmatpush1.bf16.msra.mxu0 %v1540
    %1606 = vmatprep.subr.bf16.mxu0 %v1543
    %1607 = vmatpush1.bf16.msra.mxu0 %v1542
    %1608 = vmatprep.subr.bf16.mxu0 %v1545
    %1609 = vmatpush1.bf16.msra.mxu0 %v1544
    %1610 = vmatprep.subr.bf16.mxu0 %v1547
    %1611 = vmatpush1.bf16.msra.mxu0 %v1546
    %1612 = vmatprep.subr.bf16.mxu0 %v1549
    %1613 = vmatpush1.bf16.msra.mxu0 %v1548
    %1614 = vmatprep.subr.bf16.mxu0 %v1551
    %1615 = vmatpush1.bf16.msra.mxu0 %v1550
    %1616 = vmatprep.subr.bf16.mxu0 %v1553
    %1617 = vmatpush1.bf16.msra.mxu0 %v1552
    %1618 = vmatprep.subr.bf16.mxu0 %v1555
    %1619 = vmatpush1.bf16.msra.mxu0 %v1554
    %1620 = vmatprep.subr.bf16.mxu0 %v1557
    %1621 = vmatpush1.bf16.msra.mxu0 %v1556
    %1622 = vmatprep.subr.bf16.mxu0 %v1559
    %1623 = vmatpush1.bf16.msra.mxu0 %v1558
    %1624 = vmatprep.subr.bf16.mxu0 %v1561
    %1625 = vmatpush1.bf16.msra.mxu0 %v1560
    %1626 = vmatprep.mubr.bf16.mxu0 %v1400
    %1627 = vmatmul.mubr.bf16.gmra.mrb[0].mxu0 %v1399
    %v1628 = vpop.f32.mrb[0].mxu0
    %v1629 = vadd.f32 0.0, %v1628
    %v1630 = vpop.f32.mrb[0].mxu0
    %v1631 = vadd.f32 0.0, %v1630
    %v1632 = vpop.f32.mrb[0].mxu0
    %v1633 = vadd.f32 0.0, %v1632
    %v1634 = vpop.f32.mrb[0].mxu0
    %v1635 = vadd.f32 0.0, %v1634
    %1636 = vdwg.mxu0
    %v1669 = vunpack.c.l.b16 %v1351
    %v1670 = vunpack.c.h.b16 %v1351
    %v1671 = vunpack.c.l.b16 %v1352
    %v1672 = vunpack.c.h.b16 %v1352
    %v1673 = vunpack.c.l.b16 %v1353
    %v1674 = vunpack.c.h.b16 %v1353
    %v1675 = vunpack.c.l.b16 %v1354
    %v1676 = vunpack.c.h.b16 %v1354
    %v1677 = vunpack.c.l.b16 %v1355
    %v1678 = vunpack.c.h.b16 %v1355
    %v1679 = vunpack.c.l.b16 %v1356
    %v1680 = vunpack.c.h.b16 %v1356
    %v1681 = vunpack.c.l.b16 %v1357
    %v1682 = vunpack.c.h.b16 %v1357
    %v1683 = vunpack.c.l.b16 %v1358
    %v1684 = vunpack.c.h.b16 %v1358
    %v1685 = vunpack.c.l.b16 %v1359
    %v1686 = vunpack.c.h.b16 %v1359
    %v1687 = vunpack.c.l.b16 %v1360
    %v1688 = vunpack.c.h.b16 %v1360
    %v1689 = vunpack.c.l.b16 %v1361
    %v1690 = vunpack.c.h.b16 %v1361
    %v1691 = vunpack.c.l.b16 %v1362
    %v1692 = vunpack.c.h.b16 %v1362
    %v1693 = vunpack.c.l.b16 %v1363
    %v1694 = vunpack.c.h.b16 %v1363
    %v1695 = vunpack.c.l.b16 %v1364
    %v1696 = vunpack.c.h.b16 %v1364
    %v1697 = vunpack.c.l.b16 %v1365
    %v1698 = vunpack.c.h.b16 %v1365
    %v1699 = vunpack.c.l.b16 %v1366
    %v1700 = vunpack.c.h.b16 %v1366
    %v1701 = vunpack.c.l.b16 %v1367
    %v1702 = vunpack.c.h.b16 %v1367
    %v1703 = vunpack.c.l.b16 %v1368
    %v1704 = vunpack.c.h.b16 %v1368
    %v1705 = vunpack.c.l.b16 %v1369
    %v1706 = vunpack.c.h.b16 %v1369
    %v1707 = vunpack.c.l.b16 %v1370
    %v1708 = vunpack.c.h.b16 %v1370
    %v1709 = vunpack.c.l.b16 %v1371
    %v1710 = vunpack.c.h.b16 %v1371
    %v1711 = vunpack.c.l.b16 %v1372
    %v1712 = vunpack.c.h.b16 %v1372
    %v1713 = vunpack.c.l.b16 %v1373
    %v1714 = vunpack.c.h.b16 %v1373
    %v1715 = vunpack.c.l.b16 %v1374
    %v1716 = vunpack.c.h.b16 %v1374
    %v1717 = vunpack.c.l.b16 %v1375
    %v1718 = vunpack.c.h.b16 %v1375
    %v1719 = vunpack.c.l.b16 %v1376
    %v1720 = vunpack.c.h.b16 %v1376
    %v1721 = vunpack.c.l.b16 %v1377
    %v1722 = vunpack.c.h.b16 %v1377
    %v1723 = vunpack.c.l.b16 %v1378
    %v1724 = vunpack.c.h.b16 %v1378
    %v1725 = vunpack.c.l.b16 %v1379
    %v1726 = vunpack.c.h.b16 %v1379
    %v1727 = vunpack.c.l.b16 %v1380
    %v1728 = vunpack.c.h.b16 %v1380
    %v1729 = vunpack.c.l.b16 %v1381
    %v1730 = vunpack.c.h.b16 %v1381
    %v1731 = vunpack.c.l.b16 %v1382
    %v1732 = vunpack.c.h.b16 %v1382
    %v1733 = vpack.c.b16 %v1671, %v1669
    %v1734 = vpack.c.b16 %v1672, %v1670
    %v1735 = vpack.c.b16 %v1675, %v1673
    %v1736 = vpack.c.b16 %v1676, %v1674
    %v1737 = vpack.c.b16 %v1679, %v1677
    %v1738 = vpack.c.b16 %v1680, %v1678
    %v1739 = vpack.c.b16 %v1683, %v1681
    %v1740 = vpack.c.b16 %v1684, %v1682
    %v1741 = vpack.c.b16 %v1687, %v1685
    %v1742 = vpack.c.b16 %v1688, %v1686
    %v1743 = vpack.c.b16 %v1691, %v1689
    %v1744 = vpack.c.b16 %v1692, %v1690
    %v1745 = vpack.c.b16 %v1695, %v1693
    %v1746 = vpack.c.b16 %v1696, %v1694
    %v1747 = vpack.c.b16 %v1699, %v1697
    %v1748 = vpack.c.b16 %v1700, %v1698
    %v1749 = vpack.c.b16 %v1703, %v1701
    %v1750 = vpack.c.b16 %v1704, %v1702
    %v1751 = vpack.c.b16 %v1707, %v1705
    %v1752 = vpack.c.b16 %v1708, %v1706
    %v1753 = vpack.c.b16 %v1711, %v1709
    %v1754 = vpack.c.b16 %v1712, %v1710
    %v1755 = vpack.c.b16 %v1715, %v1713
    %v1756 = vpack.c.b16 %v1716, %v1714
    %v1757 = vpack.c.b16 %v1719, %v1717
    %v1758 = vpack.c.b16 %v1720, %v1718
    %v1759 = vpack.c.b16 %v1723, %v1721
    %v1760 = vpack.c.b16 %v1724, %v1722
    %v1761 = vpack.c.b16 %v1727, %v1725
    %v1762 = vpack.c.b16 %v1728, %v1726
    %v1763 = vpack.c.b16 %v1731, %v1729
    %v1764 = vpack.c.b16 %v1732, %v1730
    %1797 = vmatprep.subr.bf16.mxu0 %v1734
    %1798 = vmatpush1.bf16.msra.mxu0 %v1733
    %1799 = vmatprep.subr.bf16.mxu0 %v1736
    %1800 = vmatpush1.bf16.msra.mxu0 %v1735
    %1801 = vmatprep.subr.bf16.mxu0 %v1738
    %1802 = vmatpush1.bf16.msra.mxu0 %v1737
    %1803 = vmatprep.subr.bf16.mxu0 %v1740
    %1804 = vmatpush1.bf16.msra.mxu0 %v1739
    %1805 = vmatprep.subr.bf16.mxu0 %v1742
    %1806 = vmatpush1.bf16.msra.mxu0 %v1741
    %1807 = vmatprep.subr.bf16.mxu0 %v1744
    %1808 = vmatpush1.bf16.msra.mxu0 %v1743
    %1809 = vmatprep.subr.bf16.mxu0 %v1746
    %1810 = vmatpush1.bf16.msra.mxu0 %v1745
    %1811 = vmatprep.subr.bf16.mxu0 %v1748
    %1812 = vmatpush1.bf16.msra.mxu0 %v1747
    %1813 = vmatprep.subr.bf16.mxu0 %v1750
    %1814 = vmatpush1.bf16.msra.mxu0 %v1749
    %1815 = vmatprep.subr.bf16.mxu0 %v1752
    %1816 = vmatpush1.bf16.msra.mxu0 %v1751
    %1817 = vmatprep.subr.bf16.mxu0 %v1754
    %1818 = vmatpush1.bf16.msra.mxu0 %v1753
    %1819 = vmatprep.subr.bf16.mxu0 %v1756
    %1820 = vmatpush1.bf16.msra.mxu0 %v1755
    %1821 = vmatprep.subr.bf16.mxu0 %v1758
    %1822 = vmatpush1.bf16.msra.mxu0 %v1757
    %1823 = vmatprep.subr.bf16.mxu0 %v1760
    %1824 = vmatpush1.bf16.msra.mxu0 %v1759
    %1825 = vmatprep.subr.bf16.mxu0 %v1762
    %1826 = vmatpush1.bf16.msra.mxu0 %v1761
    %1827 = vmatprep.subr.bf16.mxu0 %v1764
    %1828 = vmatpush1.bf16.msra.mxu0 %v1763
    %1829 = vmatprep.mubr.bf16.mxu0 %v1350
    %1830 = vmatmul.mubr.bf16.gmra.mrb[0].mxu0 %v1349
    %v1831 = vpop.f32.mrb[0].mxu0
    %v1832 = vadd.f32 %v1629, %v1831
    %v1833 = vpop.f32.mrb[0].mxu0
    %v1834 = vadd.f32 %v1631, %v1833
    %v1835 = vpop.f32.mrb[0].mxu0
    %v1836 = vadd.f32 %v1633, %v1835
    %v1837 = vpop.f32.mrb[0].mxu0
    %v1838 = vadd.f32 %v1635, %v1837
    %1839 = vdwg.mxu0
    %v1842 = vrot.slane %v1325, 1
    %v1843 = vrot.slane %v1326, 1
    %1846 = vst [vmem:[#allocation2] sm:$0x3f] %v1842
    %1847 = vst [vmem:[#allocation2 + $0x8] sm:$0x3f] %v1843
    %v1848 = vrot.slane %v1329, 3
    %v1849 = vrot.slane %v1330, 3
    %1852 = vst [vmem:[#allocation2] sm:$0xc0] %v1848
    %1853 = vst [vmem:[#allocation2 + $0x8] sm:$0xc0] %v1849
    %1854 = vst [vmem:[#allocation2 + $0x10] sm:$0xf] %v1848
    %1855 = vst [vmem:[#allocation2 + $0x18] sm:$0xf] %v1849
    %v1856 = vld [vmem:[#allocation2] sm:$0xff]
    %v1857 = vld [vmem:[#allocation2 + $0x8] sm:$0xff]
    %v1858 = vld [vmem:[#allocation2 + $0x10] sm:$0xf]
    %v1859 = vld [vmem:[#allocation2 + $0x18] sm:$0xf]
    %v1860 = vpack.c.bf16 %v1858, %v1856
    %v1861 = vpack.c.bf16 %v1859, %v1857
    %s1862 = scalar_lea.vmem %s6, 512
    %v1863 = vld [vmem:[%s1862] sm:$0xff]
    %v1864 = vld [vmem:[%s1862 + $0x8] sm:$0xff]
    %v1865 = vld [vmem:[%s1862 + $0x10] sm:$0xff]
    %v1866 = vld [vmem:[%s1862 + $0x18] sm:$0xff]
    %v1867 = vld [vmem:[%s1862 + $0x20] sm:$0xff]
    %v1868 = vld [vmem:[%s1862 + $0x28] sm:$0xff]
    %v1869 = vld [vmem:[%s1862 + $0x30] sm:$0xff]
    %v1870 = vld [vmem:[%s1862 + $0x38] sm:$0xff]
    %v1871 = vld [vmem:[%s1862 + $0x40] sm:$0xff]
    %v1872 = vld [vmem:[%s1862 + $0x48] sm:$0xff]
    %v1873 = vld [vmem:[%s1862 + $0x50] sm:$0xff]
    %v1874 = vld [vmem:[%s1862 + $0x58] sm:$0xff]
    %v1875 = vld [vmem:[%s1862 + $0x60] sm:$0xff]
    %v1876 = vld [vmem:[%s1862 + $0x68] sm:$0xff]
    %v1877 = vld [vmem:[%s1862 + $0x70] sm:$0xff]
    %v1878 = vld [vmem:[%s1862 + $0x78] sm:$0xff]
    %v1879 = vld [vmem:[%s1862 + $0x80] sm:$0xff]
    %v1880 = vld [vmem:[%s1862 + $0x88] sm:$0xff]
    %v1881 = vld [vmem:[%s1862 + $0x90] sm:$0xff]
    %v1882 = vld [vmem:[%s1862 + $0x98] sm:$0xff]
    %v1883 = vld [vmem:[%s1862 + $0xa0] sm:$0xff]
    %v1884 = vld [vmem:[%s1862 + $0xa8] sm:$0xff]
    %v1885 = vld [vmem:[%s1862 + $0xb0] sm:$0xff]
    %v1886 = vld [vmem:[%s1862 + $0xb8] sm:$0xff]
    %v1887 = vld [vmem:[%s1862 + $0xc0] sm:$0xff]
    %v1888 = vld [vmem:[%s1862 + $0xc8] sm:$0xff]
    %v1889 = vld [vmem:[%s1862 + $0xd0] sm:$0xff]
    %v1890 = vld [vmem:[%s1862 + $0xd8] sm:$0xff]
    %v1891 = vld [vmem:[%s1862 + $0xe0] sm:$0xff]
    %v1892 = vld [vmem:[%s1862 + $0xe8] sm:$0xff]
    %v1893 = vld [vmem:[%s1862 + $0xf0] sm:$0xff]
    %v1894 = vld [vmem:[%s1862 + $0xf8] sm:$0xff]
    %v1927 = vunpack.c.l.b16 %v1863
    %v1928 = vunpack.c.h.b16 %v1863
    %v1929 = vunpack.c.l.b16 %v1864
    %v1930 = vunpack.c.h.b16 %v1864
    %v1931 = vunpack.c.l.b16 %v1865
    %v1932 = vunpack.c.h.b16 %v1865
    %v1933 = vunpack.c.l.b16 %v1866
    %v1934 = vunpack.c.h.b16 %v1866
    %v1935 = vunpack.c.l.b16 %v1867
    %v1936 = vunpack.c.h.b16 %v1867
    %v1937 = vunpack.c.l.b16 %v1868
    %v1938 = vunpack.c.h.b16 %v1868
    %v1939 = vunpack.c.l.b16 %v1869
    %v1940 = vunpack.c.h.b16 %v1869
    %v1941 = vunpack.c.l.b16 %v1870
    %v1942 = vunpack.c.h.b16 %v1870
    %v1943 = vunpack.c.l.b16 %v1871
    %v1944 = vunpack.c.h.b16 %v1871
    %v1945 = vunpack.c.l.b16 %v1872
    %v1946 = vunpack.c.h.b16 %v1872
    %v1947 = vunpack.c.l.b16 %v1873
    %v1948 = vunpack.c.h.b16 %v1873
    %v1949 = vunpack.c.l.b16 %v1874
    %v1950 = vunpack.c.h.b16 %v1874
    %v1951 = vunpack.c.l.b16 %v1875
    %v1952 = vunpack.c.h.b16 %v1875
    %v1953 = vunpack.c.l.b16 %v1876
    %v1954 = vunpack.c.h.b16 %v1876
    %v1955 = vunpack.c.l.b16 %v1877
    %v1956 = vunpack.c.h.b16 %v1877
    %v1957 = vunpack.c.l.b16 %v1878
    %v1958 = vunpack.c.h.b16 %v1878
    %v1959 = vunpack.c.l.b16 %v1879
    %v1960 = vunpack.c.h.b16 %v1879
    %v1961 = vunpack.c.l.b16 %v1880
    %v1962 = vunpack.c.h.b16 %v1880
    %v1963 = vunpack.c.l.b16 %v1881
    %v1964 = vunpack.c.h.b16 %v1881
    %v1965 = vunpack.c.l.b16 %v1882
    %v1966 = vunpack.c.h.b16 %v1882
    %v1967 = vunpack.c.l.b16 %v1883
    %v1968 = vunpack.c.h.b16 %v1883
    %v1969 = vunpack.c.l.b16 %v1884
    %v1970 = vunpack.c.h.b16 %v1884
    %v1971 = vunpack.c.l.b16 %v1885
    %v1972 = vunpack.c.h.b16 %v1885
    %v1973 = vunpack.c.l.b16 %v1886
    %v1974 = vunpack.c.h.b16 %v1886
    %v1975 = vunpack.c.l.b16 %v1887
    %v1976 = vunpack.c.h.b16 %v1887
    %v1977 = vunpack.c.l.b16 %v1888
    %v1978 = vunpack.c.h.b16 %v1888
    %v1979 = vunpack.c.l.b16 %v1889
    %v1980 = vunpack.c.h.b16 %v1889
    %v1981 = vunpack.c.l.b16 %v1890
    %v1982 = vunpack.c.h.b16 %v1890
    %v1983 = vunpack.c.l.b16 %v1891
    %v1984 = vunpack.c.h.b16 %v1891
    %v1985 = vunpack.c.l.b16 %v1892
    %v1986 = vunpack.c.h.b16 %v1892
    %v1987 = vunpack.c.l.b16 %v1893
    %v1988 = vunpack.c.h.b16 %v1893
    %v1989 = vunpack.c.l.b16 %v1894
    %v1990 = vunpack.c.h.b16 %v1894
    %v1991 = vpack.c.b16 %v1929, %v1927
    %v1992 = vpack.c.b16 %v1930, %v1928
    %v1993 = vpack.c.b16 %v1933, %v1931
    %v1994 = vpack.c.b16 %v1934, %v1932
    %v1995 = vpack.c.b16 %v1937, %v1935
    %v1996 = vpack.c.b16 %v1938, %v1936
    %v1997 = vpack.c.b16 %v1941, %v1939
    %v1998 = vpack.c.b16 %v1942, %v1940
    %v1999 = vpack.c.b16 %v1945, %v1943
    %v2000 = vpack.c.b16 %v1946, %v1944
    %v2001 = vpack.c.b16 %v1949, %v1947
    %v2002 = vpack.c.b16 %v1950, %v1948
    %v2003 = vpack.c.b16 %v1953, %v1951
    %v2004 = vpack.c.b16 %v1954, %v1952
    %v2005 = vpack.c.b16 %v1957, %v1955
    %v2006 = vpack.c.b16 %v1958, %v1956
    %v2007 = vpack.c.b16 %v1961, %v1959
    %v2008 = vpack.c.b16 %v1962, %v1960
    %v2009 = vpack.c.b16 %v1965, %v1963
    %v2010 = vpack.c.b16 %v1966, %v1964
    %v2011 = vpack.c.b16 %v1969, %v1967
    %v2012 = vpack.c.b16 %v1970, %v1968
    %v2013 = vpack.c.b16 %v1973, %v1971
    %v2014 = vpack.c.b16 %v1974, %v1972
    %v2015 = vpack.c.b16 %v1977, %v1975
    %v2016 = vpack.c.b16 %v1978, %v1976
    %v2017 = vpack.c.b16 %v1981, %v1979
    %v2018 = vpack.c.b16 %v1982, %v1980
    %v2019 = vpack.c.b16 %v1985, %v1983
    %v2020 = vpack.c.b16 %v1986, %v1984
    %v2021 = vpack.c.b16 %v1989, %v1987
    %v2022 = vpack.c.b16 %v1990, %v1988
    %2055 = vmatprep.subr.bf16.mxu0 %v1992
    %2056 = vmatpush1.bf16.msra.mxu0 %v1991
    %2057 = vmatprep.subr.bf16.mxu0 %v1994
    %2058 = vmatpush1.bf16.msra.mxu0 %v1993
    %2059 = vmatprep.subr.bf16.mxu0 %v1996
    %2060 = vmatpush1.bf16.msra.mxu0 %v1995
    %2061 = vmatprep.subr.bf16.mxu0 %v1998
    %2062 = vmatpush1.bf16.msra.mxu0 %v1997
    %2063 = vmatprep.subr.bf16.mxu0 %v2000
    %2064 = vmatpush1.bf16.msra.mxu0 %v1999
    %2065 = vmatprep.subr.bf16.mxu0 %v2002
    %2066 = vmatpush1.bf16.msra.mxu0 %v2001
    %2067 = vmatprep.subr.bf16.mxu0 %v2004
    %2068 = vmatpush1.bf16.msra.mxu0 %v2003
    %2069 = vmatprep.subr.bf16.mxu0 %v2006
    %2070 = vmatpush1.bf16.msra.mxu0 %v2005
    %2071 = vmatprep.subr.bf16.mxu0 %v2008
    %2072 = vmatpush1.bf16.msra.mxu0 %v2007
    %2073 = vmatprep.subr.bf16.mxu0 %v2010
    %2074 = vmatpush1.bf16.msra.mxu0 %v2009
    %2075 = vmatprep.subr.bf16.mxu0 %v2012
    %2076 = vmatpush1.bf16.msra.mxu0 %v2011
    %2077 = vmatprep.subr.bf16.mxu0 %v2014
    %2078 = vmatpush1.bf16.msra.mxu0 %v2013
    %2079 = vmatprep.subr.bf16.mxu0 %v2016
    %2080 = vmatpush1.bf16.msra.mxu0 %v2015
    %2081 = vmatprep.subr.bf16.mxu0 %v2018
    %2082 = vmatpush1.bf16.msra.mxu0 %v2017
    %2083 = vmatprep.subr.bf16.mxu0 %v2020
    %2084 = vmatpush1.bf16.msra.mxu0 %v2019
    %2085 = vmatprep.subr.bf16.mxu0 %v2022
    %2086 = vmatpush1.bf16.msra.mxu0 %v2021
    %2087 = vmatprep.mubr.bf16.mxu0 %v1861
    %2088 = vmatmul.mubr.bf16.gmra.mrb[0].mxu0 %v1860
    %v2089 = vpop.f32.mrb[0].mxu0
    %v2090 = vadd.f32 0.0, %v2089
    %v2091 = vpop.f32.mrb[0].mxu0
    %v2092 = vadd.f32 0.0, %v2091
    %v2093 = vpop.f32.mrb[0].mxu0
    %v2094 = vadd.f32 0.0, %v2093
    %v2095 = vpop.f32.mrb[0].mxu0
    %v2096 = vadd.f32 0.0, %v2095
    %2097 = vdwg.mxu0
    %v2098 = vadd.f32 %v1832, %v2090
    %v2099 = vadd.f32 %v1834, %v2092
    %v2100 = vadd.f32 %v1836, %v2094
    %v2101 = vadd.f32 %v1838, %v2096
    %v2104 = vrot.slane %v1327, 1
    %v2105 = vrot.slane %v1328, 1
    %2108 = vst [vmem:[#allocation2] sm:$0x3f] %v2104
    %2109 = vst [vmem:[#allocation2 + $0x8] sm:$0x3f] %v2105
    %v2110 = vrot.slane %v1331, 3
    %v2111 = vrot.slane %v1332, 3
    %2114 = vst [vmem:[#allocation2] sm:$0xc0] %v2110
    %2115 = vst [vmem:[#allocation2 + $0x8] sm:$0xc0] %v2111
    %2116 = vst [vmem:[#allocation2 + $0x10] sm:$0xf] %v2110
    %2117 = vst [vmem:[#allocation2 + $0x18] sm:$0xf] %v2111
    %v2118 = vld [vmem:[#allocation2] sm:$0xff]
    %v2119 = vld [vmem:[#allocation2 + $0x8] sm:$0xff]
    %v2120 = vld [vmem:[#allocation2 + $0x10] sm:$0xf]
    %v2121 = vld [vmem:[#allocation2 + $0x18] sm:$0xf]
    %v2122 = vpack.c.bf16 %v2120, %v2118
    %v2123 = vpack.c.bf16 %v2121, %v2119
    %s2124 = scalar_lea.vmem %s6, 768
    %v2125 = vld [vmem:[%s2124] sm:$0xff]
    %v2126 = vld [vmem:[%s2124 + $0x8] sm:$0xff]
    %v2127 = vld [vmem:[%s2124 + $0x10] sm:$0xff]
    %v2128 = vld [vmem:[%s2124 + $0x18] sm:$0xff]
    %v2129 = vld [vmem:[%s2124 + $0x20] sm:$0xff]
    %v2130 = vld [vmem:[%s2124 + $0x28] sm:$0xff]
    %v2131 = vld [vmem:[%s2124 + $0x30] sm:$0xff]
    %v2132 = vld [vmem:[%s2124 + $0x38] sm:$0xff]
    %v2133 = vld [vmem:[%s2124 + $0x40] sm:$0xff]
    %v2134 = vld [vmem:[%s2124 + $0x48] sm:$0xff]
    %v2135 = vld [vmem:[%s2124 + $0x50] sm:$0xff]
    %v2136 = vld [vmem:[%s2124 + $0x58] sm:$0xff]
    %v2137 = vld [vmem:[%s2124 + $0x60] sm:$0xff]
    %v2138 = vld [vmem:[%s2124 + $0x68] sm:$0xff]
    %v2139 = vld [vmem:[%s2124 + $0x70] sm:$0xff]
    %v2140 = vld [vmem:[%s2124 + $0x78] sm:$0xff]
    %v2141 = vld [vmem:[%s2124 + $0x80] sm:$0xff]
    %v2142 = vld [vmem:[%s2124 + $0x88] sm:$0xff]
    %v2143 = vld [vmem:[%s2124 + $0x90] sm:$0xff]
    %v2144 = vld [vmem:[%s2124 + $0x98] sm:$0xff]
    %v2145 = vld [vmem:[%s2124 + $0xa0] sm:$0xff]
    %v2146 = vld [vmem:[%s2124 + $0xa8] sm:$0xff]
    %v2147 = vld [vmem:[%s2124 + $0xb0] sm:$0xff]
    %v2148 = vld [vmem:[%s2124 + $0xb8] sm:$0xff]
    %v2149 = vld [vmem:[%s2124 + $0xc0] sm:$0xff]
    %v2150 = vld [vmem:[%s2124 + $0xc8] sm:$0xff]
    %v2151 = vld [vmem:[%s2124 + $0xd0] sm:$0xff]
    %v2152 = vld [vmem:[%s2124 + $0xd8] sm:$0xff]
    %v2153 = vld [vmem:[%s2124 + $0xe0] sm:$0xff]
    %v2154 = vld [vmem:[%s2124 + $0xe8] sm:$0xff]
    %v2155 = vld [vmem:[%s2124 + $0xf0] sm:$0xff]
    %v2156 = vld [vmem:[%s2124 + $0xf8] sm:$0xff]
    %v2189 = vunpack.c.l.b16 %v2125
    %v2190 = vunpack.c.h.b16 %v2125
    %v2191 = vunpack.c.l.b16 %v2126
    %v2192 = vunpack.c.h.b16 %v2126
    %v2193 = vunpack.c.l.b16 %v2127
    %v2194 = vunpack.c.h.b16 %v2127
    %v2195 = vunpack.c.l.b16 %v2128
    %v2196 = vunpack.c.h.b16 %v2128
    %v2197 = vunpack.c.l.b16 %v2129
    %v2198 = vunpack.c.h.b16 %v2129
    %v2199 = vunpack.c.l.b16 %v2130
    %v2200 = vunpack.c.h.b16 %v2130
    %v2201 = vunpack.c.l.b16 %v2131
    %v2202 = vunpack.c.h.b16 %v2131
    %v2203 = vunpack.c.l.b16 %v2132
    %v2204 = vunpack.c.h.b16 %v2132
    %v2205 = vunpack.c.l.b16 %v2133
    %v2206 = vunpack.c.h.b16 %v2133
    %v2207 = vunpack.c.l.b16 %v2134
    %v2208 = vunpack.c.h.b16 %v2134
    %v2209 = vunpack.c.l.b16 %v2135
    %v2210 = vunpack.c.h.b16 %v2135
    %v2211 = vunpack.c.l.b16 %v2136
    %v2212 = vunpack.c.h.b16 %v2136
    %v2213 = vunpack.c.l.b16 %v2137
    %v2214 = vunpack.c.h.b16 %v2137
    %v2215 = vunpack.c.l.b16 %v2138
    %v2216 = vunpack.c.h.b16 %v2138
    %v2217 = vunpack.c.l.b16 %v2139
    %v2218 = vunpack.c.h.b16 %v2139
    %v2219 = vunpack.c.l.b16 %v2140
    %v2220 = vunpack.c.h.b16 %v2140
    %v2221 = vunpack.c.l.b16 %v2141
    %v2222 = vunpack.c.h.b16 %v2141
    %v2223 = vunpack.c.l.b16 %v2142
    %v2224 = vunpack.c.h.b16 %v2142
    %v2225 = vunpack.c.l.b16 %v2143
    %v2226 = vunpack.c.h.b16 %v2143
    %v2227 = vunpack.c.l.b16 %v2144
    %v2228 = vunpack.c.h.b16 %v2144
    %v2229 = vunpack.c.l.b16 %v2145
    %v2230 = vunpack.c.h.b16 %v2145
    %v2231 = vunpack.c.l.b16 %v2146
    %v2232 = vunpack.c.h.b16 %v2146
    %v2233 = vunpack.c.l.b16 %v2147
    %v2234 = vunpack.c.h.b16 %v2147
    %v2235 = vunpack.c.l.b16 %v2148
    %v2236 = vunpack.c.h.b16 %v2148
    %v2237 = vunpack.c.l.b16 %v2149
    %v2238 = vunpack.c.h.b16 %v2149
    %v2239 = vunpack.c.l.b16 %v2150
    %v2240 = vunpack.c.h.b16 %v2150
    %v2241 = vunpack.c.l.b16 %v2151
    %v2242 = vunpack.c.h.b16 %v2151
    %v2243 = vunpack.c.l.b16 %v2152
    %v2244 = vunpack.c.h.b16 %v2152
    %v2245 = vunpack.c.l.b16 %v2153
    %v2246 = vunpack.c.h.b16 %v2153
    %v2247 = vunpack.c.l.b16 %v2154
    %v2248 = vunpack.c.h.b16 %v2154
    %v2249 = vunpack.c.l.b16 %v2155
    %v2250 = vunpack.c.h.b16 %v2155
    %v2251 = vunpack.c.l.b16 %v2156
    %v2252 = vunpack.c.h.b16 %v2156
    %v2253 = vpack.c.b16 %v2191, %v2189
    %v2254 = vpack.c.b16 %v2192, %v2190
    %v2255 = vpack.c.b16 %v2195, %v2193
    %v2256 = vpack.c.b16 %v2196, %v2194
    %v2257 = vpack.c.b16 %v2199, %v2197
    %v2258 = vpack.c.b16 %v2200, %v2198
    %v2259 = vpack.c.b16 %v2203, %v2201
    %v2260 = vpack.c.b16 %v2204, %v2202
    %v2261 = vpack.c.b16 %v2207, %v2205
    %v2262 = vpack.c.b16 %v2208, %v2206
    %v2263 = vpack.c.b16 %v2211, %v2209
    %v2264 = vpack.c.b16 %v2212, %v2210
    %v2265 = vpack.c.b16 %v2215, %v2213
    %v2266 = vpack.c.b16 %v2216, %v2214
    %v2267 = vpack.c.b16 %v2219, %v2217
    %v2268 = vpack.c.b16 %v2220, %v2218
    %v2269 = vpack.c.b16 %v2223, %v2221
    %v2270 = vpack.c.b16 %v2224, %v2222
    %v2271 = vpack.c.b16 %v2227, %v2225
    %v2272 = vpack.c.b16 %v2228, %v2226
    %v2273 = vpack.c.b16 %v2231, %v2229
    %v2274 = vpack.c.b16 %v2232, %v2230
    %v2275 = vpack.c.b16 %v2235, %v2233
    %v2276 = vpack.c.b16 %v2236, %v2234
    %v2277 = vpack.c.b16 %v2239, %v2237
    %v2278 = vpack.c.b16 %v2240, %v2238
    %v2279 = vpack.c.b16 %v2243, %v2241
    %v2280 = vpack.c.b16 %v2244, %v2242
    %v2281 = vpack.c.b16 %v2247, %v2245
    %v2282 = vpack.c.b16 %v2248, %v2246
    %v2283 = vpack.c.b16 %v2251, %v2249
    %v2284 = vpack.c.b16 %v2252, %v2250
    %2317 = vmatprep.subr.bf16.mxu0 %v2254
    %2318 = vmatpush1.bf16.msra.mxu0 %v2253
    %2319 = vmatprep.subr.bf16.mxu0 %v2256
    %2320 = vmatpush1.bf16.msra.mxu0 %v2255
    %2321 = vmatprep.subr.bf16.mxu0 %v2258
    %2322 = vmatpush1.bf16.msra.mxu0 %v2257
    %2323 = vmatprep.subr.bf16.mxu0 %v2260
    %2324 = vmatpush1.bf16.msra.mxu0 %v2259
    %2325 = vmatprep.subr.bf16.mxu0 %v2262
    %2326 = vmatpush1.bf16.msra.mxu0 %v2261
    %2327 = vmatprep.subr.bf16.mxu0 %v2264
    %2328 = vmatpush1.bf16.msra.mxu0 %v2263
    %2329 = vmatprep.subr.bf16.mxu0 %v2266
    %2330 = vmatpush1.bf16.msra.mxu0 %v2265
    %2331 = vmatprep.subr.bf16.mxu0 %v2268
    %2332 = vmatpush1.bf16.msra.mxu0 %v2267
    %2333 = vmatprep.subr.bf16.mxu0 %v2270
    %2334 = vmatpush1.bf16.msra.mxu0 %v2269
    %2335 = vmatprep.subr.bf16.mxu0 %v2272
    %2336 = vmatpush1.bf16.msra.mxu0 %v2271
    %2337 = vmatprep.subr.bf16.mxu0 %v2274
    %2338 = vmatpush1.bf16.msra.mxu0 %v2273
    %2339 = vmatprep.subr.bf16.mxu0 %v2276
    %2340 = vmatpush1.bf16.msra.mxu0 %v2275
    %2341 = vmatprep.subr.bf16.mxu0 %v2278
    %2342 = vmatpush1.bf16.msra.mxu0 %v2277
    %2343 = vmatprep.subr.bf16.mxu0 %v2280
    %2344 = vmatpush1.bf16.msra.mxu0 %v2279
    %2345 = vmatprep.subr.bf16.mxu0 %v2282
    %2346 = vmatpush1.bf16.msra.mxu0 %v2281
    %2347 = vmatprep.subr.bf16.mxu0 %v2284
    %2348 = vmatpush1.bf16.msra.mxu0 %v2283
    %2349 = vmatprep.mubr.bf16.mxu0 %v2123
    %2350 = vmatmul.mubr.bf16.gmra.mrb[0].mxu0 %v2122
    %v2351 = vpop.f32.mrb[0].mxu0
    %v2352 = vadd.f32 0.0, %v2351
    %v2353 = vpop.f32.mrb[0].mxu0
    %v2354 = vadd.f32 0.0, %v2353
    %v2355 = vpop.f32.mrb[0].mxu0
    %v2356 = vadd.f32 0.0, %v2355
    %v2357 = vpop.f32.mrb[0].mxu0
    %v2358 = vadd.f32 0.0, %v2357
    %2359 = vdwg.mxu0
    %v2360 = vadd.f32 %v2098, %v2352
    %v2361 = vadd.f32 %v2099, %v2354
    %v2362 = vadd.f32 %v2100, %v2356
    %v2363 = vadd.f32 %v2101, %v2358
    %v2364 = vrot.slane %v1325, 2
    %v2365 = vrot.slane %v1326, 2
    %2368 = vst [vmem:[#allocation2] sm:$0x3f] %v2364
    %2369 = vst [vmem:[#allocation2 + $0x8] sm:$0x3f] %v2365
    %v2370 = vrot.slane %v1329, 4
    %v2371 = vrot.slane %v1330, 4
    %2374 = vst [vmem:[#allocation2] sm:$0xc0] %v2370
    %2375 = vst [vmem:[#allocation2 + $0x8] sm:$0xc0] %v2371
    %2376 = vst [vmem:[#allocation2 + $0x10] sm:$0xf] %v2370
    %2377 = vst [vmem:[#allocation2 + $0x18] sm:$0xf] %v2371
    %v2378 = vld [vmem:[#allocation2] sm:$0xff]
    %v2379 = vld [vmem:[#allocation2 + $0x8] sm:$0xff]
    %v2380 = vld [vmem:[#allocation2 + $0x10] sm:$0xf]
    %v2381 = vld [vmem:[#allocation2 + $0x18] sm:$0xf]
    %v2382 = vpack.c.bf16 %v2380, %v2378
    %v2383 = vpack.c.bf16 %v2381, %v2379
    %s2384 = scalar_lea.vmem %s6, 1024
    %v2385 = vld [vmem:[%s2384] sm:$0xff]
    %v2386 = vld [vmem:[%s2384 + $0x8] sm:$0xff]
    %v2387 = vld [vmem:[%s2384 + $0x10] sm:$0xff]
    %v2388 = vld [vmem:[%s2384 + $0x18] sm:$0xff]
    %v2389 = vld [vmem:[%s2384 + $0x20] sm:$0xff]
    %v2390 = vld [vmem:[%s2384 + $0x28] sm:$0xff]
    %v2391 = vld [vmem:[%s2384 + $0x30] sm:$0xff]
    %v2392 = vld [vmem:[%s2384 + $0x38] sm:$0xff]
    %v2393 = vld [vmem:[%s2384 + $0x40] sm:$0xff]
    %v2394 = vld [vmem:[%s2384 + $0x48] sm:$0xff]
    %v2395 = vld [vmem:[%s2384 + $0x50] sm:$0xff]
    %v2396 = vld [vmem:[%s2384 + $0x58] sm:$0xff]
    %v2397 = vld [vmem:[%s2384 + $0x60] sm:$0xff]
    %v2398 = vld [vmem:[%s2384 + $0x68] sm:$0xff]
    %v2399 = vld [vmem:[%s2384 + $0x70] sm:$0xff]
    %v2400 = vld [vmem:[%s2384 + $0x78] sm:$0xff]
    %v2401 = vld [vmem:[%s2384 + $0x80] sm:$0xff]
    %v2402 = vld [vmem:[%s2384 + $0x88] sm:$0xff]
    %v2403 = vld [vmem:[%s2384 + $0x90] sm:$0xff]
    %v2404 = vld [vmem:[%s2384 + $0x98] sm:$0xff]
    %v2405 = vld [vmem:[%s2384 + $0xa0] sm:$0xff]
    %v2406 = vld [vmem:[%s2384 + $0xa8] sm:$0xff]
    %v2407 = vld [vmem:[%s2384 + $0xb0] sm:$0xff]
    %v2408 = vld [vmem:[%s2384 + $0xb8] sm:$0xff]
    %v2409 = vld [vmem:[%s2384 + $0xc0] sm:$0xff]
    %v2410 = vld [vmem:[%s2384 + $0xc8] sm:$0xff]
    %v2411 = vld [vmem:[%s2384 + $0xd0] sm:$0xff]
    %v2412 = vld [vmem:[%s2384 + $0xd8] sm:$0xff]
    %v2413 = vld [vmem:[%s2384 + $0xe0] sm:$0xff]
    %v2414 = vld [vmem:[%s2384 + $0xe8] sm:$0xff]
    %v2415 = vld [vmem:[%s2384 + $0xf0] sm:$0xff]
    %v2416 = vld [vmem:[%s2384 + $0xf8] sm:$0xff]
    %v2449 = vunpack.c.l.b16 %v2385
    %v2450 = vunpack.c.h.b16 %v2385
    %v2451 = vunpack.c.l.b16 %v2386
    %v2452 = vunpack.c.h.b16 %v2386
    %v2453 = vunpack.c.l.b16 %v2387
    %v2454 = vunpack.c.h.b16 %v2387
    %v2455 = vunpack.c.l.b16 %v2388
    %v2456 = vunpack.c.h.b16 %v2388
    %v2457 = vunpack.c.l.b16 %v2389
    %v2458 = vunpack.c.h.b16 %v2389
    %v2459 = vunpack.c.l.b16 %v2390
    %v2460 = vunpack.c.h.b16 %v2390
    %v2461 = vunpack.c.l.b16 %v2391
    %v2462 = vunpack.c.h.b16 %v2391
    %v2463 = vunpack.c.l.b16 %v2392
    %v2464 = vunpack.c.h.b16 %v2392
    %v2465 = vunpack.c.l.b16 %v2393
    %v2466 = vunpack.c.h.b16 %v2393
    %v2467 = vunpack.c.l.b16 %v2394
    %v2468 = vunpack.c.h.b16 %v2394
    %v2469 = vunpack.c.l.b16 %v2395
    %v2470 = vunpack.c.h.b16 %v2395
    %v2471 = vunpack.c.l.b16 %v2396
    %v2472 = vunpack.c.h.b16 %v2396
    %v2473 = vunpack.c.l.b16 %v2397
    %v2474 = vunpack.c.h.b16 %v2397
    %v2475 = vunpack.c.l.b16 %v2398
    %v2476 = vunpack.c.h.b16 %v2398
    %v2477 = vunpack.c.l.b16 %v2399
    %v2478 = vunpack.c.h.b16 %v2399
    %v2479 = vunpack.c.l.b16 %v2400
    %v2480 = vunpack.c.h.b16 %v2400
    %v2481 = vunpack.c.l.b16 %v2401
    %v2482 = vunpack.c.h.b16 %v2401
    %v2483 = vunpack.c.l.b16 %v2402
    %v2484 = vunpack.c.h.b16 %v2402
    %v2485 = vunpack.c.l.b16 %v2403
    %v2486 = vunpack.c.h.b16 %v2403
    %v2487 = vunpack.c.l.b16 %v2404
    %v2488 = vunpack.c.h.b16 %v2404
    %v2489 = vunpack.c.l.b16 %v2405
    %v2490 = vunpack.c.h.b16 %v2405
    %v2491 = vunpack.c.l.b16 %v2406
    %v2492 = vunpack.c.h.b16 %v2406
    %v2493 = vunpack.c.l.b16 %v2407
    %v2494 = vunpack.c.h.b16 %v2407
    %v2495 = vunpack.c.l.b16 %v2408
    %v2496 = vunpack.c.h.b16 %v2408
    %v2497 = vunpack.c.l.b16 %v2409
    %v2498 = vunpack.c.h.b16 %v2409
    %v2499 = vunpack.c.l.b16 %v2410
    %v2500 = vunpack.c.h.b16 %v2410
    %v2501 = vunpack.c.l.b16 %v2411
    %v2502 = vunpack.c.h.b16 %v2411
    %v2503 = vunpack.c.l.b16 %v2412
    %v2504 = vunpack.c.h.b16 %v2412
    %v2505 = vunpack.c.l.b16 %v2413
    %v2506 = vunpack.c.h.b16 %v2413
    %v2507 = vunpack.c.l.b16 %v2414
    %v2508 = vunpack.c.h.b16 %v2414
    %v2509 = vunpack.c.l.b16 %v2415
    %v2510 = vunpack.c.h.b16 %v2415
    %v2511 = vunpack.c.l.b16 %v2416
    %v2512 = vunpack.c.h.b16 %v2416
    %v2513 = vpack.c.b16 %v2451, %v2449
    %v2514 = vpack.c.b16 %v2452, %v2450
    %v2515 = vpack.c.b16 %v2455, %v2453
    %v2516 = vpack.c.b16 %v2456, %v2454
    %v2517 = vpack.c.b16 %v2459, %v2457
    %v2518 = vpack.c.b16 %v2460, %v2458
    %v2519 = vpack.c.b16 %v2463, %v2461
    %v2520 = vpack.c.b16 %v2464, %v2462
    %v2521 = vpack.c.b16 %v2467, %v2465
    %v2522 = vpack.c.b16 %v2468, %v2466
    %v2523 = vpack.c.b16 %v2471, %v2469
    %v2524 = vpack.c.b16 %v2472, %v2470
    %v2525 = vpack.c.b16 %v2475, %v2473
    %v2526 = vpack.c.b16 %v2476, %v2474
    %v2527 = vpack.c.b16 %v2479, %v2477
    %v2528 = vpack.c.b16 %v2480, %v2478
    %v2529 = vpack.c.b16 %v2483, %v2481
    %v2530 = vpack.c.b16 %v2484, %v2482
    %v2531 = vpack.c.b16 %v2487, %v2485
    %v2532 = vpack.c.b16 %v2488, %v2486
    %v2533 = vpack.c.b16 %v2491, %v2489
    %v2534 = vpack.c.b16 %v2492, %v2490
    %v2535 = vpack.c.b16 %v2495, %v2493
    %v2536 = vpack.c.b16 %v2496, %v2494
    %v2537 = vpack.c.b16 %v2499, %v2497
    %v2538 = vpack.c.b16 %v2500, %v2498
    %v2539 = vpack.c.b16 %v2503, %v2501
    %v2540 = vpack.c.b16 %v2504, %v2502
    %v2541 = vpack.c.b16 %v2507, %v2505
    %v2542 = vpack.c.b16 %v2508, %v2506
    %v2543 = vpack.c.b16 %v2511, %v2509
    %v2544 = vpack.c.b16 %v2512, %v2510
    %2577 = vmatprep.subr.bf16.mxu0 %v2514
    %2578 = vmatpush1.bf16.msra.mxu0 %v2513
    %2579 = vmatprep.subr.bf16.mxu0 %v2516
    %2580 = vmatpush1.bf16.msra.mxu0 %v2515
    %2581 = vmatprep.subr.bf16.mxu0 %v2518
    %2582 = vmatpush1.bf16.msra.mxu0 %v2517
    %2583 = vmatprep.subr.bf16.mxu0 %v2520
    %2584 = vmatpush1.bf16.msra.mxu0 %v2519
    %2585 = vmatprep.subr.bf16.mxu0 %v2522
    %2586 = vmatpush1.bf16.msra.mxu0 %v2521
    %2587 = vmatprep.subr.bf16.mxu0 %v2524
    %2588 = vmatpush1.bf16.msra.mxu0 %v2523
    %2589 = vmatprep.subr.bf16.mxu0 %v2526
    %2590 = vmatpush1.bf16.msra.mxu0 %v2525
    %2591 = vmatprep.subr.bf16.mxu0 %v2528
    %2592 = vmatpush1.bf16.msra.mxu0 %v2527
    %2593 = vmatprep.subr.bf16.mxu0 %v2530
    %2594 = vmatpush1.bf16.msra.mxu0 %v2529
    %2595 = vmatprep.subr.bf16.mxu0 %v2532
    %2596 = vmatpush1.bf16.msra.mxu0 %v2531
    %2597 = vmatprep.subr.bf16.mxu0 %v2534
    %2598 = vmatpush1.bf16.msra.mxu0 %v2533
    %2599 = vmatprep.subr.bf16.mxu0 %v2536
    %2600 = vmatpush1.bf16.msra.mxu0 %v2535
    %2601 = vmatprep.subr.bf16.mxu0 %v2538
    %2602 = vmatpush1.bf16.msra.mxu0 %v2537
    %2603 = vmatprep.subr.bf16.mxu0 %v2540
    %2604 = vmatpush1.bf16.msra.mxu0 %v2539
    %2605 = vmatprep.subr.bf16.mxu0 %v2542
    %2606 = vmatpush1.bf16.msra.mxu0 %v2541
    %2607 = vmatprep.subr.bf16.mxu0 %v2544
    %2608 = vmatpush1.bf16.msra.mxu0 %v2543
    %2609 = vmatprep.mubr.bf16.mxu0 %v2383
    %2610 = vmatmul.mubr.bf16.gmra.mrb[0].mxu0 %v2382
    %v2611 = vpop.f32.mrb[0].mxu0
    %v2612 = vadd.f32 0.0, %v2611
    %v2613 = vpop.f32.mrb[0].mxu0
    %v2614 = vadd.f32 0.0, %v2613
    %v2615 = vpop.f32.mrb[0].mxu0
    %v2616 = vadd.f32 0.0, %v2615
    %v2617 = vpop.f32.mrb[0].mxu0
    %v2618 = vadd.f32 0.0, %v2617
    %2619 = vdwg.mxu0
    %v2620 = vadd.f32 %v2360, %v2612
    %v2621 = vadd.f32 %v2361, %v2614
    %v2622 = vadd.f32 %v2362, %v2616
    %v2623 = vadd.f32 %v2363, %v2618
    %vm2624 = vcmask 1043456
    %v2625 = vsel %vm2624, %v2622, 0.0
    %v2626 = vadd.f32 %v2620, %v2625
    %v2627 = vrot.slane %v2626, 4
    %v2628 = vadd.f32 %v2626, %v2627
    %v2629 = vrot.slane %v2628, 2
    %v2630 = vadd.f32 %v2628, %v2629
    %v2631 = vrot.slane %v2630, 1
    %v2632 = vadd.f32 %v2630, %v2631
    %v2633 = vsel %vm2624, %v2623, 0.0
    %v2634 = vadd.f32 %v2621, %v2633
    %v2635 = vrot.slane %v2634, 4
    %v2636 = vadd.f32 %v2634, %v2635
    %v2637 = vrot.slane %v2636, 2
    %v2638 = vadd.f32 %v2636, %v2637
    %v2639 = vrot.slane %v2638, 1
    %v2640 = vadd.f32 %v2638, %v2639
    %v2641 = vld [vmem:[#allocation7] sm:$0xff]
    %v2642 = vld [vmem:[#allocation7 + $0x8] sm:$0xff]
    %v2643 = vld [vmem:[#allocation7 + $0x10] sm:$0xff]
    %v2644 = vld [vmem:[#allocation7 + $0x18] sm:$0xff]
    %v2645 = vld [vmem:[#allocation7 + $0x20] sm:$0xff]
    %v2646 = vld [vmem:[#allocation7 + $0x28] sm:$0xff]
    %v2647 = vld [vmem:[#allocation7 + $0x30] sm:$0xff]
    %v2648 = vld [vmem:[#allocation7 + $0x38] sm:$0xff]
    %v2649 = vld [vmem:[#allocation7 + $0x40] sm:$0xff]
    %v2650 = vld [vmem:[#allocation7 + $0x48] sm:$0xff]
    %v2651 = vld [vmem:[#allocation7 + $0x50] sm:$0xff]
    %v2652 = vld [vmem:[#allocation7 + $0x58] sm:$0xff]
    %v2653 = vld [vmem:[#allocation7 + $0x60] sm:$0xff]
    %v2654 = vld [vmem:[#allocation7 + $0x68] sm:$0xff]
    %v2655 = vld [vmem:[#allocation7 + $0x70] sm:$0xff]
    %v2656 = vld [vmem:[#allocation7 + $0x78] sm:$0xff]
    %v2657 = vld [vmem:[#allocation7 + $0x80] sm:$0xff]
    %v2658 = vld [vmem:[#allocation7 + $0x88] sm:$0xff]
    %v2659 = vld [vmem:[#allocation7 + $0x90] sm:$0xff]
    %v2660 = vld [vmem:[#allocation7 + $0x98] sm:$0xff]
    %v2661 = vld [vmem:[#allocation7 + $0xa0] sm:$0xff]
    %v2662 = vld [vmem:[#allocation7 + $0xa8] sm:$0xff]
    %v2663 = vld [vmem:[#allocation7 + $0xb0] sm:$0xff]
    %v2664 = vld [vmem:[#allocation7 + $0xb8] sm:$0xff]
    %v2665 = vld [vmem:[#allocation7 + $0xc0] sm:$0xff]
    %v2666 = vld [vmem:[#allocation7 + $0xc8] sm:$0xff]
    %v2667 = vld [vmem:[#allocation7 + $0xd0] sm:$0xff]
    %v2668 = vld [vmem:[#allocation7 + $0xd8] sm:$0xff]
    %v2669 = vld [vmem:[#allocation7 + $0xe0] sm:$0xff]
    %v2670 = vld [vmem:[#allocation7 + $0xe8] sm:$0xff]
    %v2671 = vld [vmem:[#allocation7 + $0xf0] sm:$0xff]
    %v2672 = vld [vmem:[#allocation7 + $0xf8] sm:$0xff]
    %2673 = vmatprep.subr.mxu0 0.0
    %2674 = vmatpush1.msra.mxu0 %v2641
    %2675 = vmatprep.subr.mxu0 0.0
    %2676 = vmatpush1.msra.mxu0 %v2642
    %2677 = vmatprep.subr.mxu0 0.0
    %2678 = vmatpush1.msra.mxu0 %v2643
    %2679 = vmatprep.subr.mxu0 0.0
    %2680 = vmatpush1.msra.mxu0 %v2644
    %2681 = vmatprep.subr.mxu0 0.0
    %2682 = vmatpush1.msra.mxu0 %v2645
    %2683 = vmatprep.subr.mxu0 0.0
    %2684 = vmatpush1.msra.mxu0 %v2646
    %2685 = vmatprep.subr.mxu0 0.0
    %2686 = vmatpush1.msra.mxu0 %v2647
    %2687 = vmatprep.subr.mxu0 0.0
    %2688 = vmatpush1.msra.mxu0 %v2648
    %2689 = vmatprep.subr.mxu0 0.0
    %2690 = vmatpush1.msra.mxu0 %v2649
    %2691 = vmatprep.subr.mxu0 0.0
    %2692 = vmatpush1.msra.mxu0 %v2650
    %2693 = vmatprep.subr.mxu0 0.0
    %2694 = vmatpush1.msra.mxu0 %v2651
    %2695 = vmatprep.subr.mxu0 0.0
    %2696 = vmatpush1.msra.mxu0 %v2652
    %2697 = vmatprep.subr.mxu0 0.0
    %2698 = vmatpush1.msra.mxu0 %v2653
    %2699 = vmatprep.subr.mxu0 0.0
    %2700 = vmatpush1.msra.mxu0 %v2654
    %2701 = vmatprep.subr.mxu0 0.0
    %2702 = vmatpush1.msra.mxu0 %v2655
    %2703 = vmatprep.subr.mxu0 0.0
    %2704 = vmatpush1.msra.mxu0 %v2656
    %2705 = vmatprep.subr.mxu0 0.0
    %2706 = vmatpush1.msra.mxu0 %v2657
    %2707 = vmatprep.subr.mxu0 0.0
    %2708 = vmatpush1.msra.mxu0 %v2658
    %2709 = vmatprep.subr.mxu0 0.0
    %2710 = vmatpush1.msra.mxu0 %v2659
    %2711 = vmatprep.subr.mxu0 0.0
    %2712 = vmatpush1.msra.mxu0 %v2660
    %2713 = vmatprep.subr.mxu0 0.0
    %2714 = vmatpush1.msra.mxu0 %v2661
    %2715 = vmatprep.subr.mxu0 0.0
    %2716 = vmatpush1.msra.mxu0 %v2662
    %2717 = vmatprep.subr.mxu0 0.0
    %2718 = vmatpush1.msra.mxu0 %v2663
    %2719 = vmatprep.subr.mxu0 0.0
    %2720 = vmatpush1.msra.mxu0 %v2664
    %2721 = vmatprep.subr.mxu0 0.0
    %2722 = vmatpush1.msra.mxu0 %v2665
    %2723 = vmatprep.subr.mxu0 0.0
    %2724 = vmatpush1.msra.mxu0 %v2666
    %2725 = vmatprep.subr.mxu0 0.0
    %2726 = vmatpush1.msra.mxu0 %v2667
    %2727 = vmatprep.subr.mxu0 0.0
    %2728 = vmatpush1.msra.mxu0 %v2668
    %2729 = vmatprep.subr.mxu0 0.0
    %2730 = vmatpush1.msra.mxu0 %v2669
    %2731 = vmatprep.subr.mxu0 0.0
    %2732 = vmatpush1.msra.mxu0 %v2670
    %2733 = vmatprep.subr.mxu0 0.0
    %2734 = vmatpush1.msra.mxu0 %v2671
    %2735 = vmatprep.subr.mxu0 0.0
    %2736 = vmatpush1.msra.mxu0 %v2672
    %2737 = vmatprep.mubr.f32.mxu0 %v2640
    %2738 = vmatmul.mubr.f32.gmra.mrb[0].mxu0 %v2632
    %v2739 = vpop.f32.mrb[0].mxu0
    %v2740 = vadd.f32 0.0, %v2739
    %v2741 = vpop.f32.mrb[0].mxu0
    %2742 = vdwg.mxu0
    %v2743 = vmul.f32 %v2740, 0.013888889
    %v2744 = vld [vmem:[#allocation9] sm:$0xff]
    %v2745 = vld [vmem:[#allocation9 + $0x8] sm:$0xff]
    %v2746 = vld [vmem:[#allocation9 + $0x10] sm:$0xff]
    %v2747 = vld [vmem:[#allocation9 + $0x18] sm:$0xff]
    %v2748 = vld [vmem:[#allocation9 + $0x20] sm:$0xff]
    %v2749 = vld [vmem:[#allocation9 + $0x28] sm:$0xff]
    %v2750 = vld [vmem:[#allocation9 + $0x30] sm:$0xff]
    %v2751 = vld [vmem:[#allocation9 + $0x38] sm:$0xff]
    %v2752 = vld [vmem:[#allocation9 + $0x40] sm:$0xff]
    %v2753 = vld [vmem:[#allocation9 + $0x48] sm:$0xff]
    %v2754 = vld [vmem:[#allocation9 + $0x50] sm:$0xff]
    %v2755 = vld [vmem:[#allocation9 + $0x58] sm:$0xff]
    %v2756 = vld [vmem:[#allocation9 + $0x60] sm:$0xff]
    %v2757 = vld [vmem:[#allocation9 + $0x68] sm:$0xff]
    %v2758 = vld [vmem:[#allocation9 + $0x70] sm:$0xff]
    %v2759 = vld [vmem:[#allocation9 + $0x78] sm:$0xff]
    %v2760 = vld [vmem:[#allocation9 + $0x80] sm:$0xff]
    %v2761 = vld [vmem:[#allocation9 + $0x88] sm:$0xff]
    %v2762 = vld [vmem:[#allocation9 + $0x90] sm:$0xff]
    %v2763 = vld [vmem:[#allocation9 + $0x98] sm:$0xff]
    %v2764 = vld [vmem:[#allocation9 + $0xa0] sm:$0xff]
    %v2765 = vld [vmem:[#allocation9 + $0xa8] sm:$0xff]
    %v2766 = vld [vmem:[#allocation9 + $0xb0] sm:$0xff]
    %v2767 = vld [vmem:[#allocation9 + $0xb8] sm:$0xff]
    %v2768 = vld [vmem:[#allocation9 + $0xc0] sm:$0xff]
    %v2769 = vld [vmem:[#allocation9 + $0xc8] sm:$0xff]
    %v2770 = vld [vmem:[#allocation9 + $0xd0] sm:$0xff]
    %v2771 = vld [vmem:[#allocation9 + $0xd8] sm:$0xff]
    %v2772 = vld [vmem:[#allocation9 + $0xe0] sm:$0xff]
    %v2773 = vld [vmem:[#allocation9 + $0xe8] sm:$0xff]
    %v2774 = vld [vmem:[#allocation9 + $0xf0] sm:$0xff]
    %v2775 = vld [vmem:[#allocation9 + $0xf8] sm:$0xff]
    %2776 = vmatprep.subr.mxu0 %v2745
    %2777 = vmatpush1.msra.mxu0 %v2744
    %2778 = vmatprep.subr.mxu0 %v2747
    %2779 = vmatpush1.msra.mxu0 %v2746
    %2780 = vmatprep.subr.mxu0 %v2749
    %2781 = vmatpush1.msra.mxu0 %v2748
    %2782 = vmatprep.subr.mxu0 %v2751
    %2783 = vmatpush1.msra.mxu0 %v2750
    %2784 = vmatprep.subr.mxu0 %v2753
    %2785 = vmatpush1.msra.mxu0 %v2752
    %2786 = vmatprep.subr.mxu0 %v2755
    %2787 = vmatpush1.msra.mxu0 %v2754
    %2788 = vmatprep.subr.mxu0 %v2757
    %2789 = vmatpush1.msra.mxu0 %v2756
    %2790 = vmatprep.subr.mxu0 %v2759
    %2791 = vmatpush1.msra.mxu0 %v2758
    %2792 = vmatprep.subr.mxu0 %v2761
    %2793 = vmatpush1.msra.mxu0 %v2760
    %2794 = vmatprep.subr.mxu0 %v2763
    %2795 = vmatpush1.msra.mxu0 %v2762
    %2796 = vmatprep.subr.mxu0 %v2765
    %2797 = vmatpush1.msra.mxu0 %v2764
    %2798 = vmatprep.subr.mxu0 %v2767
    %2799 = vmatpush1.msra.mxu0 %v2766
    %2800 = vmatprep.subr.mxu0 %v2769
    %2801 = vmatpush1.msra.mxu0 %v2768
    %2802 = vmatprep.subr.mxu0 %v2771
    %2803 = vmatpush1.msra.mxu0 %v2770
    %2804 = vmatprep.subr.mxu0 %v2773
    %2805 = vmatpush1.msra.mxu0 %v2772
    %2806 = vmatprep.subr.mxu0 %v2775
    %2807 = vmatpush1.msra.mxu0 %v2774
    %2808 = vmatprep.subr.mxu0 0.0
    %2809 = vmatpush1.msra.mxu0 0.0
    %2810 = vmatprep.subr.mxu0 0.0
    %2811 = vmatpush1.msra.mxu0 0.0
    %2812 = vmatprep.subr.mxu0 0.0
    %2813 = vmatpush1.msra.mxu0 0.0
    %2814 = vmatprep.subr.mxu0 0.0
    %2815 = vmatpush1.msra.mxu0 0.0
    %2816 = vmatprep.subr.mxu0 0.0
    %2817 = vmatpush1.msra.mxu0 0.0
    %2818 = vmatprep.subr.mxu0 0.0
    %2819 = vmatpush1.msra.mxu0 0.0
    %2820 = vmatprep.subr.mxu0 0.0
    %2821 = vmatpush1.msra.mxu0 0.0
    %2822 = vmatprep.subr.mxu0 0.0
    %2823 = vmatpush1.msra.mxu0 0.0
    %2824 = vmatprep.subr.mxu0 0.0
    %2825 = vmatpush1.msra.mxu0 0.0
    %2826 = vmatprep.subr.mxu0 0.0
    %2827 = vmatpush1.msra.mxu0 0.0
    %2828 = vmatprep.subr.mxu0 0.0
    %2829 = vmatpush1.msra.mxu0 0.0
    %2830 = vmatprep.subr.mxu0 0.0
    %2831 = vmatpush1.msra.mxu0 0.0
    %2832 = vmatprep.subr.mxu0 0.0
    %2833 = vmatpush1.msra.mxu0 0.0
    %2834 = vmatprep.subr.mxu0 0.0
    %2835 = vmatpush1.msra.mxu0 0.0
    %2836 = vmatprep.subr.mxu0 0.0
    %2837 = vmatpush1.msra.mxu0 0.0
    %2838 = vmatprep.subr.mxu0 0.0
    %2839 = vmatpush1.msra.mxu0 0.0
    %2840 = vmatprep.mubr.f32.mxu0 0.0
    %2841 = vmatmul.mubr.f32.gmra.mrb[0].mxu0 %v2743
    %v2842 = vpop.f32.mrb[0].mxu0
    %v2843 = vadd.f32 0.0, %v2842
    %v2844 = vpop.f32.mrb[0].mxu0
    %v2845 = vadd.f32 0.0, %v2844
    %2846 = vdwg.mxu0
    %v2847 = vlaneseq
    %v2848 = vshrl.u32 %v2847, 7
    %v2849 = vsub.s32 0, %v2848
    %v2850 = vrot.slane %v2843, %v2849
    %v2851 = vlaneseq
    %v2852 = vshrl.u32 %v2851, 7
    %v2853 = vsub.s32 0, %v2852
    %v2854 = vrot.slane %v2845, %v2853
    %v2855 = vsub.f32 %v2620, %v2850
    %v2856 = vsub.f32 %v2621, %v2854
    %v2857 = vsub.f32 %v2622, %v2850
    %v2858 = vsub.f32 %v2623, %v2854
    %v2859 = vmul.f32 %v2855, %v2855
    %v2860 = vmul.f32 %v2856, %v2856
    %v2861 = vmul.f32 %v2857, %v2857
    %v2862 = vmul.f32 %v2858, %v2858
    %v2863 = vsel %vm2624, %v2861, 0.0
    %v2864 = vadd.f32 %v2859, %v2863
    %v2865 = vrot.slane %v2864, 4
    %v2866 = vadd.f32 %v2864, %v2865
    %v2867 = vrot.slane %v2866, 2
    %v2868 = vadd.f32 %v2866, %v2867
    %v2869 = vrot.slane %v2868, 1
    %v2870 = vadd.f32 %v2868, %v2869
    %v2871 = vsel %vm2624, %v2862, 0.0
    %v2872 = vadd.f32 %v2860, %v2871
    %v2873 = vrot.slane %v2872, 4
    %v2874 = vadd.f32 %v2872, %v2873
    %v2875 = vrot.slane %v2874, 2
    %v2876 = vadd.f32 %v2874, %v2875
    %v2877 = vrot.slane %v2876, 1
    %v2878 = vadd.f32 %v2876, %v2877
    %2879 = vmatprep.subr.mxu0 0.0
    %2880 = vmatpush1.msra.mxu0 %v2641
    %2881 = vmatprep.subr.mxu0 0.0
    %2882 = vmatpush1.msra.mxu0 %v2642
    %2883 = vmatprep.subr.mxu0 0.0
    %2884 = vmatpush1.msra.mxu0 %v2643
    %2885 = vmatprep.subr.mxu0 0.0
    %2886 = vmatpush1.msra.mxu0 %v2644
    %2887 = vmatprep.subr.mxu0 0.0
    %2888 = vmatpush1.msra.mxu0 %v2645
    %2889 = vmatprep.subr.mxu0 0.0
    %2890 = vmatpush1.msra.mxu0 %v2646
    %2891 = vmatprep.subr.mxu0 0.0
    %2892 = vmatpush1.msra.mxu0 %v2647
    %2893 = vmatprep.subr.mxu0 0.0
    %2894 = vmatpush1.msra.mxu0 %v2648
    %2895 = vmatprep.subr.mxu0 0.0
    %2896 = vmatpush1.msra.mxu0 %v2649
    %2897 = vmatprep.subr.mxu0 0.0
    %2898 = vmatpush1.msra.mxu0 %v2650
    %2899 = vmatprep.subr.mxu0 0.0
    %2900 = vmatpush1.msra.mxu0 %v2651
    %2901 = vmatprep.subr.mxu0 0.0
    %2902 = vmatpush1.msra.mxu0 %v2652
    %2903 = vmatprep.subr.mxu0 0.0
    %2904 = vmatpush1.msra.mxu0 %v2653
    %2905 = vmatprep.subr.mxu0 0.0
    %2906 = vmatpush1.msra.mxu0 %v2654
    %2907 = vmatprep.subr.mxu0 0.0
    %2908 = vmatpush1.msra.mxu0 %v2655
    %2909 = vmatprep.subr.mxu0 0.0
    %2910 = vmatpush1.msra.mxu0 %v2656
    %2911 = vmatprep.subr.mxu0 0.0
    %2912 = vmatpush1.msra.mxu0 %v2657
    %2913 = vmatprep.subr.mxu0 0.0
    %2914 = vmatpush1.msra.mxu0 %v2658
    %2915 = vmatprep.subr.mxu0 0.0
    %2916 = vmatpush1.msra.mxu0 %v2659
    %2917 = vmatprep.subr.mxu0 0.0
    %2918 = vmatpush1.msra.mxu0 %v2660
    %2919 = vmatprep.subr.mxu0 0.0
    %2920 = vmatpush1.msra.mxu0 %v2661
    %2921 = vmatprep.subr.mxu0 0.0
    %2922 = vmatpush1.msra.mxu0 %v2662
    %2923 = vmatprep.subr.mxu0 0.0
    %2924 = vmatpush1.msra.mxu0 %v2663
    %2925 = vmatprep.subr.mxu0 0.0
    %2926 = vmatpush1.msra.mxu0 %v2664
    %2927 = vmatprep.subr.mxu0 0.0
    %2928 = vmatpush1.msra.mxu0 %v2665
    %2929 = vmatprep.subr.mxu0 0.0
    %2930 = vmatpush1.msra.mxu0 %v2666
    %2931 = vmatprep.subr.mxu0 0.0
    %2932 = vmatpush1.msra.mxu0 %v2667
    %2933 = vmatprep.subr.mxu0 0.0
    %2934 = vmatpush1.msra.mxu0 %v2668
    %2935 = vmatprep.subr.mxu0 0.0
    %2936 = vmatpush1.msra.mxu0 %v2669
    %2937 = vmatprep.subr.mxu0 0.0
    %2938 = vmatpush1.msra.mxu0 %v2670
    %2939 = vmatprep.subr.mxu0 0.0
    %2940 = vmatpush1.msra.mxu0 %v2671
    %2941 = vmatprep.subr.mxu0 0.0
    %2942 = vmatpush1.msra.mxu0 %v2672
    %2943 = vmatprep.mubr.f32.mxu0 %v2878
    %2944 = vmatmul.mubr.f32.gmra.mrb[0].mxu0 %v2870
    %v2945 = vpop.f32.mrb[0].mxu0
    %v2946 = vadd.f32 0.0, %v2945
    %v2947 = vpop.f32.mrb[0].mxu0
    %2948 = vdwg.mxu0
    %v2949 = vmul.f32 %v2946, 0.013888889
    %2950 = vmatprep.subr.mxu0 %v2745
    %2951 = vmatpush1.msra.mxu0 %v2744
    %2952 = vmatprep.subr.mxu0 %v2747
    %2953 = vmatpush1.msra.mxu0 %v2746
    %2954 = vmatprep.subr.mxu0 %v2749
    %2955 = vmatpush1.msra.mxu0 %v2748
    %2956 = vmatprep.subr.mxu0 %v2751
    %2957 = vmatpush1.msra.mxu0 %v2750
    %2958 = vmatprep.subr.mxu0 %v2753
    %2959 = vmatpush1.msra.mxu0 %v2752
    %2960 = vmatprep.subr.mxu0 %v2755
    %2961 = vmatpush1.msra.mxu0 %v2754
    %2962 = vmatprep.subr.mxu0 %v2757
    %2963 = vmatpush1.msra.mxu0 %v2756
    %2964 = vmatprep.subr.mxu0 %v2759
    %2965 = vmatpush1.msra.mxu0 %v2758
    %2966 = vmatprep.subr.mxu0 %v2761
    %2967 = vmatpush1.msra.mxu0 %v2760
    %2968 = vmatprep.subr.mxu0 %v2763
    %2969 = vmatpush1.msra.mxu0 %v2762
    %2970 = vmatprep.subr.mxu0 %v2765
    %2971 = vmatpush1.msra.mxu0 %v2764
    %2972 = vmatprep.subr.mxu0 %v2767
    %2973 = vmatpush1.msra.mxu0 %v2766
    %2974 = vmatprep.subr.mxu0 %v2769
    %2975 = vmatpush1.msra.mxu0 %v2768
    %2976 = vmatprep.subr.mxu0 %v2771
    %2977 = vmatpush1.msra.mxu0 %v2770
    %2978 = vmatprep.subr.mxu0 %v2773
    %2979 = vmatpush1.msra.mxu0 %v2772
    %2980 = vmatprep.subr.mxu0 %v2775
    %2981 = vmatpush1.msra.mxu0 %v2774
    %2982 = vmatprep.subr.mxu0 0.0
    %2983 = vmatpush1.msra.mxu0 0.0
    %2984 = vmatprep.subr.mxu0 0.0
    %2985 = vmatpush1.msra.mxu0 0.0
    %2986 = vmatprep.subr.mxu0 0.0
    %2987 = vmatpush1.msra.mxu0 0.0
    %2988 = vmatprep.subr.mxu0 0.0
    %2989 = vmatpush1.msra.mxu0 0.0
    %2990 = vmatprep.subr.mxu0 0.0
    %2991 = vmatpush1.msra.mxu0 0.0
    %2992 = vmatprep.subr.mxu0 0.0
    %2993 = vmatpush1.msra.mxu0 0.0
    %2994 = vmatprep.subr.mxu0 0.0
    %2995 = vmatpush1.msra.mxu0 0.0
    %2996 = vmatprep.subr.mxu0 0.0
    %2997 = vmatpush1.msra.mxu0 0.0
    %2998 = vmatprep.subr.mxu0 0.0
    %2999 = vmatpush1.msra.mxu0 0.0
    %3000 = vmatprep.subr.mxu0 0.0
    %3001 = vmatpush1.msra.mxu0 0.0
    %3002 = vmatprep.subr.mxu0 0.0
    %3003 = vmatpush1.msra.mxu0 0.0
    %3004 = vmatprep.subr.mxu0 0.0
    %3005 = vmatpush1.msra.mxu0 0.0
    %3006 = vmatprep.subr.mxu0 0.0
    %3007 = vmatpush1.msra.mxu0 0.0
    %3008 = vmatprep.subr.mxu0 0.0
    %3009 = vmatpush1.msra.mxu0 0.0
    %3010 = vmatprep.subr.mxu0 0.0
    %3011 = vmatpush1.msra.mxu0 0.0
    %3012 = vmatprep.subr.mxu0 0.0
    %3013 = vmatpush1.msra.mxu0 0.0
    %3014 = vmatprep.mubr.f32.mxu0 0.0
    %3015 = vmatmul.mubr.f32.gmra.mrb[0].mxu0 %v2949
    %v3016 = vpop.f32.mrb[0].mxu0
    %v3017 = vadd.f32 1e-05, %v3016
    %v3018 = vpop.f32.mrb[0].mxu0
    %v3019 = vadd.f32 1e-05, %v3018
    %3020 = vdwg.mxu0
    %v3021 = vrsqrt.pop %v3017
    %v3022 = vrsqrt.pop %v3019
    %v3023 = vlaneseq
    %v3024 = vshrl.u32 %v3023, 7
    %v3025 = vsub.s32 0, %v3024
    %v3026 = vrot.slane %v3021, %v3025
    %v3027 = vlaneseq
    %v3028 = vshrl.u32 %v3027, 7
    %v3029 = vsub.s32 0, %v3028
    %v3030 = vrot.slane %v3022, %v3029
    %v3031 = vmul.f32 %v2855, %v3026
    %v3032 = vmul.f32 %v2856, %v3030
    %v3033 = vmul.f32 %v2857, %v3026
    %v3034 = vmul.f32 %v2858, %v3030
    %v3035 = vld [vmem:[%s7] sm:$0x3]
    %v3037 = vlaneseq
    %v3038 = vshrl.u32 %v3037, 7
    %v3039 = vsub.s32 0, %v3038
    %v3040 = vrot.slane %v3035, %v3039
    %v3041 = vlaneseq
    %v3042 = vshrl.u32 %v3041, 7
    %v3043 = vsub.s32 1, %v3042
    %v3044 = vrot.slane %v3035, %v3043
    %v3047 = vmul.f32 %v3031, %v3040
    %v3048 = vmul.f32 %v3032, %v3044
    %v3049 = vmul.f32 %v3033, %v3040
    %v3050 = vmul.f32 %v3034, %v3044
    %v3051 = vld [vmem:[%s8] sm:$0x3]
    %v3053 = vlaneseq
    %v3054 = vshrl.u32 %v3053, 7
    %v3055 = vsub.s32 0, %v3054
    %v3056 = vrot.slane %v3051, %v3055
    %v3057 = vlaneseq
    %v3058 = vshrl.u32 %v3057, 7
    %v3059 = vsub.s32 1, %v3058
    %v3060 = vrot.slane %v3051, %v3059
    %v3063 = vadd.f32 %v3047, %v3056
    %v3064 = vadd.f32 %v3048, %v3060
    %v3065 = vadd.f32 %v3049, %v3056
    %v3066 = vadd.f32 %v3050, %v3060
    %v3067 = vmax.f32 %v3063, 0.0
    %v3068 = vmax.f32 %v3064, 0.0
    %v3069 = vmax.f32 %v3065, 0.0
    %v3070 = vmax.f32 %v3066, 0.0
    %v3073 = vcombine.low %v3067, %v3068
    %v3075 = vunpack.c.l.s4 1966171168
    %v3076 = vunpack.c.0.s8 %v3075
    %v3077 = vlaneseq
    %v3078 = vshrl.u32 %v3077, 7
    %v3079 = vsub.s32 %v3076, %v3078
    %v3080 = vrot.slane %v3073, %v3079
    %v3082 = vunpack.c.l.s4 1966171168
    %v3083 = vunpack.c.0.s8 %v3082
    %v3084 = vlaneseq
    %v3085 = vshrl.u32 %v3084, 7
    %v3086 = vsub.s32 %v3083, %v3085
    %v3087 = vrot.slane %v3080, %v3086
    %v3089 = vlaneseq
    %vm3090 = vcmp.ge.s32.totalorder %v3089, 0
    %vm3091 = vcmp.lt.s32.totalorder %v3089, 256
    %vm3092 = vmand %vm3090, %vm3091
    %3093 = vst.msk [vmem:[#allocation3] ss:$2 sm:$0x3] %vm3092, %v3087
    %v3094 = vcombine.high %v3067, %v3068
    %v3096 = vunpack.c.l.s4 1966171168
    %v3097 = vunpack.c.0.s8 %v3096
    %v3098 = vlaneseq
    %v3099 = vshrl.u32 %v3098, 7
    %v3100 = vsub.s32 %v3097, %v3099
    %v3101 = vrot.slane %v3094, %v3100
    %v3103 = vunpack.c.l.s4 1966171168
    %v3104 = vunpack.c.0.s8 %v3103
    %v3105 = vlaneseq
    %v3106 = vshrl.u32 %v3105, 7
    %v3107 = vsub.s32 %v3104, %v3106
    %v3108 = vrot.slane %v3101, %v3107
    %v3109 = vcombine.high %v3108, %v3108
    %s3111 = scalar_lea.vmem [#allocation3], 1
    %3112 = vst.msk [vmem:[%s3111] ss:$2 sm:$0x3] %vm3092, %v3109
    %v3113 = vld [vmem:[#allocation3] sm:$0xf]
    %v3116 = vunpack.c.l.s4 1983009808
    %v3117 = vunpack.c.0.s8 %v3116
    %v3118 = vlaneseq
    %v3119 = vshrl.u32 %v3118, 7
    %v3120 = vsub.s32 %v3117, %v3119
    %v3121 = vrot.slane %v3113, %v3120
    %v3122 = vcombine.high %v3121, %v3121
    %v3125 = vpack.c.bf16 %v3121, %v3121
    %v3126 = vpack.c.bf16 %v3122, %v3122
    %v3127 = vld [vmem:[#allocation10] sm:$0xf]
    %v3128 = vld [vmem:[#allocation10 + $0x4] sm:$0xf]
    %v3129 = vld [vmem:[#allocation10 + $0x8] sm:$0xf]
    %v3130 = vld [vmem:[#allocation10 + $0xc] sm:$0xf]
    %v3131 = vld [vmem:[#allocation10 + $0x10] sm:$0xf]
    %v3132 = vld [vmem:[#allocation10 + $0x14] sm:$0xf]
    %v3133 = vld [vmem:[#allocation10 + $0x18] sm:$0xf]
    %v3134 = vld [vmem:[#allocation10 + $0x1c] sm:$0xf]
    %v3135 = vld [vmem:[#allocation10 + $0x20] sm:$0xf]
    %v3136 = vld [vmem:[#allocation10 + $0x24] sm:$0xf]
    %v3137 = vld [vmem:[#allocation10 + $0x28] sm:$0xf]
    %v3138 = vld [vmem:[#allocation10 + $0x2c] sm:$0xf]
    %v3139 = vld [vmem:[#allocation10 + $0x30] sm:$0xf]
    %v3140 = vld [vmem:[#allocation10 + $0x34] sm:$0xf]
    %v3141 = vld [vmem:[#allocation10 + $0x38] sm:$0xf]
    %v3142 = vld [vmem:[#allocation10 + $0x3c] sm:$0xf]
    %v3143 = vld [vmem:[#allocation10 + $0x40] sm:$0xf]
    %v3144 = vld [vmem:[#allocation10 + $0x44] sm:$0xf]
    %v3145 = vld [vmem:[#allocation10 + $0x48] sm:$0xf]
    %v3146 = vld [vmem:[#allocation10 + $0x4c] sm:$0xf]
    %v3147 = vld [vmem:[#allocation10 + $0x50] sm:$0xf]
    %v3148 = vld [vmem:[#allocation10 + $0x54] sm:$0xf]
    %v3149 = vld [vmem:[#allocation10 + $0x58] sm:$0xf]
    %v3150 = vld [vmem:[#allocation10 + $0x5c] sm:$0xf]
    %v3151 = vld [vmem:[#allocation10 + $0x60] sm:$0xf]
    %v3152 = vld [vmem:[#allocation10 + $0x64] sm:$0xf]
    %v3153 = vld [vmem:[#allocation10 + $0x68] sm:$0xf]
    %v3154 = vld [vmem:[#allocation10 + $0x6c] sm:$0xf]
    %v3155 = vld [vmem:[#allocation10 + $0x70] sm:$0xf]
    %v3156 = vld [vmem:[#allocation10 + $0x74] sm:$0xf]
    %v3157 = vld [vmem:[#allocation10 + $0x78] sm:$0xf]
    %v3158 = vld [vmem:[#allocation10 + $0x7c] sm:$0xf]
    %v3159 = vcombine.high %v3080, %v3080
    %v3161 = vunpack.c.l.s4 1966171168
    %v3162 = vunpack.c.0.s8 %v3161
    %v3163 = vlaneseq
    %v3164 = vshrl.u32 %v3163, 7
    %v3165 = vsub.s32 %v3162, %v3164
    %v3166 = vrot.slane %v3159, %v3165
    %3168 = vst.msk [vmem:[#allocation3] ss:$2 sm:$0x3] %vm3092, %v3166
    %v3169 = vcombine.high %v3101, %v3101
    %v3171 = vunpack.c.l.s4 1966171168
    %v3172 = vunpack.c.0.s8 %v3171
    %v3173 = vlaneseq
    %v3174 = vshrl.u32 %v3173, 7
    %v3175 = vsub.s32 %v3172, %v3174
    %v3176 = vrot.slane %v3169, %v3175
    %v3177 = vcombine.high %v3176, %v3176
    %3179 = vst.msk [vmem:[%s3111] ss:$2 sm:$0x3] %vm3092, %v3177
    %v3180 = vld [vmem:[#allocation3] sm:$0xf]
    %v3183 = vunpack.c.l.s4 1983009808
    %v3184 = vunpack.c.0.s8 %v3183
    %v3185 = vlaneseq
    %v3186 = vshrl.u32 %v3185, 7
    %v3187 = vsub.s32 %v3184, %v3186
    %v3188 = vrot.slane %v3180, %v3187
    %v3189 = vcombine.high %v3188, %v3188
    %v3192 = vpack.c.bf16 %v3188, %v3188
    %v3193 = vpack.c.bf16 %v3189, %v3189
    %s3194 = scalar_lea.vmem [#allocation10], 128
    %v3195 = vld [vmem:[%s3194] sm:$0xf]
    %v3196 = vld [vmem:[%s3194 + $0x4] sm:$0xf]
    %v3197 = vld [vmem:[%s3194 + $0x8] sm:$0xf]
    %v3198 = vld [vmem:[%s3194 + $0xc] sm:$0xf]
    %v3199 = vld [vmem:[%s3194 + $0x10] sm:$0xf]
    %v3200 = vld [vmem:[%s3194 + $0x14] sm:$0xf]
    %v3201 = vld [vmem:[%s3194 + $0x18] sm:$0xf]
    %v3202 = vld [vmem:[%s3194 + $0x1c] sm:$0xf]
    %v3203 = vld [vmem:[%s3194 + $0x20] sm:$0xf]
    %v3204 = vld [vmem:[%s3194 + $0x24] sm:$0xf]
    %v3205 = vld [vmem:[%s3194 + $0x28] sm:$0xf]
    %v3206 = vld [vmem:[%s3194 + $0x2c] sm:$0xf]
    %v3207 = vld [vmem:[%s3194 + $0x30] sm:$0xf]
    %v3208 = vld [vmem:[%s3194 + $0x34] sm:$0xf]
    %v3209 = vld [vmem:[%s3194 + $0x38] sm:$0xf]
    %v3210 = vld [vmem:[%s3194 + $0x3c] sm:$0xf]
    %v3211 = vld [vmem:[%s3194 + $0x40] sm:$0xf]
    %v3212 = vld [vmem:[%s3194 + $0x44] sm:$0xf]
    %v3213 = vld [vmem:[%s3194 + $0x48] sm:$0xf]
    %v3214 = vld [vmem:[%s3194 + $0x4c] sm:$0xf]
    %v3215 = vld [vmem:[%s3194 + $0x50] sm:$0xf]
    %v3216 = vld [vmem:[%s3194 + $0x54] sm:$0xf]
    %v3217 = vld [vmem:[%s3194 + $0x58] sm:$0xf]
    %v3218 = vld [vmem:[%s3194 + $0x5c] sm:$0xf]
    %v3219 = vld [vmem:[%s3194 + $0x60] sm:$0xf]
    %v3220 = vld [vmem:[%s3194 + $0x64] sm:$0xf]
    %v3221 = vld [vmem:[%s3194 + $0x68] sm:$0xf]
    %v3222 = vld [vmem:[%s3194 + $0x6c] sm:$0xf]
    %v3223 = vld [vmem:[%s3194 + $0x70] sm:$0xf]
    %v3224 = vld [vmem:[%s3194 + $0x74] sm:$0xf]
    %v3225 = vld [vmem:[%s3194 + $0x78] sm:$0xf]
    %v3226 = vld [vmem:[%s3194 + $0x7c] sm:$0xf]
    %v3259 = vunpack.c.l.b16 %v3195
    %v3260 = vunpack.c.l.b16 %v3196
    %v3261 = vunpack.c.l.b16 %v3197
    %v3262 = vunpack.c.l.b16 %v3198
    %v3263 = vunpack.c.l.b16 %v3199
    %v3264 = vunpack.c.l.b16 %v3200
    %v3265 = vunpack.c.l.b16 %v3201
    %v3266 = vunpack.c.l.b16 %v3202
    %v3267 = vunpack.c.l.b16 %v3203
    %v3268 = vunpack.c.l.b16 %v3204
    %v3269 = vunpack.c.l.b16 %v3205
    %v3270 = vunpack.c.l.b16 %v3206
    %v3271 = vunpack.c.l.b16 %v3207
    %v3272 = vunpack.c.l.b16 %v3208
    %v3273 = vunpack.c.l.b16 %v3209
    %v3274 = vunpack.c.l.b16 %v3210
    %v3275 = vunpack.c.l.b16 %v3211
    %v3276 = vunpack.c.l.b16 %v3212
    %v3277 = vunpack.c.l.b16 %v3213
    %v3278 = vunpack.c.l.b16 %v3214
    %v3279 = vunpack.c.l.b16 %v3215
    %v3280 = vunpack.c.l.b16 %v3216
    %v3281 = vunpack.c.l.b16 %v3217
    %v3282 = vunpack.c.l.b16 %v3218
    %v3283 = vunpack.c.l.b16 %v3219
    %v3284 = vunpack.c.l.b16 %v3220
    %v3285 = vunpack.c.l.b16 %v3221
    %v3286 = vunpack.c.l.b16 %v3222
    %v3287 = vunpack.c.l.b16 %v3223
    %v3288 = vunpack.c.l.b16 %v3224
    %v3289 = vunpack.c.l.b16 %v3225
    %v3290 = vunpack.c.l.b16 %v3226
    %v3291 = vpack.c.b16 %v3260, %v3259
    %v3292 = vpack.c.b16 %v3262, %v3261
    %v3293 = vpack.c.b16 %v3264, %v3263
    %v3294 = vpack.c.b16 %v3266, %v3265
    %v3295 = vpack.c.b16 %v3268, %v3267
    %v3296 = vpack.c.b16 %v3270, %v3269
    %v3297 = vpack.c.b16 %v3272, %v3271
    %v3298 = vpack.c.b16 %v3274, %v3273
    %v3299 = vpack.c.b16 %v3276, %v3275
    %v3300 = vpack.c.b16 %v3278, %v3277
    %v3301 = vpack.c.b16 %v3280, %v3279
    %v3302 = vpack.c.b16 %v3282, %v3281
    %v3303 = vpack.c.b16 %v3284, %v3283
    %v3304 = vpack.c.b16 %v3286, %v3285
    %v3305 = vpack.c.b16 %v3288, %v3287
    %v3306 = vpack.c.b16 %v3290, %v3289
    %3323 = vmatprep.subr.bf16.mxu0 0
    %3324 = vmatpush1.bf16.msra.mxu0 %v3291
    %3325 = vmatprep.subr.bf16.mxu0 0
    %3326 = vmatpush1.bf16.msra.mxu0 %v3292
    %3327 = vmatprep.subr.bf16.mxu0 0
    %3328 = vmatpush1.bf16.msra.mxu0 %v3293
    %3329 = vmatprep.subr.bf16.mxu0 0
    %3330 = vmatpush1.bf16.msra.mxu0 %v3294
    %3331 = vmatprep.subr.bf16.mxu0 0
    %3332 = vmatpush1.bf16.msra.mxu0 %v3295
    %3333 = vmatprep.subr.bf16.mxu0 0
    %3334 = vmatpush1.bf16.msra.mxu0 %v3296
    %3335 = vmatprep.subr.bf16.mxu0 0
    %3336 = vmatpush1.bf16.msra.mxu0 %v3297
    %3337 = vmatprep.subr.bf16.mxu0 0
    %3338 = vmatpush1.bf16.msra.mxu0 %v3298
    %3339 = vmatprep.subr.bf16.mxu0 0
    %3340 = vmatpush1.bf16.msra.mxu0 %v3299
    %3341 = vmatprep.subr.bf16.mxu0 0
    %3342 = vmatpush1.bf16.msra.mxu0 %v3300
    %3343 = vmatprep.subr.bf16.mxu0 0
    %3344 = vmatpush1.bf16.msra.mxu0 %v3301
    %3345 = vmatprep.subr.bf16.mxu0 0
    %3346 = vmatpush1.bf16.msra.mxu0 %v3302
    %3347 = vmatprep.subr.bf16.mxu0 0
    %3348 = vmatpush1.bf16.msra.mxu0 %v3303
    %3349 = vmatprep.subr.bf16.mxu0 0
    %3350 = vmatpush1.bf16.msra.mxu0 %v3304
    %3351 = vmatprep.subr.bf16.mxu0 0
    %3352 = vmatpush1.bf16.msra.mxu0 %v3305
    %3353 = vmatprep.subr.bf16.mxu0 0
    %3354 = vmatpush1.bf16.msra.mxu0 %v3306
    %3355 = vmatprep.mubr.bf16.mxu0 %v3193
    %3356 = vmatmul.mubr.bf16.gmra.mrb[0].mxu0 %v3192
    %v3357 = vpop.f32.mrb[0].mxu0
    %v3358 = vadd.f32 0.0, %v3357
    %v3359 = vpop.f32.mrb[0].mxu0
    %v3360 = vpop.f32.mrb[0].mxu0
    %v3361 = vpop.f32.mrb[0].mxu0
    %3362 = vdwg.mxu0
    %v3395 = vunpack.c.l.b16 %v3127
    %v3396 = vunpack.c.l.b16 %v3128
    %v3397 = vunpack.c.l.b16 %v3129
    %v3398 = vunpack.c.l.b16 %v3130
    %v3399 = vunpack.c.l.b16 %v3131
    %v3400 = vunpack.c.l.b16 %v3132
    %v3401 = vunpack.c.l.b16 %v3133
    %v3402 = vunpack.c.l.b16 %v3134
    %v3403 = vunpack.c.l.b16 %v3135
    %v3404 = vunpack.c.l.b16 %v3136
    %v3405 = vunpack.c.l.b16 %v3137
    %v3406 = vunpack.c.l.b16 %v3138
    %v3407 = vunpack.c.l.b16 %v3139
    %v3408 = vunpack.c.l.b16 %v3140
    %v3409 = vunpack.c.l.b16 %v3141
    %v3410 = vunpack.c.l.b16 %v3142
    %v3411 = vunpack.c.l.b16 %v3143
    %v3412 = vunpack.c.l.b16 %v3144
    %v3413 = vunpack.c.l.b16 %v3145
    %v3414 = vunpack.c.l.b16 %v3146
    %v3415 = vunpack.c.l.b16 %v3147
    %v3416 = vunpack.c.l.b16 %v3148
    %v3417 = vunpack.c.l.b16 %v3149
    %v3418 = vunpack.c.l.b16 %v3150
    %v3419 = vunpack.c.l.b16 %v3151
    %v3420 = vunpack.c.l.b16 %v3152
    %v3421 = vunpack.c.l.b16 %v3153
    %v3422 = vunpack.c.l.b16 %v3154
    %v3423 = vunpack.c.l.b16 %v3155
    %v3424 = vunpack.c.l.b16 %v3156
    %v3425 = vunpack.c.l.b16 %v3157
    %v3426 = vunpack.c.l.b16 %v3158
    %v3427 = vpack.c.b16 %v3396, %v3395
    %v3428 = vpack.c.b16 %v3398, %v3397
    %v3429 = vpack.c.b16 %v3400, %v3399
    %v3430 = vpack.c.b16 %v3402, %v3401
    %v3431 = vpack.c.b16 %v3404, %v3403
    %v3432 = vpack.c.b16 %v3406, %v3405
    %v3433 = vpack.c.b16 %v3408, %v3407
    %v3434 = vpack.c.b16 %v3410, %v3409
    %v3435 = vpack.c.b16 %v3412, %v3411
    %v3436 = vpack.c.b16 %v3414, %v3413
    %v3437 = vpack.c.b16 %v3416, %v3415
    %v3438 = vpack.c.b16 %v3418, %v3417
    %v3439 = vpack.c.b16 %v3420, %v3419
    %v3440 = vpack.c.b16 %v3422, %v3421
    %v3441 = vpack.c.b16 %v3424, %v3423
    %v3442 = vpack.c.b16 %v3426, %v3425
    %3459 = vmatprep.subr.bf16.mxu0 0
    %3460 = vmatpush1.bf16.msra.mxu0 %v3427
    %3461 = vmatprep.subr.bf16.mxu0 0
    %3462 = vmatpush1.bf16.msra.mxu0 %v3428
    %3463 = vmatprep.subr.bf16.mxu0 0
    %3464 = vmatpush1.bf16.msra.mxu0 %v3429
    %3465 = vmatprep.subr.bf16.mxu0 0
    %3466 = vmatpush1.bf16.msra.mxu0 %v3430
    %3467 = vmatprep.subr.bf16.mxu0 0
    %3468 = vmatpush1.bf16.msra.mxu0 %v3431
    %3469 = vmatprep.subr.bf16.mxu0 0
    %3470 = vmatpush1.bf16.msra.mxu0 %v3432
    %3471 = vmatprep.subr.bf16.mxu0 0
    %3472 = vmatpush1.bf16.msra.mxu0 %v3433
    %3473 = vmatprep.subr.bf16.mxu0 0
    %3474 = vmatpush1.bf16.msra.mxu0 %v3434
    %3475 = vmatprep.subr.bf16.mxu0 0
    %3476 = vmatpush1.bf16.msra.mxu0 %v3435
    %3477 = vmatprep.subr.bf16.mxu0 0
    %3478 = vmatpush1.bf16.msra.mxu0 %v3436
    %3479 = vmatprep.subr.bf16.mxu0 0
    %3480 = vmatpush1.bf16.msra.mxu0 %v3437
    %3481 = vmatprep.subr.bf16.mxu0 0
    %3482 = vmatpush1.bf16.msra.mxu0 %v3438
    %3483 = vmatprep.subr.bf16.mxu0 0
    %3484 = vmatpush1.bf16.msra.mxu0 %v3439
    %3485 = vmatprep.subr.bf16.mxu0 0
    %3486 = vmatpush1.bf16.msra.mxu0 %v3440
    %3487 = vmatprep.subr.bf16.mxu0 0
    %3488 = vmatpush1.bf16.msra.mxu0 %v3441
    %3489 = vmatprep.subr.bf16.mxu0 0
    %3490 = vmatpush1.bf16.msra.mxu0 %v3442
    %3491 = vmatprep.mubr.bf16.mxu0 %v3126
    %3492 = vmatmul.mubr.bf16.gmra.mrb[0].mxu0 %v3125
    %v3493 = vpop.f32.mrb[0].mxu0
    %v3494 = vadd.f32 %v3358, %v3493
    %v3495 = vpop.f32.mrb[0].mxu0
    %v3496 = vpop.f32.mrb[0].mxu0
    %v3497 = vpop.f32.mrb[0].mxu0
    %3498 = vdwg.mxu0
    %v3499 = vcombine.high %v3087, %v3087
    %3501 = vst.msk [vmem:[#allocation3] ss:$2 sm:$0x3] %vm3092, %v3499
    %v3504 = vcombine.low %v3069, %v3070
    %v3506 = vunpack.c.l.s4 1966171168
    %v3507 = vunpack.c.0.s8 %v3506
    %v3508 = vlaneseq
    %v3509 = vshrl.u32 %v3508, 7
    %v3510 = vsub.s32 %v3507, %v3509
    %v3511 = vrot.slane %v3504, %v3510
    %v3513 = vunpack.c.l.s4 1966171168
    %v3514 = vunpack.c.0.s8 %v3513
    %v3515 = vlaneseq
    %v3516 = vshrl.u32 %v3515, 7
    %v3517 = vsub.s32 %v3514, %v3516
    %v3518 = vrot.slane %v3511, %v3517
    %3520 = vst.msk [vmem:[%s3111] ss:$2 sm:$0x3] %vm3092, %v3518
    %v3521 = vld [vmem:[#allocation3] sm:$0xf]
    %v3524 = vunpack.c.l.s4 1983009808
    %v3525 = vunpack.c.0.s8 %v3524
    %v3526 = vlaneseq
    %v3527 = vshrl.u32 %v3526, 7
    %v3528 = vsub.s32 %v3525, %v3527
    %v3529 = vrot.slane %v3521, %v3528
    %v3530 = vcombine.high %v3529, %v3529
    %v3533 = vpack.c.bf16 %v3529, %v3529
    %v3534 = vpack.c.bf16 %v3530, %v3530
    %s3535 = scalar_lea.vmem [#allocation10], 256
    %v3536 = vld [vmem:[%s3535] sm:$0xf]
    %v3537 = vld [vmem:[%s3535 + $0x4] sm:$0xf]
    %v3538 = vld [vmem:[%s3535 + $0x8] sm:$0xf]
    %v3539 = vld [vmem:[%s3535 + $0xc] sm:$0xf]
    %v3540 = vld [vmem:[%s3535 + $0x10] sm:$0xf]
    %v3541 = vld [vmem:[%s3535 + $0x14] sm:$0xf]
    %v3542 = vld [vmem:[%s3535 + $0x18] sm:$0xf]
    %v3543 = vld [vmem:[%s3535 + $0x1c] sm:$0xf]
    %v3544 = vld [vmem:[%s3535 + $0x20] sm:$0xf]
    %v3545 = vld [vmem:[%s3535 + $0x24] sm:$0xf]
    %v3546 = vld [vmem:[%s3535 + $0x28] sm:$0xf]
    %v3547 = vld [vmem:[%s3535 + $0x2c] sm:$0xf]
    %v3548 = vld [vmem:[%s3535 + $0x30] sm:$0xf]
    %v3549 = vld [vmem:[%s3535 + $0x34] sm:$0xf]
    %v3550 = vld [vmem:[%s3535 + $0x38] sm:$0xf]
    %v3551 = vld [vmem:[%s3535 + $0x3c] sm:$0xf]
    %v3552 = vld [vmem:[%s3535 + $0x40] sm:$0xf]
    %v3553 = vld [vmem:[%s3535 + $0x44] sm:$0xf]
    %v3554 = vld [vmem:[%s3535 + $0x48] sm:$0xf]
    %v3555 = vld [vmem:[%s3535 + $0x4c] sm:$0xf]
    %v3556 = vld [vmem:[%s3535 + $0x50] sm:$0xf]
    %v3557 = vld [vmem:[%s3535 + $0x54] sm:$0xf]
    %v3558 = vld [vmem:[%s3535 + $0x58] sm:$0xf]
    %v3559 = vld [vmem:[%s3535 + $0x5c] sm:$0xf]
    %v3560 = vld [vmem:[%s3535 + $0x60] sm:$0xf]
    %v3561 = vld [vmem:[%s3535 + $0x64] sm:$0xf]
    %v3562 = vld [vmem:[%s3535 + $0x68] sm:$0xf]
    %v3563 = vld [vmem:[%s3535 + $0x6c] sm:$0xf]
    %v3564 = vld [vmem:[%s3535 + $0x70] sm:$0xf]
    %v3565 = vld [vmem:[%s3535 + $0x74] sm:$0xf]
    %v3566 = vld [vmem:[%s3535 + $0x78] sm:$0xf]
    %v3567 = vld [vmem:[%s3535 + $0x7c] sm:$0xf]
    %v3600 = vunpack.c.l.b16 %v3536
    %v3601 = vunpack.c.l.b16 %v3537
    %v3602 = vunpack.c.l.b16 %v3538
    %v3603 = vunpack.c.l.b16 %v3539
    %v3604 = vunpack.c.l.b16 %v3540
    %v3605 = vunpack.c.l.b16 %v3541
    %v3606 = vunpack.c.l.b16 %v3542
    %v3607 = vunpack.c.l.b16 %v3543
    %v3608 = vunpack.c.l.b16 %v3544
    %v3609 = vunpack.c.l.b16 %v3545
    %v3610 = vunpack.c.l.b16 %v3546
    %v3611 = vunpack.c.l.b16 %v3547
    %v3612 = vunpack.c.l.b16 %v3548
    %v3613 = vunpack.c.l.b16 %v3549
    %v3614 = vunpack.c.l.b16 %v3550
    %v3615 = vunpack.c.l.b16 %v3551
    %v3616 = vunpack.c.l.b16 %v3552
    %v3617 = vunpack.c.l.b16 %v3553
    %v3618 = vunpack.c.l.b16 %v3554
    %v3619 = vunpack.c.l.b16 %v3555
    %v3620 = vunpack.c.l.b16 %v3556
    %v3621 = vunpack.c.l.b16 %v3557
    %v3622 = vunpack.c.l.b16 %v3558
    %v3623 = vunpack.c.l.b16 %v3559
    %v3624 = vunpack.c.l.b16 %v3560
    %v3625 = vunpack.c.l.b16 %v3561
    %v3626 = vunpack.c.l.b16 %v3562
    %v3627 = vunpack.c.l.b16 %v3563
    %v3628 = vunpack.c.l.b16 %v3564
    %v3629 = vunpack.c.l.b16 %v3565
    %v3630 = vunpack.c.l.b16 %v3566
    %v3631 = vunpack.c.l.b16 %v3567
    %v3632 = vpack.c.b16 %v3601, %v3600
    %v3633 = vpack.c.b16 %v3603, %v3602
    %v3634 = vpack.c.b16 %v3605, %v3604
    %v3635 = vpack.c.b16 %v3607, %v3606
    %v3636 = vpack.c.b16 %v3609, %v3608
    %v3637 = vpack.c.b16 %v3611, %v3610
    %v3638 = vpack.c.b16 %v3613, %v3612
    %v3639 = vpack.c.b16 %v3615, %v3614
    %v3640 = vpack.c.b16 %v3617, %v3616
    %v3641 = vpack.c.b16 %v3619, %v3618
    %v3642 = vpack.c.b16 %v3621, %v3620
    %v3643 = vpack.c.b16 %v3623, %v3622
    %v3644 = vpack.c.b16 %v3625, %v3624
    %v3645 = vpack.c.b16 %v3627, %v3626
    %v3646 = vpack.c.b16 %v3629, %v3628
    %v3647 = vpack.c.b16 %v3631, %v3630
    %3664 = vmatprep.subr.bf16.mxu0 0
    %3665 = vmatpush1.bf16.msra.mxu0 %v3632
    %3666 = vmatprep.subr.bf16.mxu0 0
    %3667 = vmatpush1.bf16.msra.mxu0 %v3633
    %3668 = vmatprep.subr.bf16.mxu0 0
    %3669 = vmatpush1.bf16.msra.mxu0 %v3634
    %3670 = vmatprep.subr.bf16.mxu0 0
    %3671 = vmatpush1.bf16.msra.mxu0 %v3635
    %3672 = vmatprep.subr.bf16.mxu0 0
    %3673 = vmatpush1.bf16.msra.mxu0 %v3636
    %3674 = vmatprep.subr.bf16.mxu0 0
    %3675 = vmatpush1.bf16.msra.mxu0 %v3637
    %3676 = vmatprep.subr.bf16.mxu0 0
    %3677 = vmatpush1.bf16.msra.mxu0 %v3638
    %3678 = vmatprep.subr.bf16.mxu0 0
    %3679 = vmatpush1.bf16.msra.mxu0 %v3639
    %3680 = vmatprep.subr.bf16.mxu0 0
    %3681 = vmatpush1.bf16.msra.mxu0 %v3640
    %3682 = vmatprep.subr.bf16.mxu0 0
    %3683 = vmatpush1.bf16.msra.mxu0 %v3641
    %3684 = vmatprep.subr.bf16.mxu0 0
    %3685 = vmatpush1.bf16.msra.mxu0 %v3642
    %3686 = vmatprep.subr.bf16.mxu0 0
    %3687 = vmatpush1.bf16.msra.mxu0 %v3643
    %3688 = vmatprep.subr.bf16.mxu0 0
    %3689 = vmatpush1.bf16.msra.mxu0 %v3644
    %3690 = vmatprep.subr.bf16.mxu0 0
    %3691 = vmatpush1.bf16.msra.mxu0 %v3645
    %3692 = vmatprep.subr.bf16.mxu0 0
    %3693 = vmatpush1.bf16.msra.mxu0 %v3646
    %3694 = vmatprep.subr.bf16.mxu0 0
    %3695 = vmatpush1.bf16.msra.mxu0 %v3647
    %3696 = vmatprep.mubr.bf16.mxu0 %v3534
    %3697 = vmatmul.mubr.bf16.gmra.mrb[0].mxu0 %v3533
    %v3698 = vpop.f32.mrb[0].mxu0
    %v3699 = vadd.f32 0.0, %v3698
    %v3700 = vpop.f32.mrb[0].mxu0
    %v3701 = vpop.f32.mrb[0].mxu0
    %v3702 = vpop.f32.mrb[0].mxu0
    %3703 = vdwg.mxu0
    %v3704 = vadd.f32 %v3494, %v3699
    %v3705 = vcombine.high %v3166, %v3166
    %3707 = vst.msk [vmem:[#allocation3] ss:$2 sm:$0x3] %vm3092, %v3705
    %v3708 = vcombine.high %v3511, %v3511
    %v3710 = vunpack.c.l.s4 1966171168
    %v3711 = vunpack.c.0.s8 %v3710
    %v3712 = vlaneseq
    %v3713 = vshrl.u32 %v3712, 7
    %v3714 = vsub.s32 %v3711, %v3713
    %v3715 = vrot.slane %v3708, %v3714
    %3717 = vst.msk [vmem:[%s3111] ss:$2 sm:$0x3] %vm3092, %v3715
    %v3718 = vld [vmem:[#allocation3] sm:$0xf]
    %v3721 = vunpack.c.l.s4 1983009808
    %v3722 = vunpack.c.0.s8 %v3721
    %v3723 = vlaneseq
    %v3724 = vshrl.u32 %v3723, 7
    %v3725 = vsub.s32 %v3722, %v3724
    %v3726 = vrot.slane %v3718, %v3725
    %v3727 = vcombine.high %v3726, %v3726
    %v3730 = vpack.c.bf16 %v3726, %v3726
    %v3731 = vpack.c.bf16 %v3727, %v3727
    %s3732 = scalar_lea.vmem [#allocation10], 384
    %v3733 = vld [vmem:[%s3732] sm:$0xf]
    %v3734 = vld [vmem:[%s3732 + $0x4] sm:$0xf]
    %v3735 = vld [vmem:[%s3732 + $0x8] sm:$0xf]
    %v3736 = vld [vmem:[%s3732 + $0xc] sm:$0xf]
    %v3737 = vld [vmem:[%s3732 + $0x10] sm:$0xf]
    %v3738 = vld [vmem:[%s3732 + $0x14] sm:$0xf]
    %v3739 = vld [vmem:[%s3732 + $0x18] sm:$0xf]
    %v3740 = vld [vmem:[%s3732 + $0x1c] sm:$0xf]
    %v3741 = vld [vmem:[%s3732 + $0x20] sm:$0xf]
    %v3742 = vld [vmem:[%s3732 + $0x24] sm:$0xf]
    %v3743 = vld [vmem:[%s3732 + $0x28] sm:$0xf]
    %v3744 = vld [vmem:[%s3732 + $0x2c] sm:$0xf]
    %v3745 = vld [vmem:[%s3732 + $0x30] sm:$0xf]
    %v3746 = vld [vmem:[%s3732 + $0x34] sm:$0xf]
    %v3747 = vld [vmem:[%s3732 + $0x38] sm:$0xf]
    %v3748 = vld [vmem:[%s3732 + $0x3c] sm:$0xf]
    %v3749 = vld [vmem:[%s3732 + $0x40] sm:$0xf]
    %v3750 = vld [vmem:[%s3732 + $0x44] sm:$0xf]
    %v3751 = vld [vmem:[%s3732 + $0x48] sm:$0xf]
    %v3752 = vld [vmem:[%s3732 + $0x4c] sm:$0xf]
    %v3753 = vld [vmem:[%s3732 + $0x50] sm:$0xf]
    %v3754 = vld [vmem:[%s3732 + $0x54] sm:$0xf]
    %v3755 = vld [vmem:[%s3732 + $0x58] sm:$0xf]
    %v3756 = vld [vmem:[%s3732 + $0x5c] sm:$0xf]
    %v3757 = vld [vmem:[%s3732 + $0x60] sm:$0xf]
    %v3758 = vld [vmem:[%s3732 + $0x64] sm:$0xf]
    %v3759 = vld [vmem:[%s3732 + $0x68] sm:$0xf]
    %v3760 = vld [vmem:[%s3732 + $0x6c] sm:$0xf]
    %v3761 = vld [vmem:[%s3732 + $0x70] sm:$0xf]
    %v3762 = vld [vmem:[%s3732 + $0x74] sm:$0xf]
    %v3763 = vld [vmem:[%s3732 + $0x78] sm:$0xf]
    %v3764 = vld [vmem:[%s3732 + $0x7c] sm:$0xf]
    %v3797 = vunpack.c.l.b16 %v3733
    %v3798 = vunpack.c.l.b16 %v3734
    %v3799 = vunpack.c.l.b16 %v3735
    %v3800 = vunpack.c.l.b16 %v3736
    %v3801 = vunpack.c.l.b16 %v3737
    %v3802 = vunpack.c.l.b16 %v3738
    %v3803 = vunpack.c.l.b16 %v3739
    %v3804 = vunpack.c.l.b16 %v3740
    %v3805 = vunpack.c.l.b16 %v3741
    %v3806 = vunpack.c.l.b16 %v3742
    %v3807 = vunpack.c.l.b16 %v3743
    %v3808 = vunpack.c.l.b16 %v3744
    %v3809 = vunpack.c.l.b16 %v3745
    %v3810 = vunpack.c.l.b16 %v3746
    %v3811 = vunpack.c.l.b16 %v3747
    %v3812 = vunpack.c.l.b16 %v3748
    %v3813 = vunpack.c.l.b16 %v3749
    %v3814 = vunpack.c.l.b16 %v3750
    %v3815 = vunpack.c.l.b16 %v3751
    %v3816 = vunpack.c.l.b16 %v3752
    %v3817 = vunpack.c.l.b16 %v3753
    %v3818 = vunpack.c.l.b16 %v3754
    %v3819 = vunpack.c.l.b16 %v3755
    %v3820 = vunpack.c.l.b16 %v3756
    %v3821 = vunpack.c.l.b16 %v3757
    %v3822 = vunpack.c.l.b16 %v3758
    %v3823 = vunpack.c.l.b16 %v3759
    %v3824 = vunpack.c.l.b16 %v3760
    %v3825 = vunpack.c.l.b16 %v3761
    %v3826 = vunpack.c.l.b16 %v3762
    %v3827 = vunpack.c.l.b16 %v3763
    %v3828 = vunpack.c.l.b16 %v3764
    %v3829 = vpack.c.b16 %v3798, %v3797
    %v3830 = vpack.c.b16 %v3800, %v3799
    %v3831 = vpack.c.b16 %v3802, %v3801
    %v3832 = vpack.c.b16 %v3804, %v3803
    %v3833 = vpack.c.b16 %v3806, %v3805
    %v3834 = vpack.c.b16 %v3808, %v3807
    %v3835 = vpack.c.b16 %v3810, %v3809
    %v3836 = vpack.c.b16 %v3812, %v3811
    %v3837 = vpack.c.b16 %v3814, %v3813
    %v3838 = vpack.c.b16 %v3816, %v3815
    %v3839 = vpack.c.b16 %v3818, %v3817
    %v3840 = vpack.c.b16 %v3820, %v3819
    %v3841 = vpack.c.b16 %v3822, %v3821
    %v3842 = vpack.c.b16 %v3824, %v3823
    %v3843 = vpack.c.b16 %v3826, %v3825
    %v3844 = vpack.c.b16 %v3828, %v3827
    %3861 = vmatprep.subr.bf16.mxu0 0
    %3862 = vmatpush1.bf16.msra.mxu0 %v3829
    %3863 = vmatprep.subr.bf16.mxu0 0
    %3864 = vmatpush1.bf16.msra.mxu0 %v3830
    %3865 = vmatprep.subr.bf16.mxu0 0
    %3866 = vmatpush1.bf16.msra.mxu0 %v3831
    %3867 = vmatprep.subr.bf16.mxu0 0
    %3868 = vmatpush1.bf16.msra.mxu0 %v3832
    %3869 = vmatprep.subr.bf16.mxu0 0
    %3870 = vmatpush1.bf16.msra.mxu0 %v3833
    %3871 = vmatprep.subr.bf16.mxu0 0
    %3872 = vmatpush1.bf16.msra.mxu0 %v3834
    %3873 = vmatprep.subr.bf16.mxu0 0
    %3874 = vmatpush1.bf16.msra.mxu0 %v3835
    %3875 = vmatprep.subr.bf16.mxu0 0
    %3876 = vmatpush1.bf16.msra.mxu0 %v3836
    %3877 = vmatprep.subr.bf16.mxu0 0
    %3878 = vmatpush1.bf16.msra.mxu0 %v3837
    %3879 = vmatprep.subr.bf16.mxu0 0
    %3880 = vmatpush1.bf16.msra.mxu0 %v3838
    %3881 = vmatprep.subr.bf16.mxu0 0
    %3882 = vmatpush1.bf16.msra.mxu0 %v3839
    %3883 = vmatprep.subr.bf16.mxu0 0
    %3884 = vmatpush1.bf16.msra.mxu0 %v3840
    %3885 = vmatprep.subr.bf16.mxu0 0
    %3886 = vmatpush1.bf16.msra.mxu0 %v3841
    %3887 = vmatprep.subr.bf16.mxu0 0
    %3888 = vmatpush1.bf16.msra.mxu0 %v3842
    %3889 = vmatprep.subr.bf16.mxu0 0
    %3890 = vmatpush1.bf16.msra.mxu0 %v3843
    %3891 = vmatprep.subr.bf16.mxu0 0
    %3892 = vmatpush1.bf16.msra.mxu0 %v3844
    %3893 = vmatprep.mubr.bf16.mxu0 %v3731
    %3894 = vmatmul.mubr.bf16.gmra.mrb[0].mxu0 %v3730
    %v3895 = vpop.f32.mrb[0].mxu0
    %v3896 = vadd.f32 0.0, %v3895
    %v3897 = vpop.f32.mrb[0].mxu0
    %v3898 = vpop.f32.mrb[0].mxu0
    %v3899 = vpop.f32.mrb[0].mxu0
    %3900 = vdwg.mxu0
    %v3901 = vadd.f32 %v3704, %v3896
    %3903 = vst.msk [vmem:[#allocation3] ss:$2 sm:$0x3] %vm3092, %v3108
    %v3904 = vcombine.high %v3518, %v3518
    %3906 = vst.msk [vmem:[%s3111] ss:$2 sm:$0x3] %vm3092, %v3904
    %v3907 = vld [vmem:[#allocation3] sm:$0xf]
    %v3910 = vunpack.c.l.s4 1983009808
    %v3911 = vunpack.c.0.s8 %v3910
    %v3912 = vlaneseq
    %v3913 = vshrl.u32 %v3912, 7
    %v3914 = vsub.s32 %v3911, %v3913
    %v3915 = vrot.slane %v3907, %v3914
    %v3916 = vcombine.high %v3915, %v3915
    %v3919 = vpack.c.bf16 %v3915, %v3915
    %v3920 = vpack.c.bf16 %v3916, %v3916
    %s3921 = scalar_lea.vmem [#allocation10], 512
    %v3922 = vld [vmem:[%s3921] sm:$0xf]
    %v3923 = vld [vmem:[%s3921 + $0x4] sm:$0xf]
    %v3924 = vld [vmem:[%s3921 + $0x8] sm:$0xf]
    %v3925 = vld [vmem:[%s3921 + $0xc] sm:$0xf]
    %v3926 = vld [vmem:[%s3921 + $0x10] sm:$0xf]
    %v3927 = vld [vmem:[%s3921 + $0x14] sm:$0xf]
    %v3928 = vld [vmem:[%s3921 + $0x18] sm:$0xf]
    %v3929 = vld [vmem:[%s3921 + $0x1c] sm:$0xf]
    %v3930 = vld [vmem:[%s3921 + $0x20] sm:$0xf]
    %v3931 = vld [vmem:[%s3921 + $0x24] sm:$0xf]
    %v3932 = vld [vmem:[%s3921 + $0x28] sm:$0xf]
    %v3933 = vld [vmem:[%s3921 + $0x2c] sm:$0xf]
    %v3934 = vld [vmem:[%s3921 + $0x30] sm:$0xf]
    %v3935 = vld [vmem:[%s3921 + $0x34] sm:$0xf]
    %v3936 = vld [vmem:[%s3921 + $0x38] sm:$0xf]
    %v3937 = vld [vmem:[%s3921 + $0x3c] sm:$0xf]
    %v3938 = vld [vmem:[%s3921 + $0x40] sm:$0xf]
    %v3939 = vld [vmem:[%s3921 + $0x44] sm:$0xf]
    %v3940 = vld [vmem:[%s3921 + $0x48] sm:$0xf]
    %v3941 = vld [vmem:[%s3921 + $0x4c] sm:$0xf]
    %v3942 = vld [vmem:[%s3921 + $0x50] sm:$0xf]
    %v3943 = vld [vmem:[%s3921 + $0x54] sm:$0xf]
    %v3944 = vld [vmem:[%s3921 + $0x58] sm:$0xf]
    %v3945 = vld [vmem:[%s3921 + $0x5c] sm:$0xf]
    %v3946 = vld [vmem:[%s3921 + $0x60] sm:$0xf]
    %v3947 = vld [vmem:[%s3921 + $0x64] sm:$0xf]
    %v3948 = vld [vmem:[%s3921 + $0x68] sm:$0xf]
    %v3949 = vld [vmem:[%s3921 + $0x6c] sm:$0xf]
    %v3950 = vld [vmem:[%s3921 + $0x70] sm:$0xf]
    %v3951 = vld [vmem:[%s3921 + $0x74] sm:$0xf]
    %v3952 = vld [vmem:[%s3921 + $0x78] sm:$0xf]
    %v3953 = vld [vmem:[%s3921 + $0x7c] sm:$0xf]
    %v3986 = vunpack.c.l.b16 %v3922
    %v3987 = vunpack.c.l.b16 %v3923
    %v3988 = vunpack.c.l.b16 %v3924
    %v3989 = vunpack.c.l.b16 %v3925
    %v3990 = vunpack.c.l.b16 %v3926
    %v3991 = vunpack.c.l.b16 %v3927
    %v3992 = vunpack.c.l.b16 %v3928
    %v3993 = vunpack.c.l.b16 %v3929
    %v3994 = vunpack.c.l.b16 %v3930
    %v3995 = vunpack.c.l.b16 %v3931
    %v3996 = vunpack.c.l.b16 %v3932
    %v3997 = vunpack.c.l.b16 %v3933
    %v3998 = vunpack.c.l.b16 %v3934
    %v3999 = vunpack.c.l.b16 %v3935
    %v4000 = vunpack.c.l.b16 %v3936
    %v4001 = vunpack.c.l.b16 %v3937
    %v4002 = vunpack.c.l.b16 %v3938
    %v4003 = vunpack.c.l.b16 %v3939
    %v4004 = vunpack.c.l.b16 %v3940
    %v4005 = vunpack.c.l.b16 %v3941
    %v4006 = vunpack.c.l.b16 %v3942
    %v4007 = vunpack.c.l.b16 %v3943
    %v4008 = vunpack.c.l.b16 %v3944
    %v4009 = vunpack.c.l.b16 %v3945
    %v4010 = vunpack.c.l.b16 %v3946
    %v4011 = vunpack.c.l.b16 %v3947
    %v4012 = vunpack.c.l.b16 %v3948
    %v4013 = vunpack.c.l.b16 %v3949
    %v4014 = vunpack.c.l.b16 %v3950
    %v4015 = vunpack.c.l.b16 %v3951
    %v4016 = vunpack.c.l.b16 %v3952
    %v4017 = vunpack.c.l.b16 %v3953
    %v4018 = vpack.c.b16 %v3987, %v3986
    %v4019 = vpack.c.b16 %v3989, %v3988
    %v4020 = vpack.c.b16 %v3991, %v3990
    %v4021 = vpack.c.b16 %v3993, %v3992
    %v4022 = vpack.c.b16 %v3995, %v3994
    %v4023 = vpack.c.b16 %v3997, %v3996
    %v4024 = vpack.c.b16 %v3999, %v3998
    %v4025 = vpack.c.b16 %v4001, %v4000
    %v4026 = vpack.c.b16 %v4003, %v4002
    %v4027 = vpack.c.b16 %v4005, %v4004
    %v4028 = vpack.c.b16 %v4007, %v4006
    %v4029 = vpack.c.b16 %v4009, %v4008
    %v4030 = vpack.c.b16 %v4011, %v4010
    %v4031 = vpack.c.b16 %v4013, %v4012
    %v4032 = vpack.c.b16 %v4015, %v4014
    %v4033 = vpack.c.b16 %v4017, %v4016
    %4050 = vmatprep.subr.bf16.mxu0 0
    %4051 = vmatpush1.bf16.msra.mxu0 %v4018
    %4052 = vmatprep.subr.bf16.mxu0 0
    %4053 = vmatpush1.bf16.msra.mxu0 %v4019
    %4054 = vmatprep.subr.bf16.mxu0 0
    %4055 = vmatpush1.bf16.msra.mxu0 %v4020
    %4056 = vmatprep.subr.bf16.mxu0 0
    %4057 = vmatpush1.bf16.msra.mxu0 %v4021
    %4058 = vmatprep.subr.bf16.mxu0 0
    %4059 = vmatpush1.bf16.msra.mxu0 %v4022
    %4060 = vmatprep.subr.bf16.mxu0 0
    %4061 = vmatpush1.bf16.msra.mxu0 %v4023
    %4062 = vmatprep.subr.bf16.mxu0 0
    %4063 = vmatpush1.bf16.msra.mxu0 %v4024
    %4064 = vmatprep.subr.bf16.mxu0 0
    %4065 = vmatpush1.bf16.msra.mxu0 %v4025
    %4066 = vmatprep.subr.bf16.mxu0 0
    %4067 = vmatpush1.bf16.msra.mxu0 %v4026
    %4068 = vmatprep.subr.bf16.mxu0 0
    %4069 = vmatpush1.bf16.msra.mxu0 %v4027
    %4070 = vmatprep.subr.bf16.mxu0 0
    %4071 = vmatpush1.bf16.msra.mxu0 %v4028
    %4072 = vmatprep.subr.bf16.mxu0 0
    %4073 = vmatpush1.bf16.msra.mxu0 %v4029
    %4074 = vmatprep.subr.bf16.mxu0 0
    %4075 = vmatpush1.bf16.msra.mxu0 %v4030
    %4076 = vmatprep.subr.bf16.mxu0 0
    %4077 = vmatpush1.bf16.msra.mxu0 %v4031
    %4078 = vmatprep.subr.bf16.mxu0 0
    %4079 = vmatpush1.bf16.msra.mxu0 %v4032
    %4080 = vmatprep.subr.bf16.mxu0 0
    %4081 = vmatpush1.bf16.msra.mxu0 %v4033
    %4082 = vmatprep.mubr.bf16.mxu0 %v3920
    %4083 = vmatmul.mubr.bf16.gmra.mrb[0].mxu0 %v3919
    %v4084 = vpop.f32.mrb[0].mxu0
    %v4085 = vadd.f32 0.0, %v4084
    %v4086 = vpop.f32.mrb[0].mxu0
    %v4087 = vpop.f32.mrb[0].mxu0
    %v4088 = vpop.f32.mrb[0].mxu0
    %4089 = vdwg.mxu0
    %v4090 = vadd.f32 %v3901, %v4085
    %vm4091 = vcmask 1041408
    %v4092 = vsel %vm4091, %v4090, 0.0
    %v4093 = vrot.slane %v4092, 4
    %v4094 = vadd.f32 %v4092, %v4093
    %v4095 = vrot.slane %v4094, 2
    %v4096 = vadd.f32 %v4094, %v4095
    %v4097 = vrot.slane %v4096, 1
    %v4098 = vadd.f32 %v4096, %v4097
    %v4099 = vld [vmem:[#allocation12] sm:$0xff]
    %v4100 = vld [vmem:[#allocation12 + $0x8] sm:$0xff]
    %v4101 = vld [vmem:[#allocation12 + $0x10] sm:$0xff]
    %v4102 = vld [vmem:[#allocation12 + $0x18] sm:$0xff]
    %v4103 = vld [vmem:[#allocation12 + $0x20] sm:$0xff]
    %v4104 = vld [vmem:[#allocation12 + $0x28] sm:$0xff]
    %v4105 = vld [vmem:[#allocation12 + $0x30] sm:$0xff]
    %v4106 = vld [vmem:[#allocation12 + $0x38] sm:$0xff]
    %v4107 = vld [vmem:[#allocation12 + $0x40] sm:$0xff]
    %v4108 = vld [vmem:[#allocation12 + $0x48] sm:$0xff]
    %v4109 = vld [vmem:[#allocation12 + $0x50] sm:$0xff]
    %v4110 = vld [vmem:[#allocation12 + $0x58] sm:$0xff]
    %v4111 = vld [vmem:[#allocation12 + $0x60] sm:$0xff]
    %v4112 = vld [vmem:[#allocation12 + $0x68] sm:$0xff]
    %v4113 = vld [vmem:[#allocation12 + $0x70] sm:$0xff]
    %v4114 = vld [vmem:[#allocation12 + $0x78] sm:$0xff]
    %4115 = vmatprep.subr.mxu0 0.0
    %4116 = vmatpush1.msra.mxu0 %v4099
    %4117 = vmatprep.subr.mxu0 0.0
    %4118 = vmatpush1.msra.mxu0 %v4100
    %4119 = vmatprep.subr.mxu0 0.0
    %4120 = vmatpush1.msra.mxu0 %v4101
    %4121 = vmatprep.subr.mxu0 0.0
    %4122 = vmatpush1.msra.mxu0 %v4102
    %4123 = vmatprep.subr.mxu0 0.0
    %4124 = vmatpush1.msra.mxu0 %v4103
    %4125 = vmatprep.subr.mxu0 0.0
    %4126 = vmatpush1.msra.mxu0 %v4104
    %4127 = vmatprep.subr.mxu0 0.0
    %4128 = vmatpush1.msra.mxu0 %v4105
    %4129 = vmatprep.subr.mxu0 0.0
    %4130 = vmatpush1.msra.mxu0 %v4106
    %4131 = vmatprep.subr.mxu0 0.0
    %4132 = vmatpush1.msra.mxu0 %v4107
    %4133 = vmatprep.subr.mxu0 0.0
    %4134 = vmatpush1.msra.mxu0 %v4108
    %4135 = vmatprep.subr.mxu0 0.0
    %4136 = vmatpush1.msra.mxu0 %v4109
    %4137 = vmatprep.subr.mxu0 0.0
    %4138 = vmatpush1.msra.mxu0 %v4110
    %4139 = vmatprep.subr.mxu0 0.0
    %4140 = vmatpush1.msra.mxu0 %v4111
    %4141 = vmatprep.subr.mxu0 0.0
    %4142 = vmatpush1.msra.mxu0 %v4112
    %4143 = vmatprep.subr.mxu0 0.0
    %4144 = vmatpush1.msra.mxu0 %v4113
    %4145 = vmatprep.subr.mxu0 0.0
    %4146 = vmatpush1.msra.mxu0 %v4114
    %4147 = vmatprep.subr.mxu0 0.0
    %4148 = vmatpush1.msra.mxu0 0.0
    %4149 = vmatprep.subr.mxu0 0.0
    %4150 = vmatpush1.msra.mxu0 0.0
    %4151 = vmatprep.subr.mxu0 0.0
    %4152 = vmatpush1.msra.mxu0 0.0
    %4153 = vmatprep.subr.mxu0 0.0
    %4154 = vmatpush1.msra.mxu0 0.0
    %4155 = vmatprep.subr.mxu0 0.0
    %4156 = vmatpush1.msra.mxu0 0.0
    %4157 = vmatprep.subr.mxu0 0.0
    %4158 = vmatpush1.msra.mxu0 0.0
    %4159 = vmatprep.subr.mxu0 0.0
    %4160 = vmatpush1.msra.mxu0 0.0
    %4161 = vmatprep.subr.mxu0 0.0
    %4162 = vmatpush1.msra.mxu0 0.0
    %4163 = vmatprep.subr.mxu0 0.0
    %4164 = vmatpush1.msra.mxu0 0.0
    %4165 = vmatprep.subr.mxu0 0.0
    %4166 = vmatpush1.msra.mxu0 0.0
    %4167 = vmatprep.subr.mxu0 0.0
    %4168 = vmatpush1.msra.mxu0 0.0
    %4169 = vmatprep.subr.mxu0 0.0
    %4170 = vmatpush1.msra.mxu0 0.0
    %4171 = vmatprep.subr.mxu0 0.0
    %4172 = vmatpush1.msra.mxu0 0.0
    %4173 = vmatprep.subr.mxu0 0.0
    %4174 = vmatpush1.msra.mxu0 0.0
    %4175 = vmatprep.subr.mxu0 0.0
    %4176 = vmatpush1.msra.mxu0 0.0
    %4177 = vmatprep.subr.mxu0 0.0
    %4178 = vmatpush1.msra.mxu0 0.0
    %4179 = vmatprep.mubr.f32.mxu0 0.0
    %4180 = vmatmul.mubr.f32.gmra.mrb[0].mxu0 %v4098
    %v4181 = vpop.f32.mrb[0].mxu0
    %v4182 = vadd.f32 0.0, %v4181
    %v4183 = vpop.f32.mrb[0].mxu0
    %4184 = vdwg.mxu0
    %v4185 = vmul.f32 %v4182, 0.5
    %v4186 = vld [vmem:[#allocation13] sm:$0xff]
    %v4187 = vld [vmem:[#allocation13 + $0x8] sm:$0xff]
    %v4188 = vld [vmem:[#allocation13 + $0x10] sm:$0xff]
    %v4189 = vld [vmem:[#allocation13 + $0x18] sm:$0xff]
    %v4190 = vld [vmem:[#allocation13 + $0x20] sm:$0xff]
    %v4191 = vld [vmem:[#allocation13 + $0x28] sm:$0xff]
    %v4192 = vld [vmem:[#allocation13 + $0x30] sm:$0xff]
    %v4193 = vld [vmem:[#allocation13 + $0x38] sm:$0xff]
    %v4194 = vld [vmem:[#allocation13 + $0x40] sm:$0xff]
    %v4195 = vld [vmem:[#allocation13 + $0x48] sm:$0xff]
    %v4196 = vld [vmem:[#allocation13 + $0x50] sm:$0xff]
    %v4197 = vld [vmem:[#allocation13 + $0x58] sm:$0xff]
    %v4198 = vld [vmem:[#allocation13 + $0x60] sm:$0xff]
    %v4199 = vld [vmem:[#allocation13 + $0x68] sm:$0xff]
    %v4200 = vld [vmem:[#allocation13 + $0x70] sm:$0xff]
    %v4201 = vld [vmem:[#allocation13 + $0x78] sm:$0xff]
    %4202 = vmatprep.subr.mxu0 0.0
    %4203 = vmatpush1.msra.mxu0 %v4186
    %4204 = vmatprep.subr.mxu0 0.0
    %4205 = vmatpush1.msra.mxu0 %v4187
    %4206 = vmatprep.subr.mxu0 0.0
    %4207 = vmatpush1.msra.mxu0 %v4188
    %4208 = vmatprep.subr.mxu0 0.0
    %4209 = vmatpush1.msra.mxu0 %v4189
    %4210 = vmatprep.subr.mxu0 0.0
    %4211 = vmatpush1.msra.mxu0 %v4190
    %4212 = vmatprep.subr.mxu0 0.0
    %4213 = vmatpush1.msra.mxu0 %v4191
    %4214 = vmatprep.subr.mxu0 0.0
    %4215 = vmatpush1.msra.mxu0 %v4192
    %4216 = vmatprep.subr.mxu0 0.0
    %4217 = vmatpush1.msra.mxu0 %v4193
    %4218 = vmatprep.subr.mxu0 0.0
    %4219 = vmatpush1.msra.mxu0 %v4194
    %4220 = vmatprep.subr.mxu0 0.0
    %4221 = vmatpush1.msra.mxu0 %v4195
    %4222 = vmatprep.subr.mxu0 0.0
    %4223 = vmatpush1.msra.mxu0 %v4196
    %4224 = vmatprep.subr.mxu0 0.0
    %4225 = vmatpush1.msra.mxu0 %v4197
    %4226 = vmatprep.subr.mxu0 0.0
    %4227 = vmatpush1.msra.mxu0 %v4198
    %4228 = vmatprep.subr.mxu0 0.0
    %4229 = vmatpush1.msra.mxu0 %v4199
    %4230 = vmatprep.subr.mxu0 0.0
    %4231 = vmatpush1.msra.mxu0 %v4200
    %4232 = vmatprep.subr.mxu0 0.0
    %4233 = vmatpush1.msra.mxu0 %v4201
    %4234 = vmatprep.subr.mxu0 0.0
    %4235 = vmatpush1.msra.mxu0 0.0
    %4236 = vmatprep.subr.mxu0 0.0
    %4237 = vmatpush1.msra.mxu0 0.0
    %4238 = vmatprep.subr.mxu0 0.0
    %4239 = vmatpush1.msra.mxu0 0.0
    %4240 = vmatprep.subr.mxu0 0.0
    %4241 = vmatpush1.msra.mxu0 0.0
    %4242 = vmatprep.subr.mxu0 0.0
    %4243 = vmatpush1.msra.mxu0 0.0
    %4244 = vmatprep.subr.mxu0 0.0
    %4245 = vmatpush1.msra.mxu0 0.0
    %4246 = vmatprep.subr.mxu0 0.0
    %4247 = vmatpush1.msra.mxu0 0.0
    %4248 = vmatprep.subr.mxu0 0.0
    %4249 = vmatpush1.msra.mxu0 0.0
    %4250 = vmatprep.subr.mxu0 0.0
    %4251 = vmatpush1.msra.mxu0 0.0
    %4252 = vmatprep.subr.mxu0 0.0
    %4253 = vmatpush1.msra.mxu0 0.0
    %4254 = vmatprep.subr.mxu0 0.0
    %4255 = vmatpush1.msra.mxu0 0.0
    %4256 = vmatprep.subr.mxu0 0.0
    %4257 = vmatpush1.msra.mxu0 0.0
    %4258 = vmatprep.subr.mxu0 0.0
    %4259 = vmatpush1.msra.mxu0 0.0
    %4260 = vmatprep.subr.mxu0 0.0
    %4261 = vmatpush1.msra.mxu0 0.0
    %4262 = vmatprep.subr.mxu0 0.0
    %4263 = vmatpush1.msra.mxu0 0.0
    %4264 = vmatprep.subr.mxu0 0.0
    %4265 = vmatpush1.msra.mxu0 0.0
    %4266 = vmatprep.mubr.f32.mxu0 0.0
    %4267 = vmatmul.mubr.f32.gmra.mrb[0].mxu0 %v4185
    %v4268 = vpop.f32.mrb[0].mxu0
    %v4269 = vadd.f32 0.0, %v4268
    %v4270 = vpop.f32.mrb[0].mxu0
    %4271 = vdwg.mxu0
    %v4272 = vlaneseq
    %v4273 = vshrl.u32 %v4272, 7
    %v4274 = vsub.s32 0, %v4273
    %v4275 = vrot.slane %v4269, %v4274
    %v4276 = vsub.f32 %v4090, %v4275
    %v4277 = vmul.f32 %v4276, %v4276
    %v4278 = vsel %vm4091, %v4277, 0.0
    %v4279 = vrot.slane %v4278, 4
    %v4280 = vadd.f32 %v4278, %v4279
    %v4281 = vrot.slane %v4280, 2
    %v4282 = vadd.f32 %v4280, %v4281
    %v4283 = vrot.slane %v4282, 1
    %v4284 = vadd.f32 %v4282, %v4283
    %4285 = vmatprep.subr.mxu0 0.0
    %4286 = vmatpush1.msra.mxu0 %v4099
    %4287 = vmatprep.subr.mxu0 0.0
    %4288 = vmatpush1.msra.mxu0 %v4100
    %4289 = vmatprep.subr.mxu0 0.0
    %4290 = vmatpush1.msra.mxu0 %v4101
    %4291 = vmatprep.subr.mxu0 0.0
    %4292 = vmatpush1.msra.mxu0 %v4102
    %4293 = vmatprep.subr.mxu0 0.0
    %4294 = vmatpush1.msra.mxu0 %v4103
    %4295 = vmatprep.subr.mxu0 0.0
    %4296 = vmatpush1.msra.mxu0 %v4104
    %4297 = vmatprep.subr.mxu0 0.0
    %4298 = vmatpush1.msra.mxu0 %v4105
    %4299 = vmatprep.subr.mxu0 0.0
    %4300 = vmatpush1.msra.mxu0 %v4106
    %4301 = vmatprep.subr.mxu0 0.0
    %4302 = vmatpush1.msra.mxu0 %v4107
    %4303 = vmatprep.subr.mxu0 0.0
    %4304 = vmatpush1.msra.mxu0 %v4108
    %4305 = vmatprep.subr.mxu0 0.0
    %4306 = vmatpush1.msra.mxu0 %v4109
    %4307 = vmatprep.subr.mxu0 0.0
    %4308 = vmatpush1.msra.mxu0 %v4110
    %4309 = vmatprep.subr.mxu0 0.0
    %4310 = vmatpush1.msra.mxu0 %v4111
    %4311 = vmatprep.subr.mxu0 0.0
    %4312 = vmatpush1.msra.mxu0 %v4112
    %4313 = vmatprep.subr.mxu0 0.0
    %4314 = vmatpush1.msra.mxu0 %v4113
    %4315 = vmatprep.subr.mxu0 0.0
    %4316 = vmatpush1.msra.mxu0 %v4114
    %4317 = vmatprep.subr.mxu0 0.0
    %4318 = vmatpush1.msra.mxu0 0.0
    %4319 = vmatprep.subr.mxu0 0.0
    %4320 = vmatpush1.msra.mxu0 0.0
    %4321 = vmatprep.subr.mxu0 0.0
    %4322 = vmatpush1.msra.mxu0 0.0
    %4323 = vmatprep.subr.mxu0 0.0
    %4324 = vmatpush1.msra.mxu0 0.0
    %4325 = vmatprep.subr.mxu0 0.0
    %4326 = vmatpush1.msra.mxu0 0.0
    %4327 = vmatprep.subr.mxu0 0.0
    %4328 = vmatpush1.msra.mxu0 0.0
    %4329 = vmatprep.subr.mxu0 0.0
    %4330 = vmatpush1.msra.mxu0 0.0
    %4331 = vmatprep.subr.mxu0 0.0
    %4332 = vmatpush1.msra.mxu0 0.0
    %4333 = vmatprep.subr.mxu0 0.0
    %4334 = vmatpush1.msra.mxu0 0.0
    %4335 = vmatprep.subr.mxu0 0.0
    %4336 = vmatpush1.msra.mxu0 0.0
    %4337 = vmatprep.subr.mxu0 0.0
    %4338 = vmatpush1.msra.mxu0 0.0
    %4339 = vmatprep.subr.mxu0 0.0
    %4340 = vmatpush1.msra.mxu0 0.0
    %4341 = vmatprep.subr.mxu0 0.0
    %4342 = vmatpush1.msra.mxu0 0.0
    %4343 = vmatprep.subr.mxu0 0.0
    %4344 = vmatpush1.msra.mxu0 0.0
    %4345 = vmatprep.subr.mxu0 0.0
    %4346 = vmatpush1.msra.mxu0 0.0
    %4347 = vmatprep.subr.mxu0 0.0
    %4348 = vmatpush1.msra.mxu0 0.0
    %4349 = vmatprep.mubr.f32.mxu0 0.0
    %4350 = vmatmul.mubr.f32.gmra.mrb[0].mxu0 %v4284
    %v4351 = vpop.f32.mrb[0].mxu0
    %v4352 = vadd.f32 0.0, %v4351
    %v4353 = vpop.f32.mrb[0].mxu0
    %4354 = vdwg.mxu0
    %v4355 = vmul.f32 %v4352, 0.5
    %4356 = vmatprep.subr.mxu0 0.0
    %4357 = vmatpush1.msra.mxu0 %v4186
    %4358 = vmatprep.subr.mxu0 0.0
    %4359 = vmatpush1.msra.mxu0 %v4187
    %4360 = vmatprep.subr.mxu0 0.0
    %4361 = vmatpush1.msra.mxu0 %v4188
    %4362 = vmatprep.subr.mxu0 0.0
    %4363 = vmatpush1.msra.mxu0 %v4189
    %4364 = vmatprep.subr.mxu0 0.0
    %4365 = vmatpush1.msra.mxu0 %v4190
    %4366 = vmatprep.subr.mxu0 0.0
    %4367 = vmatpush1.msra.mxu0 %v4191
    %4368 = vmatprep.subr.mxu0 0.0
    %4369 = vmatpush1.msra.mxu0 %v4192
    %4370 = vmatprep.subr.mxu0 0.0
    %4371 = vmatpush1.msra.mxu0 %v4193
    %4372 = vmatprep.subr.mxu0 0.0
    %4373 = vmatpush1.msra.mxu0 %v4194
    %4374 = vmatprep.subr.mxu0 0.0
    %4375 = vmatpush1.msra.mxu0 %v4195
    %4376 = vmatprep.subr.mxu0 0.0
    %4377 = vmatpush1.msra.mxu0 %v4196
    %4378 = vmatprep.subr.mxu0 0.0
    %4379 = vmatpush1.msra.mxu0 %v4197
    %4380 = vmatprep.subr.mxu0 0.0
    %4381 = vmatpush1.msra.mxu0 %v4198
    %4382 = vmatprep.subr.mxu0 0.0
    %4383 = vmatpush1.msra.mxu0 %v4199
    %4384 = vmatprep.subr.mxu0 0.0
    %4385 = vmatpush1.msra.mxu0 %v4200
    %4386 = vmatprep.subr.mxu0 0.0
    %4387 = vmatpush1.msra.mxu0 %v4201
    %4388 = vmatprep.subr.mxu0 0.0
    %4389 = vmatpush1.msra.mxu0 0.0
    %4390 = vmatprep.subr.mxu0 0.0
    %4391 = vmatpush1.msra.mxu0 0.0
    %4392 = vmatprep.subr.mxu0 0.0
    %4393 = vmatpush1.msra.mxu0 0.0
    %4394 = vmatprep.subr.mxu0 0.0
    %4395 = vmatpush1.msra.mxu0 0.0
    %4396 = vmatprep.subr.mxu0 0.0
    %4397 = vmatpush1.msra.mxu0 0.0
    %4398 = vmatprep.subr.mxu0 0.0
    %4399 = vmatpush1.msra.mxu0 0.0
    %4400 = vmatprep.subr.mxu0 0.0
    %4401 = vmatpush1.msra.mxu0 0.0
    %4402 = vmatprep.subr.mxu0 0.0
    %4403 = vmatpush1.msra.mxu0 0.0
    %4404 = vmatprep.subr.mxu0 0.0
    %4405 = vmatpush1.msra.mxu0 0.0
    %4406 = vmatprep.subr.mxu0 0.0
    %4407 = vmatpush1.msra.mxu0 0.0
    %4408 = vmatprep.subr.mxu0 0.0
    %4409 = vmatpush1.msra.mxu0 0.0
    %4410 = vmatprep.subr.mxu0 0.0
    %4411 = vmatpush1.msra.mxu0 0.0
    %4412 = vmatprep.subr.mxu0 0.0
    %4413 = vmatpush1.msra.mxu0 0.0
    %4414 = vmatprep.subr.mxu0 0.0
    %4415 = vmatpush1.msra.mxu0 0.0
    %4416 = vmatprep.subr.mxu0 0.0
    %4417 = vmatpush1.msra.mxu0 0.0
    %4418 = vmatprep.subr.mxu0 0.0
    %4419 = vmatpush1.msra.mxu0 0.0
    %4420 = vmatprep.mubr.f32.mxu0 0.0
    %4421 = vmatmul.mubr.f32.gmra.mrb[0].mxu0 %v4355
    %v4422 = vpop.f32.mrb[0].mxu0
    %v4423 = vadd.f32 1e-05, %v4422
    %v4424 = vpop.f32.mrb[0].mxu0
    %4425 = vdwg.mxu0
    %v4426 = vrsqrt.pop %v4423
    %v4427 = vlaneseq
    %v4428 = vshrl.u32 %v4427, 7
    %v4429 = vsub.s32 0, %v4428
    %v4430 = vrot.slane %v4426, %v4429
    %v4431 = vmul.f32 %v4276, %v4430
    %v4432 = vld [vmem:[%s12] sm:$0x1]
    %v4434 = vlaneseq
    %v4435 = vshrl.u32 %v4434, 7
    %v4436 = vsub.s32 0, %v4435
    %v4437 = vrot.slane %v4432, %v4436
    %v4439 = vmul.f32 %v4431, %v4437
    %v4440 = vld [vmem:[%s13] sm:$0x1]
    %v4442 = vlaneseq
    %v4443 = vshrl.u32 %v4442, 7
    %v4444 = vsub.s32 0, %v4443
    %v4445 = vrot.slane %v4440, %v4444
    %v4447 = vadd.f32 %v4439, %v4445
    %v4448 = vmax.f32 %v4447, 0.0
    %v4449 = vpack.c.bf16 %v4448, %v4448
    %v4450 = vld [vmem:[#allocation15] sm:$0xf]
    %v4451 = vld [vmem:[#allocation15 + $0x4] sm:$0xf]
    %v4452 = vld [vmem:[#allocation15 + $0x8] sm:$0xf]
    %v4453 = vld [vmem:[#allocation15 + $0xc] sm:$0xf]
    %v4454 = vld [vmem:[#allocation15 + $0x10] sm:$0xf]
    %v4455 = vld [vmem:[#allocation15 + $0x14] sm:$0xf]
    %v4456 = vld [vmem:[#allocation15 + $0x18] sm:$0xf]
    %v4457 = vld [vmem:[#allocation15 + $0x1c] sm:$0xf]
    %v4458 = vld [vmem:[#allocation15 + $0x20] sm:$0xf]
    %v4459 = vld [vmem:[#allocation15 + $0x24] sm:$0xf]
    %v4460 = vld [vmem:[#allocation15 + $0x28] sm:$0xf]
    %v4461 = vld [vmem:[#allocation15 + $0x2c] sm:$0xf]
    %v4462 = vld [vmem:[#allocation15 + $0x30] sm:$0xf]
    %v4463 = vld [vmem:[#allocation15 + $0x34] sm:$0xf]
    %v4464 = vld [vmem:[#allocation15 + $0x38] sm:$0xf]
    %v4465 = vld [vmem:[#allocation15 + $0x3c] sm:$0xf]
    %v4466 = vld [vmem:[%s17] sm:$0x1]
    %v4468 = vlaneseq
    %v4469 = vshrl.u32 %v4468, 7
    %v4470 = vsub.s32 0, %v4469
    %v4471 = vrot.slane %v4466, %v4470
    %v4489 = vunpack.c.l.b16 %v4450
    %v4490 = vunpack.c.l.b16 %v4451
    %v4491 = vunpack.c.l.b16 %v4452
    %v4492 = vunpack.c.l.b16 %v4453
    %v4493 = vunpack.c.l.b16 %v4454
    %v4494 = vunpack.c.l.b16 %v4455
    %v4495 = vunpack.c.l.b16 %v4456
    %v4496 = vunpack.c.l.b16 %v4457
    %v4497 = vunpack.c.l.b16 %v4458
    %v4498 = vunpack.c.l.b16 %v4459
    %v4499 = vunpack.c.l.b16 %v4460
    %v4500 = vunpack.c.l.b16 %v4461
    %v4501 = vunpack.c.l.b16 %v4462
    %v4502 = vunpack.c.l.b16 %v4463
    %v4503 = vunpack.c.l.b16 %v4464
    %v4504 = vunpack.c.l.b16 %v4465
    %v4505 = vpack.c.b16 %v4490, %v4489
    %v4506 = vpack.c.b16 %v4492, %v4491
    %v4507 = vpack.c.b16 %v4494, %v4493
    %v4508 = vpack.c.b16 %v4496, %v4495
    %v4509 = vpack.c.b16 %v4498, %v4497
    %v4510 = vpack.c.b16 %v4500, %v4499
    %v4511 = vpack.c.b16 %v4502, %v4501
    %v4512 = vpack.c.b16 %v4504, %v4503
    %4521 = vmatprep.subr.bf16.mxu0 0
    %4522 = vmatpush1.bf16.msra.mxu0 %v4505
    %4523 = vmatprep.subr.bf16.mxu0 0
    %4524 = vmatpush1.bf16.msra.mxu0 %v4506
    %4525 = vmatprep.subr.bf16.mxu0 0
    %4526 = vmatpush1.bf16.msra.mxu0 %v4507
    %4527 = vmatprep.subr.bf16.mxu0 0
    %4528 = vmatpush1.bf16.msra.mxu0 %v4508
    %4529 = vmatprep.subr.bf16.mxu0 0
    %4530 = vmatpush1.bf16.msra.mxu0 %v4509
    %4531 = vmatprep.subr.bf16.mxu0 0
    %4532 = vmatpush1.bf16.msra.mxu0 %v4510
    %4533 = vmatprep.subr.bf16.mxu0 0
    %4534 = vmatpush1.bf16.msra.mxu0 %v4511
    %4535 = vmatprep.subr.bf16.mxu0 0
    %4536 = vmatpush1.bf16.msra.mxu0 %v4512
    %4537 = vmatprep.subr.bf16.mxu0 0
    %4538 = vmatpush1.bf16.msra.mxu0 0
    %4539 = vmatprep.subr.bf16.mxu0 0
    %4540 = vmatpush1.bf16.msra.mxu0 0
    %4541 = vmatprep.subr.bf16.mxu0 0
    %4542 = vmatpush1.bf16.msra.mxu0 0
    %4543 = vmatprep.subr.bf16.mxu0 0
    %4544 = vmatpush1.bf16.msra.mxu0 0
    %4545 = vmatprep.subr.bf16.mxu0 0
    %4546 = vmatpush1.bf16.msra.mxu0 0
    %4547 = vmatprep.subr.bf16.mxu0 0
    %4548 = vmatpush1.bf16.msra.mxu0 0
    %4549 = vmatprep.subr.bf16.mxu0 0
    %4550 = vmatpush1.bf16.msra.mxu0 0
    %4551 = vmatprep.subr.bf16.mxu0 0
    %4552 = vmatpush1.bf16.msra.mxu0 0
    %4553 = vmatprep.mubr.bf16.mxu0 0
    %4554 = vmatmul.mubr.bf16.gmra.mrb[0].mxu0 %v4449
    %v4555 = vpop.f32.mrb[0].mxu0
    %v4556 = vadd.f32 %v4471, %v4555
    %v4557 = vpop.f32.mrb[0].mxu0
    %v4558 = vpop.f32.mrb[0].mxu0
    %v4559 = vpop.f32.mrb[0].mxu0
    %4560 = vdwg.mxu0
    %4561 = vst [vmem:[#allocation16] sm:$0x3] %v4556
    // Predicated region
    $region102: #{nature_cnn_forward.1} parent=1 // pred_check
      _
    $region103: #{nature_cnn_forward.1} parent=1 // pred_check_branch
      %4563 = sbr.rel (0) target = $region105
    $region104: #{nature_cnn_forward.1} parent=1 // pred_region
      %s4565 = ssub.s32 32, 32
      %4566 = vsyncadd [#allocation6], %s4565
      %s4568 = sshll.u32 [#allocation16], 4
      %s4569 = int_to_ptr.vmem [resolvable:$true] %s4568
      %4571 = dma.vmem_to_hbm [thread:$0]  %s4569, 32, %s18, [#allocation6]
    $region105: #{nature_cnn_forward.1} parent=1 // pred_fallthru
      _
    // Predicated region
    $region106: #{nature_cnn_forward.1} parent=1 // pred_check
      _
    $region107: #{nature_cnn_forward.1} parent=1 // pred_check_branch
      %4573 = sbr.rel (0) target = $region109
    $region108: #{nature_cnn_forward.1} parent=1 // pred_region
      %4574 = dma.done [#allocation6], 32
    $region109: #{nature_cnn_forward.1} parent=1 // pred_fallthru
      _
    %4575 = vsyncpa [#allocation5], 1
    %4576 = vsyncpa [#allocation8], 1
    %4577 = vsyncpa [#allocation11], 1
    %4578 = vsyncpa [#allocation14], 1
    %4579 = vsyncpa [#allocation6], 1

</llo_original>
